<compile_context>
chip_gen: v7x
topology: tpu7x:2x2x1
jax: 0.10.0
libtpu: 0.0.40
codegen_flags: <defaults>
</compile_context>

<pallas_src>
import functools
import math

import jax
import jax.numpy as jnp
from jax.experimental import pallas as pl
from jax.experimental.pallas import tpu as pltpu


# -------------------- config (Args equivalent) --------------------
class Cfg:
    filters = 8      # C  (channels of x)
    d_qkv = 8        # per-head q/k/v dim
    dilation = 4     # H  (number of temporal-aware blocks == attention "heads")
    seq_len = 16     # L
    d_ff = 32
    drop_rate = 0.1  # dropout -> identity in eval mode


# -------------------- fused Pallas kernel --------------------
def _tim_attention_kernel(xr_ref, xf_ref, w_ref, vec_ref, mask_ref, o_ref,
                          *, B, C, L, H, dq, D, dff, scale, eps):
    """One batch tile of B samples per grid step.

    xr_ref : [B, H*L, C]   x in 'N (H L) C' layout (row = h*L + l)   -> QKV input
    xf_ref : [B, L, D]     x in 'N L (H C)' layout                   -> residual
    w_ref  : [C + H*dq + D + dff, W] packed weight slab (col-padded to width W)
    vec_ref: [6, W]        packed biases / LayerNorm params
    mask   : [H*L, H*L]    block-diagonal additive mask (0 in-head, -1e30 cross-head)
    """
    HL = H * L
    r1 = C              # wproj rows start
    r2 = r1 + H * dq    # w1 rows start
    r3 = r2 + D         # w2 rows start

    # ---- hoisted parameter reads: once per grid step, no re-broadcast in loops ----
    wqkv  = w_ref[0:C, 0:3 * dq]          # [C, 3dq]   fused Wq|Wk|Wv 1x1 conv
    wproj = w_ref[r1:r2, 0:D]             # [H*dq, D]  score_flatten conv + filter-major flatten
    w1    = w_ref[r2:r3, 0:dff]           # [D, dff]
    w2    = w_ref[r3:r3 + dff, 0:D]       # [dff, D]
    bqkv  = vec_ref[0:1, 0:3 * dq]        # [1, 3dq]
    bo    = vec_ref[1:2, 0:D]             # [1, D]   (already in filter-major order)
    gamma = vec_ref[2:3, 0:D]             # [1, D]
    beta  = vec_ref[3:4, 0:D]             # [1, D]
    b1    = vec_ref[4:5, 0:dff]           # [1, dff]
    b2    = vec_ref[5:6, 0:D]             # [1, D]
    mask  = mask_ref[...]                 # [HL, HL]

    # 1) fused QKV 1x1 conv: ONE matmul over the whole batch tile
    xr = xr_ref[...].reshape(B * HL, C)
    qkv = jnp.dot(xr, wqkv, preferred_element_type=jnp.float32) + bqkv      # [B*HL, 3dq]
    qkv = qkv.reshape(B, HL, 3 * dq)
    q = qkv[:, :, 0:dq]
    k = qkv[:, :, dq:2 * dq]
    v = qkv[:, :, 2 * dq:3 * dq]

    # 2) block-diagonal attention: all H heads in one batched QK^T / softmax / PV
    #    (k is consumed in stored layout -> no k.T transpose through the XLU)
    s = jnp.einsum('bqd,bkd->bqk', q, k,
                   preferred_element_type=jnp.float32) * scale              # [B, HL, HL]
    s = s + mask                                                            # kill cross-head attn
    s = s - jnp.max(s, axis=-1, keepdims=True)
    p = jnp.exp(s)                                                          # masked entries -> 0
    p = p / jnp.sum(p, axis=-1, keepdims=True)                              # exact (review item)
    o = jnp.einsum('bqk,bkd->bqd', p, v,
                   preferred_element_type=jnp.float32)                      # [B, HL, dq]

    # 3) score_flatten conv + filter-major flatten, folded into per-head weights:
    #    proj_flat = sum_h o_h @ Wproj_h   (H matmuls per TILE, not per sample)
    proj = jnp.dot(o[:, 0:L, :].reshape(B * L, dq), wproj[0:dq, :],
                   preferred_element_type=jnp.float32)
    for h in range(1, H):                                                   # static unroll, H=4
        proj = proj + jnp.dot(o[:, h * L:(h + 1) * L, :].reshape(B * L, dq),
                              wproj[h * dq:(h + 1) * dq, :],
                              preferred_element_type=jnp.float32)
    proj = proj + bo                                                        # [B*L, D]

    # 4) residual + shared LayerNorm (same instance reused twice, as in the torch module)
    def layer_norm(z):
        mu = jnp.mean(z, axis=-1, keepdims=True)
        zc = z - mu
        var = jnp.mean(zc * zc, axis=-1, keepdims=True)
        return zc * jax.lax.rsqrt(var + eps) * gamma + beta

    y1 = layer_norm(proj + xf_ref[...].reshape(B * L, D))                   # [B*L, D]

    # 5) FFN (ReLU after BOTH Linears, matching the torch Sequential) + residual + LN
    f1 = jnp.maximum(jnp.dot(y1, w1, preferred_element_type=jnp.float32) + b1, 0.0)
    f2 = jnp.maximum(jnp.dot(f1, w2, preferred_element_type=jnp.float32) + b2, 0.0)
    o_ref[...] = layer_norm(f2 + y1).reshape(B, L, D).astype(o_ref.dtype)


def tim_attention_forward(params, x, cfg, *, b_tile=8):
    """x: [N, filters, seq_len, n_head]  (PyTorch 'N C L H' layout)."""
    N, C, L, H = x.shape
    dq, dff = cfg.d_qkv, cfg.d_ff
    D = H * C
    HL = H * L
    scale = 1.0 / math.sqrt(cfg.dilation * cfg.d_qkv)   # 1/sqrt(d_model), faithful to torch
    W = max(3 * dq, D, dff)                              # common lane width of the packed slabs

    # ---- activation layout prep (cheap XLA transposes on tiny tensors, hidden by pipeline) ----
    xr = jnp.transpose(x, (0, 3, 2, 1)).reshape(N, HL, C)   # 'N C L H' -> 'N (H L) C'
    xf = jnp.transpose(x, (0, 2, 3, 1)).reshape(N, L, D)    # 'N C L H' -> 'N L (H C)'

    # ---- fold score_flatten conv + filter-major flatten into per-head zero-padded weights ----
    # Wproj[h*dq + d, c*H + h] = wo[d, c];  bo_flat[c*H + h] = bo[c]
    wproj = jnp.einsum('dc,hg->hdcg', params["wo"], jnp.eye(H, dtype=jnp.float32))
    wproj = wproj.reshape(H * dq, D)
    bo_flat = jnp.repeat(params["bo"], H)

    # ---- pack weights/biases into two slabs (fewer BlockSpec pipelines / VMEM buffers) ----
    # NOTE: with this config every row section is a multiple of 8 sublanes (8/32/32/32).
    def pad_cols(m):
        return jnp.pad(m, ((0, 0), (0, W - m.shape[1])))

    def pad_vec(vv):
        return jnp.pad(vv, (0, W - vv.shape[0]))

    w_slab = jnp.concatenate([pad_cols(params["wqkv"]), pad_cols(wproj),
                              pad_cols(params["w1"]), pad_cols(params["w2"])], axis=0)
    vec_slab = jnp.stack([pad_vec(params["bqkv"]), pad_vec(bo_flat),
                          pad_vec(params["ln_g"]), pad_vec(params["ln_b"]),
                          pad_vec(params["b1"]), pad_vec(params["b2"])], axis=0)

    # block-diagonal (per-head) additive attention mask over the fused H*L axis
    head_id = jnp.arange(HL, dtype=jnp.int32) // L
    mask = jnp.where(head_id[:, None] == head_id[None, :], 0.0, -1e30).astype(jnp.float32)

    # ---- batch tiling: B_TILE samples per grid step; >=2 tiles keeps both v7x TCs busy ----
    B = max(1, min(b_tile, N))
    n_blk = pl.cdiv(N, B)
    Np = n_blk * B
    if Np != N:
        xr = jnp.pad(xr, ((0, Np - N), (0, 0), (0, 0)))
        xf = jnp.pad(xf, ((0, Np - N), (0, 0), (0, 0)))

    kern = functools.partial(_tim_attention_kernel, B=B, C=C, L=L, H=H, dq=dq,
                             D=D, dff=dff, scale=scale, eps=1e-5)
    rep2 = lambda n: (0, 0)   # weights/mask: one VMEM-resident block, never refetched

    out = pl.pallas_call(
        kern,
        out_shape=jax.ShapeDtypeStruct((Np, L, D), jnp.float32),
        grid=(n_blk,),
        in_specs=[
            pl.BlockSpec((B, HL, C), lambda n: (n, 0, 0)),
            pl.BlockSpec((B, L, D), lambda n: (n, 0, 0)),
            pl.BlockSpec(w_slab.shape, rep2),
            pl.BlockSpec(vec_slab.shape, rep2),
            pl.BlockSpec(mask.shape, rep2),
        ],
        out_specs=pl.BlockSpec((B, L, D), lambda n: (n, 0, 0)),
        compiler_params=pltpu.CompilerParams(
            dimension_semantics=("parallel",),
            # per-tile footprint ~ (6*B + 36) KiB double-buffered + ~3*B*16 KiB
            # intermediates -> ~0.5 MiB at B=8, far below v7x's 64 MiB VMEM.
            vmem_limit_bytes=32 * 1024 * 1024,
        ),
    )(xr, xf, w_slab, vec_slab, mask)
    return out[:N]


# -------------------- parameters (deterministic init) --------------------
def init_params(key, cfg):
    C, dq, H = cfg.filters, cfg.d_qkv, cfg.dilation
    D, dff = C * H, cfg.d_ff
    ks = iter(jax.random.split(key, 16))

    def nrm(shape, fan_in):
        return (1.0 / math.sqrt(fan_in)) * jax.random.normal(next(ks), shape, jnp.float32)

    p = {}
    # Wq/Wk/Wv: Conv2d(C -> d_qkv, k=1); stored input-major [C, dq] and concatenated.
    wq, wk, wv = nrm((C, dq), C), nrm((C, dq), C), nrm((C, dq), C)
    bq, bk, bv = nrm((dq,), C), nrm((dq,), C), nrm((dq,), C)
    p["wqkv"] = jnp.concatenate([wq, wk, wv], axis=1)              # [C, 3*dq]
    p["bqkv"] = jnp.concatenate([bq, bk, bv])                      # [3*dq]
    # score_flatten conv: Conv2d(d_qkv -> filters, k=1)
    p["wo"] = nrm((dq, C), dq)                                     # [dq, C]
    p["bo"] = nrm((C,), dq)                                        # [C]
    # shared LayerNorm(dilation*filters) — the torch module reuses ONE instance twice
    p["ln_g"] = 1.0 + 0.1 * jax.random.normal(next(ks), (D,), jnp.float32)
    p["ln_b"] = 0.1 * jax.random.normal(next(ks), (D,), jnp.float32)
    # fc: Linear(D -> d_ff) -> ReLU -> Linear(d_ff -> D) -> ReLU
    p["w1"] = nrm((D, dff), D)
    p["b1"] = nrm((dff,), D)
    p["w2"] = nrm((dff, D), dff)
    p["b2"] = nrm((D,), dff)
    return p


# -------------------- pure-JAX reference (mirrors the PyTorch forward) --------------------
def tim_attention_ref(p, x, cfg):
    N, C, L, H = x.shape
    dq = cfg.d_qkv
    scale = 1.0 / math.sqrt(cfg.dilation * cfg.d_qkv)
    xt = jnp.transpose(x, (0, 3, 2, 1))                                    # [N, H, L, C]
    qkv = jnp.einsum('nhlc,cd->nhld', xt, p["wqkv"]) + p["bqkv"]
    q, k, v = qkv[..., :dq], qkv[..., dq:2 * dq], qkv[..., 2 * dq:]
    attn = jax.nn.softmax(jnp.einsum('nhqd,nhkd->nhqk', q, k) * scale, axis=-1)
    score = jnp.einsum('nhlk,nhkd->nhld', attn, v)                         # [N, H, L, dq]
    proj = jnp.einsum('nhld,dc->nhlc', score, p["wo"]) + p["bo"]           # [N, H, L, C]
    proj_flat = jnp.transpose(proj, (0, 2, 3, 1)).reshape(N, L, C * H)     # filter-major
    x_flat = jnp.transpose(x, (0, 2, 3, 1)).reshape(N, L, H * C)           # head-major

    def ln(z):
        mu = z.mean(-1, keepdims=True)
        var = ((z - mu) ** 2).mean(-1, keepdims=True)
        return (z - mu) / jnp.sqrt(var + 1e-5) * p["ln_g"] + p["ln_b"]

    y1 = ln(proj_flat + x_flat)
    f1 = jax.nn.relu(jnp.einsum('nld,df->nlf', y1, p["w1"]) + p["b1"])
    f2 = jax.nn.relu(jnp.einsum('nlf,fd->nld', f1, p["w2"]) + p["b2"])
    return ln(f2 + y1)


if __name__ == "__main__":
    cfg = Cfg()
    key = jax.random.PRNGKey(0)
    pkey, xkey = jax.random.split(key)
    params = init_params(pkey, cfg)

    # x layout consumed by TIM_Attention: [N, filters, seq_len, n_head]  ('N C L H')
    # N=16 with B_TILE=8 -> grid=(2,), so the "parallel" axis feeds both v7x TensorCores.
    N = 16
    x = jax.random.normal(xkey, (N, cfg.filters, cfg.seq_len, cfg.dilation), jnp.float32)

    out = tim_attention_forward(params, x, cfg, b_tile=8)
    out = jax.block_until_ready(out)
    assert out.shape == (N, cfg.seq_len, cfg.dilation * cfg.filters)

    ref = tim_attention_ref(params, x, cfg)
    err = float(jnp.max(jnp.abs(out - ref)))
    # tightened from 3e-2: the softmax reciprocal is now exact; remaining slack only
    # covers MXU f32 default-precision rounding differences vs the XLA reference dots.
    assert err < 2e-2, f"max abs error vs reference: {err}"
    print("KERNEL_OK")
</pallas_src>

<mosaic_0001>
module attributes {stable_mosaic.version = 11 : i64} {
  func.func @_tim_attention_kernel(%arg0: i32, %arg1: memref<8x64x8xf32, #tpu.memory_space<vmem>>, %arg2: memref<8x16x32xf32, #tpu.memory_space<vmem>>, %arg3: memref<104x32xf32, #tpu.memory_space<vmem>>, %arg4: memref<6x32xf32, #tpu.memory_space<vmem>>, %arg5: memref<64x64xf32, #tpu.memory_space<vmem>>, %arg6: memref<8x16x32xf32, #tpu.memory_space<vmem>>) attributes {dimension_semantics = [#tpu.dimension_semantics<parallel>], iteration_bounds = array<i64: 2>, scalar_prefetch = 0 : i64, scratch_operands = 0 : i64, tpu.core_type = #tpu.core_type<tc>, window_params = [{transform_indices = @transform_0, window_bounds = array<i64: 8, 64, 8>}, {transform_indices = @transform_1, window_bounds = array<i64: 8, 16, 32>}, {pipeline_mode = #tpu.pipeline_mode<synchronous>, transform_indices = @transform_2, window_bounds = array<i64: 104, 32>}, {pipeline_mode = #tpu.pipeline_mode<synchronous>, transform_indices = @transform_3, window_bounds = array<i64: 6, 32>}, {pipeline_mode = #tpu.pipeline_mode<synchronous>, transform_indices = @transform_4, window_bounds = array<i64: 64, 64>}, {transform_indices = @transform_5, window_bounds = array<i64: 8, 16, 32>}]} {
    %c0 = arith.constant 0 : index
    %c0_0 = arith.constant 0 : index
    %0 = vector.load %arg3[%c0, %c0_0] : memref<104x32xf32, #tpu.memory_space<vmem>>, vector<8x24xf32>
    %c8 = arith.constant 8 : index
    %c0_1 = arith.constant 0 : index
    %1 = vector.load %arg3[%c8, %c0_1] : memref<104x32xf32, #tpu.memory_space<vmem>>, vector<32x32xf32>
    %c40 = arith.constant 40 : index
    %c0_2 = arith.constant 0 : index
    %2 = vector.load %arg3[%c40, %c0_2] : memref<104x32xf32, #tpu.memory_space<vmem>>, vector<32x32xf32>
    %c72 = arith.constant 72 : index
    %c0_3 = arith.constant 0 : index
    %3 = vector.load %arg3[%c72, %c0_3] : memref<104x32xf32, #tpu.memory_space<vmem>>, vector<32x32xf32>
    %c0_4 = arith.constant 0 : index
    %c0_5 = arith.constant 0 : index
    %4 = vector.load %arg4[%c0_4, %c0_5] : memref<6x32xf32, #tpu.memory_space<vmem>>, vector<1x24xf32>
    %c1 = arith.constant 1 : index
    %c0_6 = arith.constant 0 : index
    %5 = vector.load %arg4[%c1, %c0_6] : memref<6x32xf32, #tpu.memory_space<vmem>>, vector<1x32xf32>
    %c2 = arith.constant 2 : index
    %c0_7 = arith.constant 0 : index
    %6 = vector.load %arg4[%c2, %c0_7] : memref<6x32xf32, #tpu.memory_space<vmem>>, vector<1x32xf32>
    %c3 = arith.constant 3 : index
    %c0_8 = arith.constant 0 : index
    %7 = vector.load %arg4[%c3, %c0_8] : memref<6x32xf32, #tpu.memory_space<vmem>>, vector<1x32xf32>
    %c4 = arith.constant 4 : index
    %c0_9 = arith.constant 0 : index
    %8 = vector.load %arg4[%c4, %c0_9] : memref<6x32xf32, #tpu.memory_space<vmem>>, vector<1x32xf32>
    %c5 = arith.constant 5 : index
    %c0_10 = arith.constant 0 : index
    %9 = vector.load %arg4[%c5, %c0_10] : memref<6x32xf32, #tpu.memory_space<vmem>>, vector<1x32xf32>
    %c0_11 = arith.constant 0 : index
    %c0_12 = arith.constant 0 : index
    %10 = vector.load %arg5[%c0_11, %c0_12] : memref<64x64xf32, #tpu.memory_space<vmem>>, vector<64x64xf32>
    %c0_13 = arith.constant 0 : index
    %c0_14 = arith.constant 0 : index
    %c0_15 = arith.constant 0 : index
    %11 = vector.load %arg1[%c0_13, %c0_14, %c0_15] : memref<8x64x8xf32, #tpu.memory_space<vmem>>, vector<8x64x8xf32>
    %12 = vector.shape_cast %11 : vector<8x64x8xf32> to vector<512x8xf32>
    %cst = arith.constant dense<0.000000e+00> : vector<512x24xf32>
    %13 = tpu.matmul %12, %0, %cst {dimension_numbers = #tpu.dot_dimension_numbers<[1], [0], [0], [1], [0, 0, 1, 1], [], []>} : vector<512x8xf32>, vector<8x24xf32>, vector<512x24xf32> -> vector<512x24xf32>
    %14 = vector.broadcast %4 : vector<1x24xf32> to vector<512x24xf32>
    %15 = arith.addf %13, %14 : vector<512x24xf32>
    %16 = vector.shape_cast %15 : vector<512x24xf32> to vector<8x64x24xf32>
    %17 = vector.extract_strided_slice %16 {offsets = [0, 0, 0], sizes = [8, 64, 8], strides = [1, 1, 1]} : vector<8x64x24xf32> to vector<8x64x8xf32>
    %18 = vector.extract_strided_slice %16 {offsets = [0, 0, 8], sizes = [8, 64, 8], strides = [1, 1, 1]} : vector<8x64x24xf32> to vector<8x64x8xf32>
    %19 = vector.extract_strided_slice %16 {offsets = [0, 0, 16], sizes = [8, 64, 8], strides = [1, 1, 1]} : vector<8x64x24xf32> to vector<8x64x8xf32>
    "tpu.trace_start"() <{level = 10 : i32, message = "bqd,bkd->bqk"}> : () -> ()
    %cst_16 = arith.constant dense<0.000000e+00> : vector<8x64x64xf32>
    %20 = tpu.matmul %17, %18, %cst_16 {dimension_numbers = #tpu.dot_dimension_numbers<[2], [2], [1], [1], [0, 0, 0, 1, 1, 1], [0], [0]>} : vector<8x64x8xf32>, vector<8x64x8xf32>, vector<8x64x64xf32> -> vector<8x64x64xf32>
    "tpu.trace_stop"() : () -> ()
    %cst_17 = arith.constant 0.176776692 : f32
    %21 = vector.broadcast %cst_17 : f32 to vector<8x64x64xf32>
    %22 = arith.mulf %20, %21 : vector<8x64x64xf32>
    %23 = vector.shape_cast %10 : vector<64x64xf32> to vector<1x64x64xf32>
    %24 = vector.broadcast %23 : vector<1x64x64xf32> to vector<8x64x64xf32>
    %25 = arith.addf %22, %24 : vector<8x64x64xf32>
    %cst_18 = arith.constant dense<0xFF800000> : vector<8x64xf32>
    %26 = vector.multi_reduction <maximumf>, %25, %cst_18 [2] : vector<8x64x64xf32> to vector<8x64xf32>
    %27 = vector.shape_cast %26 : vector<8x64xf32> to vector<8x64x1xf32>
    %28 = vector.broadcast %27 : vector<8x64x1xf32> to vector<8x64x64xf32>
    %29 = arith.subf %25, %28 : vector<8x64x64xf32>
    %30 = math.exp %29 : vector<8x64x64xf32>
    %cst_19 = arith.constant dense<0.000000e+00> : vector<8x64xf32>
    %31 = vector.multi_reduction <add>, %30, %cst_19 [2] : vector<8x64x64xf32> to vector<8x64xf32>
    %32 = vector.shape_cast %31 : vector<8x64xf32> to vector<8x64x1xf32>
    %33 = vector.broadcast %32 : vector<8x64x1xf32> to vector<8x64x64xf32>
    %34 = arith.divf %30, %33 : vector<8x64x64xf32>
    "tpu.trace_start"() <{level = 10 : i32, message = "bqk,bkd->bqd"}> : () -> ()
    %cst_20 = arith.constant dense<0.000000e+00> : vector<8x64x8xf32>
    %35 = tpu.matmul %34, %19, %cst_20 {dimension_numbers = #tpu.dot_dimension_numbers<[2], [1], [1], [2], [0, 0, 0, 1, 1, 2], [0], [0]>} : vector<8x64x64xf32>, vector<8x64x8xf32>, vector<8x64x8xf32> -> vector<8x64x8xf32>
    "tpu.trace_stop"() : () -> ()
    %36 = vector.extract_strided_slice %35 {offsets = [0, 0, 0], sizes = [8, 16, 8], strides = [1, 1, 1]} : vector<8x64x8xf32> to vector<8x16x8xf32>
    %37 = vector.shape_cast %36 : vector<8x16x8xf32> to vector<128x8xf32>
    %38 = vector.extract_strided_slice %1 {offsets = [0, 0], sizes = [8, 32], strides = [1, 1]} : vector<32x32xf32> to vector<8x32xf32>
    %cst_21 = arith.constant dense<0.000000e+00> : vector<128x32xf32>
    %39 = tpu.matmul %37, %38, %cst_21 {dimension_numbers = #tpu.dot_dimension_numbers<[1], [0], [0], [1], [0, 0, 1, 1], [], []>} : vector<128x8xf32>, vector<8x32xf32>, vector<128x32xf32> -> vector<128x32xf32>
    %40 = vector.extract_strided_slice %35 {offsets = [0, 16, 0], sizes = [8, 16, 8], strides = [1, 1, 1]} : vector<8x64x8xf32> to vector<8x16x8xf32>
    %41 = vector.shape_cast %40 : vector<8x16x8xf32> to vector<128x8xf32>
    %42 = vector.extract_strided_slice %1 {offsets = [8, 0], sizes = [8, 32], strides = [1, 1]} : vector<32x32xf32> to vector<8x32xf32>
    %cst_22 = arith.constant dense<0.000000e+00> : vector<128x32xf32>
    %43 = tpu.matmul %41, %42, %cst_22 {dimension_numbers = #tpu.dot_dimension_numbers<[1], [0], [0], [1], [0, 0, 1, 1], [], []>} : vector<128x8xf32>, vector<8x32xf32>, vector<128x32xf32> -> vector<128x32xf32>
    %44 = arith.addf %39, %43 : vector<128x32xf32>
    %45 = vector.extract_strided_slice %35 {offsets = [0, 32, 0], sizes = [8, 16, 8], strides = [1, 1, 1]} : vector<8x64x8xf32> to vector<8x16x8xf32>
    %46 = vector.shape_cast %45 : vector<8x16x8xf32> to vector<128x8xf32>
    %47 = vector.extract_strided_slice %1 {offsets = [16, 0], sizes = [8, 32], strides = [1, 1]} : vector<32x32xf32> to vector<8x32xf32>
    %cst_23 = arith.constant dense<0.000000e+00> : vector<128x32xf32>
    %48 = tpu.matmul %46, %47, %cst_23 {dimension_numbers = #tpu.dot_dimension_numbers<[1], [0], [0], [1], [0, 0, 1, 1], [], []>} : vector<128x8xf32>, vector<8x32xf32>, vector<128x32xf32> -> vector<128x32xf32>
    %49 = arith.addf %44, %48 : vector<128x32xf32>
    %50 = vector.extract_strided_slice %35 {offsets = [0, 48, 0], sizes = [8, 16, 8], strides = [1, 1, 1]} : vector<8x64x8xf32> to vector<8x16x8xf32>
    %51 = vector.shape_cast %50 : vector<8x16x8xf32> to vector<128x8xf32>
    %52 = vector.extract_strided_slice %1 {offsets = [24, 0], sizes = [8, 32], strides = [1, 1]} : vector<32x32xf32> to vector<8x32xf32>
    %cst_24 = arith.constant dense<0.000000e+00> : vector<128x32xf32>
    %53 = tpu.matmul %51, %52, %cst_24 {dimension_numbers = #tpu.dot_dimension_numbers<[1], [0], [0], [1], [0, 0, 1, 1], [], []>} : vector<128x8xf32>, vector<8x32xf32>, vector<128x32xf32> -> vector<128x32xf32>
    %54 = arith.addf %49, %53 : vector<128x32xf32>
    %55 = vector.broadcast %5 : vector<1x32xf32> to vector<128x32xf32>
    %56 = arith.addf %54, %55 : vector<128x32xf32>
    %c0_25 = arith.constant 0 : index
    %c0_26 = arith.constant 0 : index
    %c0_27 = arith.constant 0 : index
    %57 = vector.load %arg2[%c0_25, %c0_26, %c0_27] : memref<8x16x32xf32, #tpu.memory_space<vmem>>, vector<8x16x32xf32>
    %58 = vector.shape_cast %57 : vector<8x16x32xf32> to vector<128x32xf32>
    %59 = arith.addf %56, %58 : vector<128x32xf32>
    %cst_28 = arith.constant dense<0.000000e+00> : vector<128xf32>
    %60 = vector.multi_reduction <add>, %59, %cst_28 [1] : vector<128x32xf32> to vector<128xf32>
    %61 = vector.shape_cast %60 : vector<128xf32> to vector<128x1xf32>
    %cst_29 = arith.constant 3.200000e+01 : f32
    %62 = vector.broadcast %cst_29 : f32 to vector<128x1xf32>
    %63 = arith.divf %61, %62 : vector<128x1xf32>
    %64 = vector.broadcast %63 : vector<128x1xf32> to vector<128x32xf32>
    %65 = arith.subf %59, %64 : vector<128x32xf32>
    %66 = arith.mulf %65, %65 : vector<128x32xf32>
    %cst_30 = arith.constant dense<0.000000e+00> : vector<128xf32>
    %67 = vector.multi_reduction <add>, %66, %cst_30 [1] : vector<128x32xf32> to vector<128xf32>
    %68 = vector.shape_cast %67 : vector<128xf32> to vector<128x1xf32>
    %cst_31 = arith.constant 3.200000e+01 : f32
    %69 = vector.broadcast %cst_31 : f32 to vector<128x1xf32>
    %70 = arith.divf %68, %69 : vector<128x1xf32>
    %cst_32 = arith.constant 9.99999974E-6 : f32
    %71 = vector.broadcast %cst_32 : f32 to vector<128x1xf32>
    %72 = arith.addf %70, %71 : vector<128x1xf32>
    %73 = math.rsqrt %72 : vector<128x1xf32>
    %74 = vector.broadcast %73 : vector<128x1xf32> to vector<128x32xf32>
    %75 = arith.mulf %65, %74 : vector<128x32xf32>
    %76 = vector.broadcast %6 : vector<1x32xf32> to vector<128x32xf32>
    %77 = arith.mulf %75, %76 : vector<128x32xf32>
    %78 = vector.broadcast %7 : vector<1x32xf32> to vector<128x32xf32>
    %79 = arith.addf %77, %78 : vector<128x32xf32>
    %cst_33 = arith.constant dense<0.000000e+00> : vector<128x32xf32>
    %80 = tpu.matmul %79, %2, %cst_33 {dimension_numbers = #tpu.dot_dimension_numbers<[1], [0], [0], [1], [0, 0, 1, 1], [], []>} : vector<128x32xf32>, vector<32x32xf32>, vector<128x32xf32> -> vector<128x32xf32>
    %81 = vector.broadcast %8 : vector<1x32xf32> to vector<128x32xf32>
    %82 = arith.addf %80, %81 : vector<128x32xf32>
    %cst_34 = arith.constant 0.000000e+00 : f32
    %83 = vector.broadcast %cst_34 : f32 to vector<128x32xf32>
    %84 = arith.maximumf %82, %83 : vector<128x32xf32>
    %cst_35 = arith.constant dense<0.000000e+00> : vector<128x32xf32>
    %85 = tpu.matmul %84, %3, %cst_35 {dimension_numbers = #tpu.dot_dimension_numbers<[1], [0], [0], [1], [0, 0, 1, 1], [], []>} : vector<128x32xf32>, vector<32x32xf32>, vector<128x32xf32> -> vector<128x32xf32>
    %86 = vector.broadcast %9 : vector<1x32xf32> to vector<128x32xf32>
    %87 = arith.addf %85, %86 : vector<128x32xf32>
    %cst_36 = arith.constant 0.000000e+00 : f32
    %88 = vector.broadcast %cst_36 : f32 to vector<128x32xf32>
    %89 = arith.maximumf %87, %88 : vector<128x32xf32>
    %90 = arith.addf %89, %79 : vector<128x32xf32>
    %cst_37 = arith.constant dense<0.000000e+00> : vector<128xf32>
    %91 = vector.multi_reduction <add>, %90, %cst_37 [1] : vector<128x32xf32> to vector<128xf32>
    %92 = vector.shape_cast %91 : vector<128xf32> to vector<128x1xf32>
    %cst_38 = arith.constant 3.200000e+01 : f32
    %93 = vector.broadcast %cst_38 : f32 to vector<128x1xf32>
    %94 = arith.divf %92, %93 : vector<128x1xf32>
    %95 = vector.broadcast %94 : vector<128x1xf32> to vector<128x32xf32>
    %96 = arith.subf %90, %95 : vector<128x32xf32>
    %97 = arith.mulf %96, %96 : vector<128x32xf32>
    %cst_39 = arith.constant dense<0.000000e+00> : vector<128xf32>
    %98 = vector.multi_reduction <add>, %97, %cst_39 [1] : vector<128x32xf32> to vector<128xf32>
    %99 = vector.shape_cast %98 : vector<128xf32> to vector<128x1xf32>
    %cst_40 = arith.constant 3.200000e+01 : f32
    %100 = vector.broadcast %cst_40 : f32 to vector<128x1xf32>
    %101 = arith.divf %99, %100 : vector<128x1xf32>
    %cst_41 = arith.constant 9.99999974E-6 : f32
    %102 = vector.broadcast %cst_41 : f32 to vector<128x1xf32>
    %103 = arith.addf %101, %102 : vector<128x1xf32>
    %104 = math.rsqrt %103 : vector<128x1xf32>
    %105 = vector.broadcast %104 : vector<128x1xf32> to vector<128x32xf32>
    %106 = arith.mulf %96, %105 : vector<128x32xf32>
    %107 = vector.broadcast %6 : vector<1x32xf32> to vector<128x32xf32>
    %108 = arith.mulf %106, %107 : vector<128x32xf32>
    %109 = vector.broadcast %7 : vector<1x32xf32> to vector<128x32xf32>
    %110 = arith.addf %108, %109 : vector<128x32xf32>
    %111 = vector.shape_cast %110 : vector<128x32xf32> to vector<8x16x32xf32>
    %c0_42 = arith.constant 0 : index
    %c0_43 = arith.constant 0 : index
    %c0_44 = arith.constant 0 : index
    %112 = vector.load %arg6[%c0_42, %c0_43, %c0_44] : memref<8x16x32xf32, #tpu.memory_space<vmem>>, vector<8x16x32xf32>
    tpu.vector_store %arg6[%c0_42, %c0_43, %c0_44], %111 {strides = array<i32>} : memref<8x16x32xf32, #tpu.memory_space<vmem>>, vector<8x16x32xf32>,
    return
  }
  func.func @transform_0(%arg0: i32) -> (i32, i32, i32) {
    %c0_i32 = arith.constant 0 : i32
    %c0_i32_0 = arith.constant 0 : i32
    %c0_i32_1 = arith.constant 0 : i32
    return %arg0, %c0_i32, %c0_i32_0 : i32, i32, i32
  }
  func.func @transform_1(%arg0: i32) -> (i32, i32, i32) {
    %c0_i32 = arith.constant 0 : i32
    %c0_i32_0 = arith.constant 0 : i32
    %c0_i32_1 = arith.constant 0 : i32
    return %arg0, %c0_i32, %c0_i32_0 : i32, i32, i32
  }
  func.func @transform_2(%arg0: i32) -> (i32, i32) {
    %c0_i32 = arith.constant 0 : i32
    %c0_i32_0 = arith.constant 0 : i32
    %c0_i32_1 = arith.constant 0 : i32
    return %c0_i32, %c0_i32_0 : i32, i32
  }
  func.func @transform_3(%arg0: i32) -> (i32, i32) {
    %c0_i32 = arith.constant 0 : i32
    %c0_i32_0 = arith.constant 0 : i32
    %c0_i32_1 = arith.constant 0 : i32
    return %c0_i32, %c0_i32_0 : i32, i32
  }
  func.func @transform_4(%arg0: i32) -> (i32, i32) {
    %c0_i32 = arith.constant 0 : i32
    %c0_i32_0 = arith.constant 0 : i32
    %c0_i32_1 = arith.constant 0 : i32
    return %c0_i32, %c0_i32_0 : i32, i32
  }
  func.func @transform_5(%arg0: i32) -> (i32, i32, i32) {
    %c0_i32 = arith.constant 0 : i32
    %c0_i32_0 = arith.constant 0 : i32
    %c0_i32_1 = arith.constant 0 : i32
    return %arg0, %c0_i32, %c0_i32_0 : i32, i32, i32
  }
}

</mosaic_0001>

<llo_original>
// kernel: tpu_custom_call.1
$region0: #{tpu_custom_call.1}
  #allocation0 [shape = 'u32[]', space=smem, size = 0x4, offset = 0x4, fixed_abs, tag = 'smem constant byte address 0x4 - core index']
  #allocation1 [shape = 'u32[144,128]{1,0:T(1,128)}', space=vmem, size = 0x12000, scoped, tag = 'internal scratch']
  %s0 = inlined_call_operand.vmem [shape: f32[16,64,8], index: 0, kind: input, shape index: {}]
  %s1 = inlined_call_operand.vmem [shape: f32[16,16,32], index: 1, kind: input, shape index: {}]
  %s2 = inlined_call_operand.vmem [shape: f32[104,32], index: 2, kind: input, shape index: {}]
  %s3 = inlined_call_operand.vmem [shape: f32[6,32], index: 3, kind: input, shape index: {}]
  %s4 = inlined_call_operand.vmem [shape: f32[64,64], index: 4, kind: input, shape index: {}]
  %s5 = inlined_call_operand.hbm [shape: f32[16,16,32], index: 5, kind: output, shape index: {}]
  %s6 = sld [smem:[#allocation0]]
  $region53: #{tpu_custom_call.1} parent=0
    _
  %s8 = ssub.s32 1, %s6
  %s9 = scalar_select 0, %s8, %s6
  $region1: #{tpu_custom_call.1} parent=0
    #allocation2 [shape = 'u8[131072]{0}', space=vmem, size = 0x20000, scoped, tag = 'output window, operand 0']
    #allocation3 [shape = 's32[2]{0}', space=sflag, size = 0x8, scoped, tag = 'scoped memory for tpu_custom_call.1']
    %10 = vsyncpa [#allocation3], 0
    %s11 = scalar_lea.sflag [#allocation3], 1
    %12 = vsyncpa %s11, 0
    loop: start=0, step=1, limit=4
    $region2: #{tpu_custom_call.1} parent=1 // loop_pre_header
      _
    $region3: #{tpu_custom_call.1} parent=1 // loop_header
      %s14 = sphi 0, %s18
      %p15 = scmp.ge.s32.totalorder %s14, 4
      %s24 = sphi 0, %s26
      %s27 = sphi 0, %s24
      %s28 = sphi 0, %s27
      %s44 = sphi 0, %s28
      %s50 = sphi 0, %s52
      %s53 = sphi 0, %s50
      %s54 = sphi 0, %s53
      %s70 = sphi 0, %s54
      %s74 = sphi 0, %s74
      %s76 = sphi 0, %s74
      %s77 = sphi 0, %s76
      %s91 = sphi 0, %s77
      %s95 = sphi 0, %s95
      %s97 = sphi 0, %s95
      %s98 = sphi 0, %s97
      %s112 = sphi 0, %s98
      %s116 = sphi 0, %s116
      %s118 = sphi 0, %s116
      %s119 = sphi 0, %s118
      %s133 = sphi 0, %s119
      %s139 = sphi 0, %s141
      %s142 = sphi 0, %s139
      %s143 = sphi 0, %s142
      %s159 = sphi 0, %s143
    $region4: #{tpu_custom_call.1} parent=1 // loop_header_branch
      %17 = sbr.rel (%p15) target = $region8
    $region5: #{tpu_custom_call.1} parent=1 // loop_body
      %s19 = ssub.s32 %s14, 1
      %s20 = ssub.s32 %s14, 2
      %s21 = sadd.s32 %s14, 1
      %s22 = ssub.s32 %s14, %s21
      %p23 = scmp.eq.s32.totalorder %s22, 0
      %s25 = sadd.s32 %s24, 1
      %s26 = scalar_select %p23, %s24, %s25
      %p29 = pneg %p23
      %p30 = scmp.eq.s32.totalorder %s14, 1
      %p31 = por %p29, %p30
      %p32 = scmp.ne.s32.totalorder %s24, %s27
      %p33 = scmp.eq.s32.totalorder %s14, 0
      %p34 = por %p32, %p33
      %p35 = scmp.ne.s32.totalorder %s24, %s27
      %p36 = scmp.eq.s32.totalorder %s19, 1
      %p37 = por %p35, %p36
      %p38 = scmp.ne.s32.totalorder %s27, %s28
      %p39 = scmp.eq.s32.totalorder %s19, 0
      %p40 = por %p38, %p39
      %p41 = scmp.ne.s32.totalorder %s27, %s28
      %p42 = scmp.eq.s32.totalorder %s20, 1
      %p43 = por %p41, %p42
      %p45 = scmp.ne.s32.totalorder %s28, %s44
      %p46 = scmp.eq.s32.totalorder %s20, 0
      %p47 = por %p45, %p46
      %s48 = ssub.s32 %s14, %s21
      %p49 = scmp.eq.s32.totalorder %s48, 0
      %s51 = sadd.s32 %s50, 1
      %s52 = scalar_select %p49, %s50, %s51
      %p55 = pneg %p49
      %p56 = scmp.eq.s32.totalorder %s14, 1
      %p57 = por %p55, %p56
      %p58 = scmp.ne.s32.totalorder %s50, %s53
      %p59 = scmp.eq.s32.totalorder %s14, 0
      %p60 = por %p58, %p59
      %p61 = scmp.ne.s32.totalorder %s50, %s53
      %p62 = scmp.eq.s32.totalorder %s19, 1
      %p63 = por %p61, %p62
      %p64 = scmp.ne.s32.totalorder %s53, %s54
      %p65 = scmp.eq.s32.totalorder %s19, 0
      %p66 = por %p64, %p65
      %p67 = scmp.ne.s32.totalorder %s53, %s54
      %p68 = scmp.eq.s32.totalorder %s20, 1
      %p69 = por %p67, %p68
      %p71 = scmp.ne.s32.totalorder %s54, %s70
      %p72 = scmp.eq.s32.totalorder %s20, 0
      %p73 = por %p71, %p72
      %s75 = sadd.s32 %s74, 1
      %p78 = scmp.eq.s32.totalorder %s14, 1
      %p79 = scmp.ne.s32.totalorder %s74, %s76
      %p80 = scmp.eq.s32.totalorder %s14, 0
      %p81 = por %p79, %p80
      %p82 = scmp.ne.s32.totalorder %s74, %s76
      %p83 = scmp.eq.s32.totalorder %s19, 1
      %p84 = por %p82, %p83
      %p85 = scmp.ne.s32.totalorder %s76, %s77
      %p86 = scmp.eq.s32.totalorder %s19, 0
      %p87 = por %p85, %p86
      %p88 = scmp.ne.s32.totalorder %s76, %s77
      %p89 = scmp.eq.s32.totalorder %s20, 1
      %p90 = por %p88, %p89
      %p92 = scmp.ne.s32.totalorder %s77, %s91
      %p93 = scmp.eq.s32.totalorder %s20, 0
      %p94 = por %p92, %p93
      %s96 = sadd.s32 %s95, 1
      %p99 = scmp.eq.s32.totalorder %s14, 1
      %p100 = scmp.ne.s32.totalorder %s95, %s97
      %p101 = scmp.eq.s32.totalorder %s14, 0
      %p102 = por %p100, %p101
      %p103 = scmp.ne.s32.totalorder %s95, %s97
      %p104 = scmp.eq.s32.totalorder %s19, 1
      %p105 = por %p103, %p104
      %p106 = scmp.ne.s32.totalorder %s97, %s98
      %p107 = scmp.eq.s32.totalorder %s19, 0
      %p108 = por %p106, %p107
      %p109 = scmp.ne.s32.totalorder %s97, %s98
      %p110 = scmp.eq.s32.totalorder %s20, 1
      %p111 = por %p109, %p110
      %p113 = scmp.ne.s32.totalorder %s98, %s112
      %p114 = scmp.eq.s32.totalorder %s20, 0
      %p115 = por %p113, %p114
      %s117 = sadd.s32 %s116, 1
      %p120 = scmp.eq.s32.totalorder %s14, 1
      %p121 = scmp.ne.s32.totalorder %s116, %s118
      %p122 = scmp.eq.s32.totalorder %s14, 0
      %p123 = por %p121, %p122
      %p124 = scmp.ne.s32.totalorder %s116, %s118
      %p125 = scmp.eq.s32.totalorder %s19, 1
      %p126 = por %p124, %p125
      %p127 = scmp.ne.s32.totalorder %s118, %s119
      %p128 = scmp.eq.s32.totalorder %s19, 0
      %p129 = por %p127, %p128
      %p130 = scmp.ne.s32.totalorder %s118, %s119
      %p131 = scmp.eq.s32.totalorder %s20, 1
      %p132 = por %p130, %p131
      %p134 = scmp.ne.s32.totalorder %s119, %s133
      %p135 = scmp.eq.s32.totalorder %s20, 0
      %p136 = por %p134, %p135
      %s137 = ssub.s32 %s14, %s21
      %p138 = scmp.eq.s32.totalorder %s137, 0
      %s140 = sadd.s32 %s139, 1
      %s141 = scalar_select %p138, %s139, %s140
      %p144 = pneg %p138
      %p145 = scmp.eq.s32.totalorder %s14, 1
      %p146 = por %p144, %p145
      %p147 = scmp.ne.s32.totalorder %s139, %s142
      %p148 = scmp.eq.s32.totalorder %s14, 0
      %p149 = por %p147, %p148
      %p150 = scmp.ne.s32.totalorder %s139, %s142
      %p151 = scmp.eq.s32.totalorder %s19, 1
      %p152 = por %p150, %p151
      %p153 = scmp.ne.s32.totalorder %s142, %s143
      %p154 = scmp.eq.s32.totalorder %s19, 0
      %p155 = por %p153, %p154
      %p156 = scmp.ne.s32.totalorder %s142, %s143
      %p157 = scmp.eq.s32.totalorder %s20, 1
      %p158 = por %p156, %p157
      %p160 = scmp.ne.s32.totalorder %s143, %s159
      %p161 = scmp.eq.s32.totalorder %s20, 0
      %p162 = por %p160, %p161
      %p163 = scmp.le.s32.totalorder 1, %s14
      %p164 = scmp.lt.s32.totalorder %s14, 3
      %p165 = pnand %p163, %p164
      %p166 = pneg %p165
      // Predicated region
      $region9: #{tpu_custom_call.1} parent=5 // pred_check
        _
      $region10: #{tpu_custom_call.1} parent=5 // pred_check_branch
        %168 = sbr.rel (%p165) target = $region12
      $region11: #{tpu_custom_call.1} parent=5 // pred_region
        %s169 = ssub.s32 %s14, 1
        // Predicated region
        $region13: #{tpu_custom_call.1} parent=11 // pred_check
          %p170 = pneg %p87
        $region14: #{tpu_custom_call.1} parent=11 // pred_check_branch
          %172 = sbr.rel (%p170) target = $region16
        $region15: #{tpu_custom_call.1} parent=11 // pred_region
          _
        $region16: #{tpu_custom_call.1} parent=11 // pred_fallthru
          _
        // Predicated region
        $region17: #{tpu_custom_call.1} parent=11 // pred_check
          %p173 = pneg %p108
        $region18: #{tpu_custom_call.1} parent=11 // pred_check_branch
          %175 = sbr.rel (%p173) target = $region20
        $region19: #{tpu_custom_call.1} parent=11 // pred_region
          _
        $region20: #{tpu_custom_call.1} parent=11 // pred_fallthru
          _
        // Predicated region
        $region21: #{tpu_custom_call.1} parent=11 // pred_check
          %p176 = pneg %p129
        $region22: #{tpu_custom_call.1} parent=11 // pred_check_branch
          %178 = sbr.rel (%p176) target = $region24
        $region23: #{tpu_custom_call.1} parent=11 // pred_region
          _
        $region24: #{tpu_custom_call.1} parent=11 // pred_fallthru
          _
      $region12: #{tpu_custom_call.1} parent=5 // pred_fallthru
        _
      %p179 = scmp.lt.s32.totalorder %s14, 2
      // Predicated region
      $region25: #{tpu_custom_call.1} parent=5 // pred_check
        %p180 = pneg %p179
      $region26: #{tpu_custom_call.1} parent=5 // pred_check_branch
        %182 = sbr.rel (%p180) target = $region28
      $region27: #{tpu_custom_call.1} parent=5 // pred_region
        // Predicated region
        $region29: #{tpu_custom_call.1} parent=27 // pred_check
          %p183 = pneg %p34
        $region30: #{tpu_custom_call.1} parent=27 // pred_check_branch
          %185 = sbr.rel (%p183) target = $region32
        $region31: #{tpu_custom_call.1} parent=27 // pred_region
          %s186 = smul.u32 8, %s14
          %p187 = scmp.lt.s32.totalorder %s186, 15
          %s188 = scalar_select %p187, %s186, 15
          %s189 = smul.addr %s188, 8
          %s190 = smul.addr %s189, 8
          %s191 = scalar_lea.vmem %s0, %s190
          %s192 = smul.u32 8, %s14
        $region32: #{tpu_custom_call.1} parent=27 // pred_fallthru
          _
        // Predicated region
        $region33: #{tpu_custom_call.1} parent=27 // pred_check
          %p193 = pneg %p60
        $region34: #{tpu_custom_call.1} parent=27 // pred_check_branch
          %195 = sbr.rel (%p193) target = $region36
        $region35: #{tpu_custom_call.1} parent=27 // pred_region
          %s196 = smul.u32 8, %s14
          %p197 = scmp.lt.s32.totalorder %s196, 15
          %s198 = scalar_select %p197, %s196, 15
          %s199 = smul.addr %s198, 2
          %s200 = smul.addr %s199, 8
          %s201 = scalar_lea.vmem %s1, %s200
          %s202 = smul.u32 8, %s14
        $region36: #{tpu_custom_call.1} parent=27 // pred_fallthru
          _
      $region28: #{tpu_custom_call.1} parent=5 // pred_fallthru
        _
      %p203 = scmp.le.s32.totalorder 1, %s14
      %p204 = scmp.lt.s32.totalorder %s14, 3
      %p205 = pnand %p203, %p204
      %p206 = pneg %p205
      // Predicated region
      $region37: #{tpu_custom_call.1} parent=5 // pred_check
        _
      $region38: #{tpu_custom_call.1} parent=5 // pred_check_branch
        %208 = sbr.rel (%p205) target = $region40
      $region39: #{tpu_custom_call.1} parent=5 // pred_region
        %s209 = ssub.s32 %s14, 1
        %s210 = smul.u32 8, %s19
        %p211 = scmp.lt.s32.totalorder %s210, 15
        %s212 = scalar_select %p211, %s210, 15
        %s213 = smul.addr %s212, 8
        %s214 = smul.addr %s213, 8
        %s215 = scalar_lea.vmem %s0, %s214
        %p216 = pneg %p40
        %p217 = pneg %p37
        %s218 = smul.u32 8, %s19
        %p219 = scmp.lt.s32.totalorder %s218, 15
        %s220 = scalar_select %p219, %s218, 15
        %s221 = smul.addr %s220, 2
        %s222 = smul.addr %s221, 8
        %s223 = scalar_lea.vmem %s1, %s222
        %p224 = pneg %p66
        %p225 = pneg %p63
        %p226 = pneg %p87
        %p227 = pneg %p84
        %p228 = pneg %p108
        %p229 = pneg %p105
        %p230 = pneg %p129
        %p231 = pneg %p126
        %p232 = pneg %p155
        %p233 = pneg %p152
        %s234 = sand.u32 %s142, 1
        %s235 = scalar_lea.sflag [#allocation3], %s234
        %s236 = sand.u32 %s142, 1
        %s237 = smul.addr %s236, 128
        %s238 = scalar_lea.vmem [#allocation2], %s237
        %s239 = smul.u32 8, %s19
        %p240 = scmp.lt.s32.totalorder %s239, 15
        %s241 = scalar_select %p240, %s239, 15
        %s242 = smul.addr %s241, 8
        %s243 = smul.addr %s242, 8
        %s244 = scalar_lea.vmem %s0, %s243
        %s245 = smul.u32 8, %s19
        %s246 = smul.u32 8, %s19
        %p247 = scmp.lt.s32.totalorder %s246, 15
        %s248 = scalar_select %p247, %s246, 15
        %s249 = smul.addr %s248, 2
        %s250 = smul.addr %s249, 8
        %s251 = scalar_lea.vmem %s1, %s250
        %s252 = smul.u32 8, %s19
        %s253 = smul.u32 8, %s19
        %v254 = vld [vmem:[%s2] sm:$0xff]
        %v255 = vld [vmem:[%s2 + $0x8] sm:$0xff]
        %v256 = vld [vmem:[%s2 + $0x10] sm:$0xff]
        %v257 = vld [vmem:[%s2 + $0x18] sm:$0xff]
        %v258 = vld [vmem:[%s2 + $0x20] sm:$0xff]
        %v259 = vld [vmem:[%s2 + $0x28] sm:$0xff]
        %v260 = vld [vmem:[%s2 + $0x30] sm:$0xff]
        %v261 = vld [vmem:[%s2 + $0x38] sm:$0xff]
        %v262 = vld [vmem:[%s2 + $0x40] sm:$0xff]
        %v263 = vld [vmem:[%s2 + $0x48] sm:$0xff]
        %v264 = vld [vmem:[%s2 + $0x50] sm:$0xff]
        %v265 = vld [vmem:[%s2 + $0x58] sm:$0xff]
        %v266 = vld [vmem:[%s2 + $0x60] sm:$0xff]
        %v267 = vld [vmem:[%s3] sm:$0x1]
        %v268 = vld [vmem:[%s3 + $0x1] sm:$0x1]
        %v269 = vld [vmem:[%s3 + $0x2] sm:$0x1]
        %v270 = vld [vmem:[%s3 + $0x3] sm:$0x1]
        %v271 = vld [vmem:[%s3 + $0x4] sm:$0x1]
        %v272 = vld [vmem:[%s3 + $0x5] sm:$0x1]
        %v273 = vld [vmem:[%s4] sm:$0xff]
        %v274 = vld [vmem:[%s4 + $0x8] sm:$0xff]
        %v275 = vld [vmem:[%s4 + $0x10] sm:$0xff]
        %v276 = vld [vmem:[%s4 + $0x18] sm:$0xff]
        %v277 = vld [vmem:[%s4 + $0x20] sm:$0xff]
        %v278 = vld [vmem:[%s4 + $0x28] sm:$0xff]
        %v279 = vld [vmem:[%s4 + $0x30] sm:$0xff]
        %v280 = vld [vmem:[%s4 + $0x38] sm:$0xff]
        %v281 = vld [vmem:[%s244] sm:$0xff]
        %v282 = vld [vmem:[%s244 + $0x8] sm:$0xff]
        %v283 = vld [vmem:[%s244 + $0x10] sm:$0xff]
        %v284 = vld [vmem:[%s244 + $0x18] sm:$0xff]
        %v285 = vld [vmem:[%s244 + $0x20] sm:$0xff]
        %v286 = vld [vmem:[%s244 + $0x28] sm:$0xff]
        %v287 = vld [vmem:[%s244 + $0x30] sm:$0xff]
        %v288 = vld [vmem:[%s244 + $0x38] sm:$0xff]
        %v289 = vld [vmem:[%s244 + $0x40] sm:$0xff]
        %v290 = vld [vmem:[%s244 + $0x48] sm:$0xff]
        %v291 = vld [vmem:[%s244 + $0x50] sm:$0xff]
        %v292 = vld [vmem:[%s244 + $0x58] sm:$0xff]
        %v293 = vld [vmem:[%s244 + $0x60] sm:$0xff]
        %v294 = vld [vmem:[%s244 + $0x68] sm:$0xff]
        %v295 = vld [vmem:[%s244 + $0x70] sm:$0xff]
        %v296 = vld [vmem:[%s244 + $0x78] sm:$0xff]
        %v297 = vld [vmem:[%s244 + $0x80] sm:$0xff]
        %v298 = vld [vmem:[%s244 + $0x88] sm:$0xff]
        %v299 = vld [vmem:[%s244 + $0x90] sm:$0xff]
        %v300 = vld [vmem:[%s244 + $0x98] sm:$0xff]
        %v301 = vld [vmem:[%s244 + $0xa0] sm:$0xff]
        %v302 = vld [vmem:[%s244 + $0xa8] sm:$0xff]
        %v303 = vld [vmem:[%s244 + $0xb0] sm:$0xff]
        %v304 = vld [vmem:[%s244 + $0xb8] sm:$0xff]
        %v305 = vld [vmem:[%s244 + $0xc0] sm:$0xff]
        %v306 = vld [vmem:[%s244 + $0xc8] sm:$0xff]
        %v307 = vld [vmem:[%s244 + $0xd0] sm:$0xff]
        %v308 = vld [vmem:[%s244 + $0xd8] sm:$0xff]
        %v309 = vld [vmem:[%s244 + $0xe0] sm:$0xff]
        %v310 = vld [vmem:[%s244 + $0xe8] sm:$0xff]
        %v311 = vld [vmem:[%s244 + $0xf0] sm:$0xff]
        %v312 = vld [vmem:[%s244 + $0xf8] sm:$0xff]
        %v313 = vld [vmem:[%s244 + $0x100] sm:$0xff]
        %v314 = vld [vmem:[%s244 + $0x108] sm:$0xff]
        %v315 = vld [vmem:[%s244 + $0x110] sm:$0xff]
        %v316 = vld [vmem:[%s244 + $0x118] sm:$0xff]
        %v317 = vld [vmem:[%s244 + $0x120] sm:$0xff]
        %v318 = vld [vmem:[%s244 + $0x128] sm:$0xff]
        %v319 = vld [vmem:[%s244 + $0x130] sm:$0xff]
        %v320 = vld [vmem:[%s244 + $0x138] sm:$0xff]
        %v321 = vld [vmem:[%s244 + $0x140] sm:$0xff]
        %v322 = vld [vmem:[%s244 + $0x148] sm:$0xff]
        %v323 = vld [vmem:[%s244 + $0x150] sm:$0xff]
        %v324 = vld [vmem:[%s244 + $0x158] sm:$0xff]
        %v325 = vld [vmem:[%s244 + $0x160] sm:$0xff]
        %v326 = vld [vmem:[%s244 + $0x168] sm:$0xff]
        %v327 = vld [vmem:[%s244 + $0x170] sm:$0xff]
        %v328 = vld [vmem:[%s244 + $0x178] sm:$0xff]
        %v329 = vld [vmem:[%s244 + $0x180] sm:$0xff]
        %v330 = vld [vmem:[%s244 + $0x188] sm:$0xff]
        %v331 = vld [vmem:[%s244 + $0x190] sm:$0xff]
        %v332 = vld [vmem:[%s244 + $0x198] sm:$0xff]
        %v333 = vld [vmem:[%s244 + $0x1a0] sm:$0xff]
        %v334 = vld [vmem:[%s244 + $0x1a8] sm:$0xff]
        %v335 = vld [vmem:[%s244 + $0x1b0] sm:$0xff]
        %v336 = vld [vmem:[%s244 + $0x1b8] sm:$0xff]
        %v337 = vld [vmem:[%s244 + $0x1c0] sm:$0xff]
        %v338 = vld [vmem:[%s244 + $0x1c8] sm:$0xff]
        %v339 = vld [vmem:[%s244 + $0x1d0] sm:$0xff]
        %v340 = vld [vmem:[%s244 + $0x1d8] sm:$0xff]
        %v341 = vld [vmem:[%s244 + $0x1e0] sm:$0xff]
        %v342 = vld [vmem:[%s244 + $0x1e8] sm:$0xff]
        %v343 = vld [vmem:[%s244 + $0x1f0] sm:$0xff]
        %v344 = vld [vmem:[%s244 + $0x1f8] sm:$0xff]
        %v345 = vlaneseq
        %v346 = vshrl.u32 %v345, 7
        %v347 = vsub.s32 0, %v346
        %v348 = vrot.slane %v267, %v347
        %vm349 = vcmask 64512
        %v351 = vsel %vm349, %v281, 0
        %v354 = vsel %vm349, %v282, 0
        %v357 = vsel %vm349, %v283, 0
        %v360 = vsel %vm349, %v284, 0
        %v363 = vsel %vm349, %v285, 0
        %v366 = vsel %vm349, %v286, 0
        %v369 = vsel %vm349, %v287, 0
        %v372 = vsel %vm349, %v288, 0
        %v375 = vsel %vm349, %v289, 0
        %v378 = vsel %vm349, %v290, 0
        %v381 = vsel %vm349, %v291, 0
        %v384 = vsel %vm349, %v292, 0
        %v387 = vsel %vm349, %v293, 0
        %v390 = vsel %vm349, %v294, 0
        %v393 = vsel %vm349, %v295, 0
        %v396 = vsel %vm349, %v296, 0
        %v399 = vsel %vm349, %v297, 0
        %v402 = vsel %vm349, %v298, 0
        %v405 = vsel %vm349, %v299, 0
        %v408 = vsel %vm349, %v300, 0
        %v411 = vsel %vm349, %v301, 0
        %v414 = vsel %vm349, %v302, 0
        %v417 = vsel %vm349, %v303, 0
        %v420 = vsel %vm349, %v304, 0
        %v423 = vsel %vm349, %v305, 0
        %v426 = vsel %vm349, %v306, 0
        %v429 = vsel %vm349, %v307, 0
        %v432 = vsel %vm349, %v308, 0
        %v435 = vsel %vm349, %v309, 0
        %v438 = vsel %vm349, %v310, 0
        %v441 = vsel %vm349, %v311, 0
        %v444 = vsel %vm349, %v312, 0
        %v447 = vsel %vm349, %v313, 0
        %v450 = vsel %vm349, %v314, 0
        %v453 = vsel %vm349, %v315, 0
        %v456 = vsel %vm349, %v316, 0
        %v459 = vsel %vm349, %v317, 0
        %v462 = vsel %vm349, %v318, 0
        %v465 = vsel %vm349, %v319, 0
        %v468 = vsel %vm349, %v320, 0
        %v471 = vsel %vm349, %v321, 0
        %v474 = vsel %vm349, %v322, 0
        %v477 = vsel %vm349, %v323, 0
        %v480 = vsel %vm349, %v324, 0
        %v483 = vsel %vm349, %v325, 0
        %v486 = vsel %vm349, %v326, 0
        %v489 = vsel %vm349, %v327, 0
        %v492 = vsel %vm349, %v328, 0
        %v495 = vsel %vm349, %v329, 0
        %v498 = vsel %vm349, %v330, 0
        %v501 = vsel %vm349, %v331, 0
        %v504 = vsel %vm349, %v332, 0
        %v507 = vsel %vm349, %v333, 0
        %v510 = vsel %vm349, %v334, 0
        %v513 = vsel %vm349, %v335, 0
        %v516 = vsel %vm349, %v336, 0
        %v519 = vsel %vm349, %v337, 0
        %v522 = vsel %vm349, %v338, 0
        %v525 = vsel %vm349, %v339, 0
        %v528 = vsel %vm349, %v340, 0
        %v531 = vsel %vm349, %v341, 0
        %v534 = vsel %vm349, %v342, 0
        %v537 = vsel %vm349, %v343, 0
        %v540 = vsel %vm349, %v344, 0
        %542 = vmatprep.subr.mxu0 0.0
        %543 = vmatpush1.msra.mxu0 %v254
        %544 = vmatprep.subr.mxu0 0.0
        %545 = vmatpush1.msra.mxu0 0.0
        %546 = vmatprep.subr.mxu0 0.0
        %547 = vmatpush1.msra.mxu0 0.0
        %548 = vmatprep.subr.mxu0 0.0
        %549 = vmatpush1.msra.mxu0 0.0
        %550 = vmatprep.subr.mxu0 0.0
        %551 = vmatpush1.msra.mxu0 0.0
        %552 = vmatprep.subr.mxu0 0.0
        %553 = vmatpush1.msra.mxu0 0.0
        %554 = vmatprep.subr.mxu0 0.0
        %555 = vmatpush1.msra.mxu0 0.0
        %556 = vmatprep.subr.mxu0 0.0
        %557 = vmatpush1.msra.mxu0 0.0
        %558 = vmatprep.subr.mxu0 0.0
        %559 = vmatpush1.msra.mxu0 0.0
        %560 = vmatprep.subr.mxu0 0.0
        %561 = vmatpush1.msra.mxu0 0.0
        %562 = vmatprep.subr.mxu0 0.0
        %563 = vmatpush1.msra.mxu0 0.0
        %564 = vmatprep.subr.mxu0 0.0
        %565 = vmatpush1.msra.mxu0 0.0
        %566 = vmatprep.subr.mxu0 0.0
        %567 = vmatpush1.msra.mxu0 0.0
        %568 = vmatprep.subr.mxu0 0.0
        %569 = vmatpush1.msra.mxu0 0.0
        %570 = vmatprep.subr.mxu0 0.0
        %571 = vmatpush1.msra.mxu0 0.0
        %572 = vmatprep.subr.mxu0 0.0
        %573 = vmatpush1.msra.mxu0 0.0
        %574 = vmatprep.subr.mxu0 0.0
        %575 = vmatpush1.msra.mxu0 0.0
        %576 = vmatprep.subr.mxu0 0.0
        %577 = vmatpush1.msra.mxu0 0.0
        %578 = vmatprep.subr.mxu0 0.0
        %579 = vmatpush1.msra.mxu0 0.0
        %580 = vmatprep.subr.mxu0 0.0
        %581 = vmatpush1.msra.mxu0 0.0
        %582 = vmatprep.subr.mxu0 0.0
        %583 = vmatpush1.msra.mxu0 0.0
        %584 = vmatprep.subr.mxu0 0.0
        %585 = vmatpush1.msra.mxu0 0.0
        %586 = vmatprep.subr.mxu0 0.0
        %587 = vmatpush1.msra.mxu0 0.0
        %588 = vmatprep.subr.mxu0 0.0
        %589 = vmatpush1.msra.mxu0 0.0
        %590 = vmatprep.subr.mxu0 0.0
        %591 = vmatpush1.msra.mxu0 0.0
        %592 = vmatprep.subr.mxu0 0.0
        %593 = vmatpush1.msra.mxu0 0.0
        %594 = vmatprep.subr.mxu0 0.0
        %595 = vmatpush1.msra.mxu0 0.0
        %596 = vmatprep.subr.mxu0 0.0
        %597 = vmatpush1.msra.mxu0 0.0
        %598 = vmatprep.subr.mxu0 0.0
        %599 = vmatpush1.msra.mxu0 0.0
        %600 = vmatprep.subr.mxu0 0.0
        %601 = vmatpush1.msra.mxu0 0.0
        %602 = vmatprep.subr.mxu0 0.0
        %603 = vmatpush1.msra.mxu0 0.0
        %604 = vmatprep.subr.mxu0 0.0
        %605 = vmatpush1.msra.mxu0 0.0
        %606 = vmatprep.mubr.f32.mxu0 0.0
        %607 = vmatmul.mubr.f32.gmra.mrb[0].mxu0 %v351
        %v608 = vpop.f32.mrb[0].mxu0
        %v609 = vadd.f32 %v348, %v608
        %v610 = vpop.f32.mrb[0].mxu0
        %611 = vmatprep.mubr.f32.mxu0 0.0
        %612 = vmatmul.mubr.f32.gmra.mrb[0].mxu0 %v354
        %v613 = vpop.f32.mrb[0].mxu0
        %v614 = vadd.f32 %v348, %v613
        %v615 = vpop.f32.mrb[0].mxu0
        %616 = vmatprep.mubr.f32.mxu0 0.0
        %617 = vmatmul.mubr.f32.gmra.mrb[0].mxu0 %v357
        %v618 = vpop.f32.mrb[0].mxu0
        %v619 = vadd.f32 %v348, %v618
        %v620 = vpop.f32.mrb[0].mxu0
        %621 = vmatprep.mubr.f32.mxu0 0.0
        %622 = vmatmul.mubr.f32.gmra.mrb[0].mxu0 %v360
        %v623 = vpop.f32.mrb[0].mxu0
        %v624 = vadd.f32 %v348, %v623
        %v625 = vpop.f32.mrb[0].mxu0
        %626 = vmatprep.mubr.f32.mxu0 0.0
        %627 = vmatmul.mubr.f32.gmra.mrb[0].mxu0 %v363
        %v628 = vpop.f32.mrb[0].mxu0
        %v629 = vadd.f32 %v348, %v628
        %v630 = vpop.f32.mrb[0].mxu0
        %631 = vmatprep.mubr.f32.mxu0 0.0
        %632 = vmatmul.mubr.f32.gmra.mrb[0].mxu0 %v366
        %v633 = vpop.f32.mrb[0].mxu0
        %v634 = vadd.f32 %v348, %v633
        %v635 = vpop.f32.mrb[0].mxu0
        %636 = vmatprep.mubr.f32.mxu0 0.0
        %637 = vmatmul.mubr.f32.gmra.mrb[0].mxu0 %v369
        %v638 = vpop.f32.mrb[0].mxu0
        %v639 = vadd.f32 %v348, %v638
        %v640 = vpop.f32.mrb[0].mxu0
        %641 = vmatprep.mubr.f32.mxu0 0.0
        %642 = vmatmul.mubr.f32.gmra.mrb[0].mxu0 %v372
        %v643 = vpop.f32.mrb[0].mxu0
        %v644 = vadd.f32 %v348, %v643
        %v645 = vpop.f32.mrb[0].mxu0
        %646 = vmatprep.mubr.f32.mxu0 0.0
        %647 = vmatmul.mubr.f32.gmra.mrb[0].mxu0 %v375
        %v648 = vpop.f32.mrb[0].mxu0
        %v649 = vadd.f32 %v348, %v648
        %v650 = vpop.f32.mrb[0].mxu0
        %651 = vmatprep.mubr.f32.mxu0 0.0
        %652 = vmatmul.mubr.f32.gmra.mrb[0].mxu0 %v378
        %v653 = vpop.f32.mrb[0].mxu0
        %v654 = vadd.f32 %v348, %v653
        %v655 = vpop.f32.mrb[0].mxu0
        %656 = vmatprep.mubr.f32.mxu0 0.0
        %657 = vmatmul.mubr.f32.gmra.mrb[0].mxu0 %v381
        %v658 = vpop.f32.mrb[0].mxu0
        %v659 = vadd.f32 %v348, %v658
        %v660 = vpop.f32.mrb[0].mxu0
        %661 = vmatprep.mubr.f32.mxu0 0.0
        %662 = vmatmul.mubr.f32.gmra.mrb[0].mxu0 %v384
        %v663 = vpop.f32.mrb[0].mxu0
        %v664 = vadd.f32 %v348, %v663
        %v665 = vpop.f32.mrb[0].mxu0
        %666 = vmatprep.mubr.f32.mxu0 0.0
        %667 = vmatmul.mubr.f32.gmra.mrb[0].mxu0 %v387
        %v668 = vpop.f32.mrb[0].mxu0
        %v669 = vadd.f32 %v348, %v668
        %v670 = vpop.f32.mrb[0].mxu0
        %671 = vmatprep.mubr.f32.mxu0 0.0
        %672 = vmatmul.mubr.f32.gmra.mrb[0].mxu0 %v390
        %v673 = vpop.f32.mrb[0].mxu0
        %v674 = vadd.f32 %v348, %v673
        %v675 = vpop.f32.mrb[0].mxu0
        %676 = vmatprep.mubr.f32.mxu0 0.0
        %677 = vmatmul.mubr.f32.gmra.mrb[0].mxu0 %v393
        %v678 = vpop.f32.mrb[0].mxu0
        %v679 = vadd.f32 %v348, %v678
        %v680 = vpop.f32.mrb[0].mxu0
        %681 = vmatprep.mubr.f32.mxu0 0.0
        %682 = vmatmul.mubr.f32.gmra.mrb[0].mxu0 %v396
        %v683 = vpop.f32.mrb[0].mxu0
        %v684 = vadd.f32 %v348, %v683
        %v685 = vpop.f32.mrb[0].mxu0
        %686 = vmatprep.mubr.f32.mxu0 0.0
        %687 = vmatmul.mubr.f32.gmra.mrb[0].mxu0 %v399
        %v688 = vpop.f32.mrb[0].mxu0
        %v689 = vadd.f32 %v348, %v688
        %v690 = vpop.f32.mrb[0].mxu0
        %691 = vmatprep.mubr.f32.mxu0 0.0
        %692 = vmatmul.mubr.f32.gmra.mrb[0].mxu0 %v402
        %v693 = vpop.f32.mrb[0].mxu0
        %v694 = vadd.f32 %v348, %v693
        %v695 = vpop.f32.mrb[0].mxu0
        %696 = vmatprep.mubr.f32.mxu0 0.0
        %697 = vmatmul.mubr.f32.gmra.mrb[0].mxu0 %v405
        %v698 = vpop.f32.mrb[0].mxu0
        %v699 = vadd.f32 %v348, %v698
        %v700 = vpop.f32.mrb[0].mxu0
        %701 = vmatprep.mubr.f32.mxu0 0.0
        %702 = vmatmul.mubr.f32.gmra.mrb[0].mxu0 %v408
        %v703 = vpop.f32.mrb[0].mxu0
        %v704 = vadd.f32 %v348, %v703
        %v705 = vpop.f32.mrb[0].mxu0
        %706 = vmatprep.mubr.f32.mxu0 0.0
        %707 = vmatmul.mubr.f32.gmra.mrb[0].mxu0 %v411
        %v708 = vpop.f32.mrb[0].mxu0
        %v709 = vadd.f32 %v348, %v708
        %v710 = vpop.f32.mrb[0].mxu0
        %711 = vmatprep.mubr.f32.mxu0 0.0
        %712 = vmatmul.mubr.f32.gmra.mrb[0].mxu0 %v414
        %v713 = vpop.f32.mrb[0].mxu0
        %v714 = vadd.f32 %v348, %v713
        %v715 = vpop.f32.mrb[0].mxu0
        %716 = vmatprep.mubr.f32.mxu0 0.0
        %717 = vmatmul.mubr.f32.gmra.mrb[0].mxu0 %v417
        %v718 = vpop.f32.mrb[0].mxu0
        %v719 = vadd.f32 %v348, %v718
        %v720 = vpop.f32.mrb[0].mxu0
        %721 = vmatprep.mubr.f32.mxu0 0.0
        %722 = vmatmul.mubr.f32.gmra.mrb[0].mxu0 %v420
        %v723 = vpop.f32.mrb[0].mxu0
        %v724 = vadd.f32 %v348, %v723
        %v725 = vpop.f32.mrb[0].mxu0
        %726 = vmatprep.mubr.f32.mxu0 0.0
        %727 = vmatmul.mubr.f32.gmra.mrb[0].mxu0 %v423
        %v728 = vpop.f32.mrb[0].mxu0
        %v729 = vadd.f32 %v348, %v728
        %v730 = vpop.f32.mrb[0].mxu0
        %731 = vmatprep.mubr.f32.mxu0 0.0
        %732 = vmatmul.mubr.f32.gmra.mrb[0].mxu0 %v426
        %v733 = vpop.f32.mrb[0].mxu0
        %v734 = vadd.f32 %v348, %v733
        %v735 = vpop.f32.mrb[0].mxu0
        %736 = vmatprep.mubr.f32.mxu0 0.0
        %737 = vmatmul.mubr.f32.gmra.mrb[0].mxu0 %v429
        %v738 = vpop.f32.mrb[0].mxu0
        %v739 = vadd.f32 %v348, %v738
        %v740 = vpop.f32.mrb[0].mxu0
        %741 = vmatprep.mubr.f32.mxu0 0.0
        %742 = vmatmul.mubr.f32.gmra.mrb[0].mxu0 %v432
        %v743 = vpop.f32.mrb[0].mxu0
        %v744 = vadd.f32 %v348, %v743
        %v745 = vpop.f32.mrb[0].mxu0
        %746 = vmatprep.mubr.f32.mxu0 0.0
        %747 = vmatmul.mubr.f32.gmra.mrb[0].mxu0 %v435
        %v748 = vpop.f32.mrb[0].mxu0
        %v749 = vadd.f32 %v348, %v748
        %v750 = vpop.f32.mrb[0].mxu0
        %751 = vmatprep.mubr.f32.mxu0 0.0
        %752 = vmatmul.mubr.f32.gmra.mrb[0].mxu0 %v438
        %v753 = vpop.f32.mrb[0].mxu0
        %v754 = vadd.f32 %v348, %v753
        %v755 = vpop.f32.mrb[0].mxu0
        %756 = vmatprep.mubr.f32.mxu0 0.0
        %757 = vmatmul.mubr.f32.gmra.mrb[0].mxu0 %v441
        %v758 = vpop.f32.mrb[0].mxu0
        %v759 = vadd.f32 %v348, %v758
        %v760 = vpop.f32.mrb[0].mxu0
        %761 = vmatprep.mubr.f32.mxu0 0.0
        %762 = vmatmul.mubr.f32.gmra.mrb[0].mxu0 %v444
        %v763 = vpop.f32.mrb[0].mxu0
        %v764 = vadd.f32 %v348, %v763
        %v765 = vpop.f32.mrb[0].mxu0
        %766 = vmatprep.mubr.f32.mxu0 0.0
        %767 = vmatmul.mubr.f32.gmra.mrb[0].mxu0 %v447
        %v768 = vpop.f32.mrb[0].mxu0
        %v769 = vadd.f32 %v348, %v768
        %v770 = vpop.f32.mrb[0].mxu0
        %771 = vmatprep.mubr.f32.mxu0 0.0
        %772 = vmatmul.mubr.f32.gmra.mrb[0].mxu0 %v450
        %v773 = vpop.f32.mrb[0].mxu0
        %v774 = vadd.f32 %v348, %v773
        %v775 = vpop.f32.mrb[0].mxu0
        %776 = vmatprep.mubr.f32.mxu0 0.0
        %777 = vmatmul.mubr.f32.gmra.mrb[0].mxu0 %v453
        %v778 = vpop.f32.mrb[0].mxu0
        %v779 = vadd.f32 %v348, %v778
        %v780 = vpop.f32.mrb[0].mxu0
        %781 = vmatprep.mubr.f32.mxu0 0.0
        %782 = vmatmul.mubr.f32.gmra.mrb[0].mxu0 %v456
        %v783 = vpop.f32.mrb[0].mxu0
        %v784 = vadd.f32 %v348, %v783
        %v785 = vpop.f32.mrb[0].mxu0
        %786 = vmatprep.mubr.f32.mxu0 0.0
        %787 = vmatmul.mubr.f32.gmra.mrb[0].mxu0 %v459
        %v788 = vpop.f32.mrb[0].mxu0
        %v789 = vadd.f32 %v348, %v788
        %v790 = vpop.f32.mrb[0].mxu0
        %791 = vmatprep.mubr.f32.mxu0 0.0
        %792 = vmatmul.mubr.f32.gmra.mrb[0].mxu0 %v462
        %v793 = vpop.f32.mrb[0].mxu0
        %v794 = vadd.f32 %v348, %v793
        %v795 = vpop.f32.mrb[0].mxu0
        %796 = vmatprep.mubr.f32.mxu0 0.0
        %797 = vmatmul.mubr.f32.gmra.mrb[0].mxu0 %v465
        %v798 = vpop.f32.mrb[0].mxu0
        %v799 = vadd.f32 %v348, %v798
        %v800 = vpop.f32.mrb[0].mxu0
        %801 = vmatprep.mubr.f32.mxu0 0.0
        %802 = vmatmul.mubr.f32.gmra.mrb[0].mxu0 %v468
        %v803 = vpop.f32.mrb[0].mxu0
        %v804 = vadd.f32 %v348, %v803
        %v805 = vpop.f32.mrb[0].mxu0
        %806 = vmatprep.mubr.f32.mxu0 0.0
        %807 = vmatmul.mubr.f32.gmra.mrb[0].mxu0 %v471
        %v808 = vpop.f32.mrb[0].mxu0
        %v809 = vadd.f32 %v348, %v808
        %v810 = vpop.f32.mrb[0].mxu0
        %811 = vmatprep.mubr.f32.mxu0 0.0
        %812 = vmatmul.mubr.f32.gmra.mrb[0].mxu0 %v474
        %v813 = vpop.f32.mrb[0].mxu0
        %v814 = vadd.f32 %v348, %v813
        %v815 = vpop.f32.mrb[0].mxu0
        %816 = vmatprep.mubr.f32.mxu0 0.0
        %817 = vmatmul.mubr.f32.gmra.mrb[0].mxu0 %v477
        %v818 = vpop.f32.mrb[0].mxu0
        %v819 = vadd.f32 %v348, %v818
        %v820 = vpop.f32.mrb[0].mxu0
        %821 = vmatprep.mubr.f32.mxu0 0.0
        %822 = vmatmul.mubr.f32.gmra.mrb[0].mxu0 %v480
        %v823 = vpop.f32.mrb[0].mxu0
        %v824 = vadd.f32 %v348, %v823
        %v825 = vpop.f32.mrb[0].mxu0
        %826 = vmatprep.mubr.f32.mxu0 0.0
        %827 = vmatmul.mubr.f32.gmra.mrb[0].mxu0 %v483
        %v828 = vpop.f32.mrb[0].mxu0
        %v829 = vadd.f32 %v348, %v828
        %v830 = vpop.f32.mrb[0].mxu0
        %831 = vmatprep.mubr.f32.mxu0 0.0
        %832 = vmatmul.mubr.f32.gmra.mrb[0].mxu0 %v486
        %v833 = vpop.f32.mrb[0].mxu0
        %v834 = vadd.f32 %v348, %v833
        %v835 = vpop.f32.mrb[0].mxu0
        %836 = vmatprep.mubr.f32.mxu0 0.0
        %837 = vmatmul.mubr.f32.gmra.mrb[0].mxu0 %v489
        %v838 = vpop.f32.mrb[0].mxu0
        %v839 = vadd.f32 %v348, %v838
        %v840 = vpop.f32.mrb[0].mxu0
        %841 = vmatprep.mubr.f32.mxu0 0.0
        %842 = vmatmul.mubr.f32.gmra.mrb[0].mxu0 %v492
        %v843 = vpop.f32.mrb[0].mxu0
        %v844 = vadd.f32 %v348, %v843
        %v845 = vpop.f32.mrb[0].mxu0
        %846 = vmatprep.mubr.f32.mxu0 0.0
        %847 = vmatmul.mubr.f32.gmra.mrb[0].mxu0 %v495
        %v848 = vpop.f32.mrb[0].mxu0
        %v849 = vadd.f32 %v348, %v848
        %v850 = vpop.f32.mrb[0].mxu0
        %851 = vmatprep.mubr.f32.mxu0 0.0
        %852 = vmatmul.mubr.f32.gmra.mrb[0].mxu0 %v498
        %v853 = vpop.f32.mrb[0].mxu0
        %v854 = vadd.f32 %v348, %v853
        %v855 = vpop.f32.mrb[0].mxu0
        %856 = vmatprep.mubr.f32.mxu0 0.0
        %857 = vmatmul.mubr.f32.gmra.mrb[0].mxu0 %v501
        %v858 = vpop.f32.mrb[0].mxu0
        %v859 = vadd.f32 %v348, %v858
        %v860 = vpop.f32.mrb[0].mxu0
        %861 = vmatprep.mubr.f32.mxu0 0.0
        %862 = vmatmul.mubr.f32.gmra.mrb[0].mxu0 %v504
        %v863 = vpop.f32.mrb[0].mxu0
        %v864 = vadd.f32 %v348, %v863
        %v865 = vpop.f32.mrb[0].mxu0
        %866 = vmatprep.mubr.f32.mxu0 0.0
        %867 = vmatmul.mubr.f32.gmra.mrb[0].mxu0 %v507
        %v868 = vpop.f32.mrb[0].mxu0
        %v869 = vadd.f32 %v348, %v868
        %v870 = vpop.f32.mrb[0].mxu0
        %871 = vmatprep.mubr.f32.mxu0 0.0
        %872 = vmatmul.mubr.f32.gmra.mrb[0].mxu0 %v510
        %v873 = vpop.f32.mrb[0].mxu0
        %v874 = vadd.f32 %v348, %v873
        %v875 = vpop.f32.mrb[0].mxu0
        %876 = vmatprep.mubr.f32.mxu0 0.0
        %877 = vmatmul.mubr.f32.gmra.mrb[0].mxu0 %v513
        %v878 = vpop.f32.mrb[0].mxu0
        %v879 = vadd.f32 %v348, %v878
        %v880 = vpop.f32.mrb[0].mxu0
        %881 = vmatprep.mubr.f32.mxu0 0.0
        %882 = vmatmul.mubr.f32.gmra.mrb[0].mxu0 %v516
        %v883 = vpop.f32.mrb[0].mxu0
        %v884 = vadd.f32 %v348, %v883
        %v885 = vpop.f32.mrb[0].mxu0
        %886 = vmatprep.mubr.f32.mxu0 0.0
        %887 = vmatmul.mubr.f32.gmra.mrb[0].mxu0 %v519
        %v888 = vpop.f32.mrb[0].mxu0
        %v889 = vadd.f32 %v348, %v888
        %v890 = vpop.f32.mrb[0].mxu0
        %891 = vmatprep.mubr.f32.mxu0 0.0
        %892 = vmatmul.mubr.f32.gmra.mrb[0].mxu0 %v522
        %v893 = vpop.f32.mrb[0].mxu0
        %v894 = vadd.f32 %v348, %v893
        %v895 = vpop.f32.mrb[0].mxu0
        %896 = vmatprep.mubr.f32.mxu0 0.0
        %897 = vmatmul.mubr.f32.gmra.mrb[0].mxu0 %v525
        %v898 = vpop.f32.mrb[0].mxu0
        %v899 = vadd.f32 %v348, %v898
        %v900 = vpop.f32.mrb[0].mxu0
        %901 = vmatprep.mubr.f32.mxu0 0.0
        %902 = vmatmul.mubr.f32.gmra.mrb[0].mxu0 %v528
        %v903 = vpop.f32.mrb[0].mxu0
        %v904 = vadd.f32 %v348, %v903
        %v905 = vpop.f32.mrb[0].mxu0
        %906 = vmatprep.mubr.f32.mxu0 0.0
        %907 = vmatmul.mubr.f32.gmra.mrb[0].mxu0 %v531
        %v908 = vpop.f32.mrb[0].mxu0
        %v909 = vadd.f32 %v348, %v908
        %v910 = vpop.f32.mrb[0].mxu0
        %911 = vmatprep.mubr.f32.mxu0 0.0
        %912 = vmatmul.mubr.f32.gmra.mrb[0].mxu0 %v534
        %v913 = vpop.f32.mrb[0].mxu0
        %v914 = vadd.f32 %v348, %v913
        %v915 = vpop.f32.mrb[0].mxu0
        %916 = vmatprep.mubr.f32.mxu0 0.0
        %917 = vmatmul.mubr.f32.gmra.mrb[0].mxu0 %v537
        %v918 = vpop.f32.mrb[0].mxu0
        %v919 = vadd.f32 %v348, %v918
        %v920 = vpop.f32.mrb[0].mxu0
        %921 = vmatprep.mubr.f32.mxu0 0.0
        %922 = vmatmul.mubr.f32.gmra.mrb[0].mxu0 %v540
        %v923 = vpop.f32.mrb[0].mxu0
        %v924 = vadd.f32 %v348, %v923
        %v925 = vpop.f32.mrb[0].mxu0
        %926 = vdwg.mxu0
        %935 = vrot.lane.b32.xlu0 %v609, 120
        %v936 = vpop.permute.xlu0 %935
        %937 = vrot.lane.b32.xlu0 %v614, 120
        %v938 = vpop.permute.xlu0 %937
        %939 = vrot.lane.b32.xlu0 %v619, 120
        %v940 = vpop.permute.xlu0 %939
        %941 = vrot.lane.b32.xlu0 %v624, 120
        %v942 = vpop.permute.xlu0 %941
        %943 = vrot.lane.b32.xlu0 %v629, 120
        %v944 = vpop.permute.xlu0 %943
        %945 = vrot.lane.b32.xlu0 %v634, 120
        %v946 = vpop.permute.xlu0 %945
        %947 = vrot.lane.b32.xlu0 %v639, 120
        %v948 = vpop.permute.xlu0 %947
        %949 = vrot.lane.b32.xlu0 %v644, 120
        %v950 = vpop.permute.xlu0 %949
        %v951 = vsel %vm349, %v609, 0
        %v953 = vsel %vm349, %v614, 0
        %v955 = vsel %vm349, %v619, 0
        %v957 = vsel %vm349, %v624, 0
        %v959 = vsel %vm349, %v629, 0
        %v961 = vsel %vm349, %v634, 0
        %v963 = vsel %vm349, %v639, 0
        %v965 = vsel %vm349, %v644, 0
        %v967 = vsel %vm349, %v936, 0
        %v969 = vsel %vm349, %v938, 0
        %v971 = vsel %vm349, %v940, 0
        %v973 = vsel %vm349, %v942, 0
        %v975 = vsel %vm349, %v944, 0
        %v977 = vsel %vm349, %v946, 0
        %v979 = vsel %vm349, %v948, 0
        %v981 = vsel %vm349, %v950, 0
        %983 = vmatprep.subr.mxu0 0.0
        %984 = vmatpush1.xpose.msra.mxu0 %v967
        %985 = vmatprep.subr.mxu0 0.0
        %986 = vmatpush1.xpose.msra.mxu0 %v969
        %987 = vmatprep.subr.mxu0 0.0
        %988 = vmatpush1.xpose.msra.mxu0 %v971
        %989 = vmatprep.subr.mxu0 0.0
        %990 = vmatpush1.xpose.msra.mxu0 %v973
        %991 = vmatprep.subr.mxu0 0.0
        %992 = vmatpush1.xpose.msra.mxu0 %v975
        %993 = vmatprep.subr.mxu0 0.0
        %994 = vmatpush1.xpose.msra.mxu0 %v977
        %995 = vmatprep.subr.mxu0 0.0
        %996 = vmatpush1.xpose.msra.mxu0 %v979
        %997 = vmatprep.subr.mxu0 0.0
        %998 = vmatpush1.xpose.msra.mxu0 %v981
        %999 = vmatprep.subr.mxu0 0.0
        %1000 = vmatpush1.xpose.msra.mxu0 0.0
        %1001 = vmatprep.subr.mxu0 0.0
        %1002 = vmatpush1.xpose.msra.mxu0 0.0
        %1003 = vmatprep.subr.mxu0 0.0
        %1004 = vmatpush1.xpose.msra.mxu0 0.0
        %1005 = vmatprep.subr.mxu0 0.0
        %1006 = vmatpush1.xpose.msra.mxu0 0.0
        %1007 = vmatprep.subr.mxu0 0.0
        %1008 = vmatpush1.xpose.msra.mxu0 0.0
        %1009 = vmatprep.subr.mxu0 0.0
        %1010 = vmatpush1.xpose.msra.mxu0 0.0
        %1011 = vmatprep.subr.mxu0 0.0
        %1012 = vmatpush1.xpose.msra.mxu0 0.0
        %1013 = vmatprep.subr.mxu0 0.0
        %1014 = vmatpush1.xpose.msra.mxu0 0.0
        %1015 = vmatprep.subr.mxu0 0.0
        %1016 = vmatpush1.xpose.msra.mxu0 0.0
        %1017 = vmatprep.subr.mxu0 0.0
        %1018 = vmatpush1.xpose.msra.mxu0 0.0
        %1019 = vmatprep.subr.mxu0 0.0
        %1020 = vmatpush1.xpose.msra.mxu0 0.0
        %1021 = vmatprep.subr.mxu0 0.0
        %1022 = vmatpush1.xpose.msra.mxu0 0.0
        %1023 = vmatprep.subr.mxu0 0.0
        %1024 = vmatpush1.xpose.msra.mxu0 0.0
        %1025 = vmatprep.subr.mxu0 0.0
        %1026 = vmatpush1.xpose.msra.mxu0 0.0
        %1027 = vmatprep.subr.mxu0 0.0
        %1028 = vmatpush1.xpose.msra.mxu0 0.0
        %1029 = vmatprep.subr.mxu0 0.0
        %1030 = vmatpush1.xpose.msra.mxu0 0.0
        %1031 = vmatprep.subr.mxu0 0.0
        %1032 = vmatpush1.xpose.msra.mxu0 0.0
        %1033 = vmatprep.subr.mxu0 0.0
        %1034 = vmatpush1.xpose.msra.mxu0 0.0
        %1035 = vmatprep.subr.mxu0 0.0
        %1036 = vmatpush1.xpose.msra.mxu0 0.0
        %1037 = vmatprep.subr.mxu0 0.0
        %1038 = vmatpush1.xpose.msra.mxu0 0.0
        %1039 = vmatprep.subr.mxu0 0.0
        %1040 = vmatpush1.xpose.msra.mxu0 0.0
        %1041 = vmatprep.subr.mxu0 0.0
        %1042 = vmatpush1.xpose.msra.mxu0 0.0
        %1043 = vmatprep.subr.mxu0 0.0
        %1044 = vmatpush1.xpose.msra.mxu0 0.0
        %1045 = vmatprep.subr.mxu0 0.0
        %1046 = vmatpush1.xpose.msra.mxu0 0.0
        %1047 = vmatprep.mubr.f32.mxu0 0.0
        %1048 = vmatmul.mubr.f32.gmra.mrb[0].mxu0 %v951
        %v1049 = vpop.f32.mrb[0].mxu0
        %v1050 = vadd.f32 0.0, %v1049
        %v1051 = vpop.f32.mrb[0].mxu0
        %1052 = vmatprep.mubr.f32.mxu0 0.0
        %1053 = vmatmul.mubr.f32.gmra.mrb[0].mxu0 %v953
        %v1054 = vpop.f32.mrb[0].mxu0
        %v1055 = vadd.f32 0.0, %v1054
        %v1056 = vpop.f32.mrb[0].mxu0
        %1057 = vmatprep.mubr.f32.mxu0 0.0
        %1058 = vmatmul.mubr.f32.gmra.mrb[0].mxu0 %v955
        %v1059 = vpop.f32.mrb[0].mxu0
        %v1060 = vadd.f32 0.0, %v1059
        %v1061 = vpop.f32.mrb[0].mxu0
        %1062 = vmatprep.mubr.f32.mxu0 0.0
        %1063 = vmatmul.mubr.f32.gmra.mrb[0].mxu0 %v957
        %v1064 = vpop.f32.mrb[0].mxu0
        %v1065 = vadd.f32 0.0, %v1064
        %v1066 = vpop.f32.mrb[0].mxu0
        %1067 = vmatprep.mubr.f32.mxu0 0.0
        %1068 = vmatmul.mubr.f32.gmra.mrb[0].mxu0 %v959
        %v1069 = vpop.f32.mrb[0].mxu0
        %v1070 = vadd.f32 0.0, %v1069
        %v1071 = vpop.f32.mrb[0].mxu0
        %1072 = vmatprep.mubr.f32.mxu0 0.0
        %1073 = vmatmul.mubr.f32.gmra.mrb[0].mxu0 %v961
        %v1074 = vpop.f32.mrb[0].mxu0
        %v1075 = vadd.f32 0.0, %v1074
        %v1076 = vpop.f32.mrb[0].mxu0
        %1077 = vmatprep.mubr.f32.mxu0 0.0
        %1078 = vmatmul.mubr.f32.gmra.mrb[0].mxu0 %v963
        %v1079 = vpop.f32.mrb[0].mxu0
        %v1080 = vadd.f32 0.0, %v1079
        %v1081 = vpop.f32.mrb[0].mxu0
        %1082 = vmatprep.mubr.f32.mxu0 0.0
        %1083 = vmatmul.mubr.f32.gmra.mrb[0].mxu0 %v965
        %v1084 = vpop.f32.mrb[0].mxu0
        %v1085 = vadd.f32 0.0, %v1084
        %v1086 = vpop.f32.mrb[0].mxu0
        %1087 = vdwg.mxu0
        %1096 = vrot.lane.b32.xlu0 %v649, 120
        %v1097 = vpop.permute.xlu0 %1096
        %1098 = vrot.lane.b32.xlu0 %v654, 120
        %v1099 = vpop.permute.xlu0 %1098
        %1100 = vrot.lane.b32.xlu0 %v659, 120
        %v1101 = vpop.permute.xlu0 %1100
        %1102 = vrot.lane.b32.xlu0 %v664, 120
        %v1103 = vpop.permute.xlu0 %1102
        %1104 = vrot.lane.b32.xlu0 %v669, 120
        %v1105 = vpop.permute.xlu0 %1104
        %1106 = vrot.lane.b32.xlu0 %v674, 120
        %v1107 = vpop.permute.xlu0 %1106
        %1108 = vrot.lane.b32.xlu0 %v679, 120
        %v1109 = vpop.permute.xlu0 %1108
        %1110 = vrot.lane.b32.xlu0 %v684, 120
        %v1111 = vpop.permute.xlu0 %1110
        %v1112 = vsel %vm349, %v649, 0
        %v1114 = vsel %vm349, %v654, 0
        %v1116 = vsel %vm349, %v659, 0
        %v1118 = vsel %vm349, %v664, 0
        %v1120 = vsel %vm349, %v669, 0
        %v1122 = vsel %vm349, %v674, 0
        %v1124 = vsel %vm349, %v679, 0
        %v1126 = vsel %vm349, %v684, 0
        %v1128 = vsel %vm349, %v1097, 0
        %v1130 = vsel %vm349, %v1099, 0
        %v1132 = vsel %vm349, %v1101, 0
        %v1134 = vsel %vm349, %v1103, 0
        %v1136 = vsel %vm349, %v1105, 0
        %v1138 = vsel %vm349, %v1107, 0
        %v1140 = vsel %vm349, %v1109, 0
        %v1142 = vsel %vm349, %v1111, 0
        %1144 = vmatprep.subr.mxu0 0.0
        %1145 = vmatpush1.xpose.msra.mxu0 %v1128
        %1146 = vmatprep.subr.mxu0 0.0
        %1147 = vmatpush1.xpose.msra.mxu0 %v1130
        %1148 = vmatprep.subr.mxu0 0.0
        %1149 = vmatpush1.xpose.msra.mxu0 %v1132
        %1150 = vmatprep.subr.mxu0 0.0
        %1151 = vmatpush1.xpose.msra.mxu0 %v1134
        %1152 = vmatprep.subr.mxu0 0.0
        %1153 = vmatpush1.xpose.msra.mxu0 %v1136
        %1154 = vmatprep.subr.mxu0 0.0
        %1155 = vmatpush1.xpose.msra.mxu0 %v1138
        %1156 = vmatprep.subr.mxu0 0.0
        %1157 = vmatpush1.xpose.msra.mxu0 %v1140
        %1158 = vmatprep.subr.mxu0 0.0
        %1159 = vmatpush1.xpose.msra.mxu0 %v1142
        %1160 = vmatprep.subr.mxu0 0.0
        %1161 = vmatpush1.xpose.msra.mxu0 0.0
        %1162 = vmatprep.subr.mxu0 0.0
        %1163 = vmatpush1.xpose.msra.mxu0 0.0
        %1164 = vmatprep.subr.mxu0 0.0
        %1165 = vmatpush1.xpose.msra.mxu0 0.0
        %1166 = vmatprep.subr.mxu0 0.0
        %1167 = vmatpush1.xpose.msra.mxu0 0.0
        %1168 = vmatprep.subr.mxu0 0.0
        %1169 = vmatpush1.xpose.msra.mxu0 0.0
        %1170 = vmatprep.subr.mxu0 0.0
        %1171 = vmatpush1.xpose.msra.mxu0 0.0
        %1172 = vmatprep.subr.mxu0 0.0
        %1173 = vmatpush1.xpose.msra.mxu0 0.0
        %1174 = vmatprep.subr.mxu0 0.0
        %1175 = vmatpush1.xpose.msra.mxu0 0.0
        %1176 = vmatprep.subr.mxu0 0.0
        %1177 = vmatpush1.xpose.msra.mxu0 0.0
        %1178 = vmatprep.subr.mxu0 0.0
        %1179 = vmatpush1.xpose.msra.mxu0 0.0
        %1180 = vmatprep.subr.mxu0 0.0
        %1181 = vmatpush1.xpose.msra.mxu0 0.0
        %1182 = vmatprep.subr.mxu0 0.0
        %1183 = vmatpush1.xpose.msra.mxu0 0.0
        %1184 = vmatprep.subr.mxu0 0.0
        %1185 = vmatpush1.xpose.msra.mxu0 0.0
        %1186 = vmatprep.subr.mxu0 0.0
        %1187 = vmatpush1.xpose.msra.mxu0 0.0
        %1188 = vmatprep.subr.mxu0 0.0
        %1189 = vmatpush1.xpose.msra.mxu0 0.0
        %1190 = vmatprep.subr.mxu0 0.0
        %1191 = vmatpush1.xpose.msra.mxu0 0.0
        %1192 = vmatprep.subr.mxu0 0.0
        %1193 = vmatpush1.xpose.msra.mxu0 0.0
        %1194 = vmatprep.subr.mxu0 0.0
        %1195 = vmatpush1.xpose.msra.mxu0 0.0
        %1196 = vmatprep.subr.mxu0 0.0
        %1197 = vmatpush1.xpose.msra.mxu0 0.0
        %1198 = vmatprep.subr.mxu0 0.0
        %1199 = vmatpush1.xpose.msra.mxu0 0.0
        %1200 = vmatprep.subr.mxu0 0.0
        %1201 = vmatpush1.xpose.msra.mxu0 0.0
        %1202 = vmatprep.subr.mxu0 0.0
        %1203 = vmatpush1.xpose.msra.mxu0 0.0
        %1204 = vmatprep.subr.mxu0 0.0
        %1205 = vmatpush1.xpose.msra.mxu0 0.0
        %1206 = vmatprep.subr.mxu0 0.0
        %1207 = vmatpush1.xpose.msra.mxu0 0.0
        %1208 = vmatprep.mubr.f32.mxu0 0.0
        %1209 = vmatmul.mubr.f32.gmra.mrb[0].mxu0 %v1112
        %v1210 = vpop.f32.mrb[0].mxu0
        %v1211 = vadd.f32 0.0, %v1210
        %v1212 = vpop.f32.mrb[0].mxu0
        %1213 = vmatprep.mubr.f32.mxu0 0.0
        %1214 = vmatmul.mubr.f32.gmra.mrb[0].mxu0 %v1114
        %v1215 = vpop.f32.mrb[0].mxu0
        %v1216 = vadd.f32 0.0, %v1215
        %v1217 = vpop.f32.mrb[0].mxu0
        %1218 = vmatprep.mubr.f32.mxu0 0.0
        %1219 = vmatmul.mubr.f32.gmra.mrb[0].mxu0 %v1116
        %v1220 = vpop.f32.mrb[0].mxu0
        %v1221 = vadd.f32 0.0, %v1220
        %v1222 = vpop.f32.mrb[0].mxu0
        %1223 = vmatprep.mubr.f32.mxu0 0.0
        %1224 = vmatmul.mubr.f32.gmra.mrb[0].mxu0 %v1118
        %v1225 = vpop.f32.mrb[0].mxu0
        %v1226 = vadd.f32 0.0, %v1225
        %v1227 = vpop.f32.mrb[0].mxu0
        %1228 = vmatprep.mubr.f32.mxu0 0.0
        %1229 = vmatmul.mubr.f32.gmra.mrb[0].mxu0 %v1120
        %v1230 = vpop.f32.mrb[0].mxu0
        %v1231 = vadd.f32 0.0, %v1230
        %v1232 = vpop.f32.mrb[0].mxu0
        %1233 = vmatprep.mubr.f32.mxu0 0.0
        %1234 = vmatmul.mubr.f32.gmra.mrb[0].mxu0 %v1122
        %v1235 = vpop.f32.mrb[0].mxu0
        %v1236 = vadd.f32 0.0, %v1235
        %v1237 = vpop.f32.mrb[0].mxu0
        %1238 = vmatprep.mubr.f32.mxu0 0.0
        %1239 = vmatmul.mubr.f32.gmra.mrb[0].mxu0 %v1124
        %v1240 = vpop.f32.mrb[0].mxu0
        %v1241 = vadd.f32 0.0, %v1240
        %v1242 = vpop.f32.mrb[0].mxu0
        %1243 = vmatprep.mubr.f32.mxu0 0.0
        %1244 = vmatmul.mubr.f32.gmra.mrb[0].mxu0 %v1126
        %v1245 = vpop.f32.mrb[0].mxu0
        %v1246 = vadd.f32 0.0, %v1245
        %v1247 = vpop.f32.mrb[0].mxu0
        %1248 = vdwg.mxu0
        %1257 = vrot.lane.b32.xlu0 %v689, 120
        %v1258 = vpop.permute.xlu0 %1257
        %1259 = vrot.lane.b32.xlu0 %v694, 120
        %v1260 = vpop.permute.xlu0 %1259
        %1261 = vrot.lane.b32.xlu0 %v699, 120
        %v1262 = vpop.permute.xlu0 %1261
        %1263 = vrot.lane.b32.xlu0 %v704, 120
        %v1264 = vpop.permute.xlu0 %1263
        %1265 = vrot.lane.b32.xlu0 %v709, 120
        %v1266 = vpop.permute.xlu0 %1265
        %1267 = vrot.lane.b32.xlu0 %v714, 120
        %v1268 = vpop.permute.xlu0 %1267
        %1269 = vrot.lane.b32.xlu0 %v719, 120
        %v1270 = vpop.permute.xlu0 %1269
        %1271 = vrot.lane.b32.xlu0 %v724, 120
        %v1272 = vpop.permute.xlu0 %1271
        %v1273 = vsel %vm349, %v689, 0
        %v1275 = vsel %vm349, %v694, 0
        %v1277 = vsel %vm349, %v699, 0
        %v1279 = vsel %vm349, %v704, 0
        %v1281 = vsel %vm349, %v709, 0
        %v1283 = vsel %vm349, %v714, 0
        %v1285 = vsel %vm349, %v719, 0
        %v1287 = vsel %vm349, %v724, 0
        %v1289 = vsel %vm349, %v1258, 0
        %v1291 = vsel %vm349, %v1260, 0
        %v1293 = vsel %vm349, %v1262, 0
        %v1295 = vsel %vm349, %v1264, 0
        %v1297 = vsel %vm349, %v1266, 0
        %v1299 = vsel %vm349, %v1268, 0
        %v1301 = vsel %vm349, %v1270, 0
        %v1303 = vsel %vm349, %v1272, 0
        %1305 = vmatprep.subr.mxu0 0.0
        %1306 = vmatpush1.xpose.msra.mxu0 %v1289
        %1307 = vmatprep.subr.mxu0 0.0
        %1308 = vmatpush1.xpose.msra.mxu0 %v1291
        %1309 = vmatprep.subr.mxu0 0.0
        %1310 = vmatpush1.xpose.msra.mxu0 %v1293
        %1311 = vmatprep.subr.mxu0 0.0
        %1312 = vmatpush1.xpose.msra.mxu0 %v1295
        %1313 = vmatprep.subr.mxu0 0.0
        %1314 = vmatpush1.xpose.msra.mxu0 %v1297
        %1315 = vmatprep.subr.mxu0 0.0
        %1316 = vmatpush1.xpose.msra.mxu0 %v1299
        %1317 = vmatprep.subr.mxu0 0.0
        %1318 = vmatpush1.xpose.msra.mxu0 %v1301
        %1319 = vmatprep.subr.mxu0 0.0
        %1320 = vmatpush1.xpose.msra.mxu0 %v1303
        %1321 = vmatprep.subr.mxu0 0.0
        %1322 = vmatpush1.xpose.msra.mxu0 0.0
        %1323 = vmatprep.subr.mxu0 0.0
        %1324 = vmatpush1.xpose.msra.mxu0 0.0
        %1325 = vmatprep.subr.mxu0 0.0
        %1326 = vmatpush1.xpose.msra.mxu0 0.0
        %1327 = vmatprep.subr.mxu0 0.0
        %1328 = vmatpush1.xpose.msra.mxu0 0.0
        %1329 = vmatprep.subr.mxu0 0.0
        %1330 = vmatpush1.xpose.msra.mxu0 0.0
        %1331 = vmatprep.subr.mxu0 0.0
        %1332 = vmatpush1.xpose.msra.mxu0 0.0
        %1333 = vmatprep.subr.mxu0 0.0
        %1334 = vmatpush1.xpose.msra.mxu0 0.0
        %1335 = vmatprep.subr.mxu0 0.0
        %1336 = vmatpush1.xpose.msra.mxu0 0.0
        %1337 = vmatprep.subr.mxu0 0.0
        %1338 = vmatpush1.xpose.msra.mxu0 0.0
        %1339 = vmatprep.subr.mxu0 0.0
        %1340 = vmatpush1.xpose.msra.mxu0 0.0
        %1341 = vmatprep.subr.mxu0 0.0
        %1342 = vmatpush1.xpose.msra.mxu0 0.0
        %1343 = vmatprep.subr.mxu0 0.0
        %1344 = vmatpush1.xpose.msra.mxu0 0.0
        %1345 = vmatprep.subr.mxu0 0.0
        %1346 = vmatpush1.xpose.msra.mxu0 0.0
        %1347 = vmatprep.subr.mxu0 0.0
        %1348 = vmatpush1.xpose.msra.mxu0 0.0
        %1349 = vmatprep.subr.mxu0 0.0
        %1350 = vmatpush1.xpose.msra.mxu0 0.0
        %1351 = vmatprep.subr.mxu0 0.0
        %1352 = vmatpush1.xpose.msra.mxu0 0.0
        %1353 = vmatprep.subr.mxu0 0.0
        %1354 = vmatpush1.xpose.msra.mxu0 0.0
        %1355 = vmatprep.subr.mxu0 0.0
        %1356 = vmatpush1.xpose.msra.mxu0 0.0
        %1357 = vmatprep.subr.mxu0 0.0
        %1358 = vmatpush1.xpose.msra.mxu0 0.0
        %1359 = vmatprep.subr.mxu0 0.0
        %1360 = vmatpush1.xpose.msra.mxu0 0.0
        %1361 = vmatprep.subr.mxu0 0.0
        %1362 = vmatpush1.xpose.msra.mxu0 0.0
        %1363 = vmatprep.subr.mxu0 0.0
        %1364 = vmatpush1.xpose.msra.mxu0 0.0
        %1365 = vmatprep.subr.mxu0 0.0
        %1366 = vmatpush1.xpose.msra.mxu0 0.0
        %1367 = vmatprep.subr.mxu0 0.0
        %1368 = vmatpush1.xpose.msra.mxu0 0.0
        %1369 = vmatprep.mubr.f32.mxu0 0.0
        %1370 = vmatmul.mubr.f32.gmra.mrb[0].mxu0 %v1273
        %v1371 = vpop.f32.mrb[0].mxu0
        %v1372 = vadd.f32 0.0, %v1371
        %v1373 = vpop.f32.mrb[0].mxu0
        %1374 = vmatprep.mubr.f32.mxu0 0.0
        %1375 = vmatmul.mubr.f32.gmra.mrb[0].mxu0 %v1275
        %v1376 = vpop.f32.mrb[0].mxu0
        %v1377 = vadd.f32 0.0, %v1376
        %v1378 = vpop.f32.mrb[0].mxu0
        %1379 = vmatprep.mubr.f32.mxu0 0.0
        %1380 = vmatmul.mubr.f32.gmra.mrb[0].mxu0 %v1277
        %v1381 = vpop.f32.mrb[0].mxu0
        %v1382 = vadd.f32 0.0, %v1381
        %v1383 = vpop.f32.mrb[0].mxu0
        %1384 = vmatprep.mubr.f32.mxu0 0.0
        %1385 = vmatmul.mubr.f32.gmra.mrb[0].mxu0 %v1279
        %v1386 = vpop.f32.mrb[0].mxu0
        %v1387 = vadd.f32 0.0, %v1386
        %v1388 = vpop.f32.mrb[0].mxu0
        %1389 = vmatprep.mubr.f32.mxu0 0.0
        %1390 = vmatmul.mubr.f32.gmra.mrb[0].mxu0 %v1281
        %v1391 = vpop.f32.mrb[0].mxu0
        %v1392 = vadd.f32 0.0, %v1391
        %v1393 = vpop.f32.mrb[0].mxu0
        %1394 = vmatprep.mubr.f32.mxu0 0.0
        %1395 = vmatmul.mubr.f32.gmra.mrb[0].mxu0 %v1283
        %v1396 = vpop.f32.mrb[0].mxu0
        %v1397 = vadd.f32 0.0, %v1396
        %v1398 = vpop.f32.mrb[0].mxu0
        %1399 = vmatprep.mubr.f32.mxu0 0.0
        %1400 = vmatmul.mubr.f32.gmra.mrb[0].mxu0 %v1285
        %v1401 = vpop.f32.mrb[0].mxu0
        %v1402 = vadd.f32 0.0, %v1401
        %v1403 = vpop.f32.mrb[0].mxu0
        %1404 = vmatprep.mubr.f32.mxu0 0.0
        %1405 = vmatmul.mubr.f32.gmra.mrb[0].mxu0 %v1287
        %v1406 = vpop.f32.mrb[0].mxu0
        %v1407 = vadd.f32 0.0, %v1406
        %v1408 = vpop.f32.mrb[0].mxu0
        %1409 = vdwg.mxu0
        %1418 = vrot.lane.b32.xlu0 %v729, 120
        %v1419 = vpop.permute.xlu0 %1418
        %1420 = vrot.lane.b32.xlu0 %v734, 120
        %v1421 = vpop.permute.xlu0 %1420
        %1422 = vrot.lane.b32.xlu0 %v739, 120
        %v1423 = vpop.permute.xlu0 %1422
        %1424 = vrot.lane.b32.xlu0 %v744, 120
        %v1425 = vpop.permute.xlu0 %1424
        %1426 = vrot.lane.b32.xlu0 %v749, 120
        %v1427 = vpop.permute.xlu0 %1426
        %1428 = vrot.lane.b32.xlu0 %v754, 120
        %v1429 = vpop.permute.xlu0 %1428
        %1430 = vrot.lane.b32.xlu0 %v759, 120
        %v1431 = vpop.permute.xlu0 %1430
        %1432 = vrot.lane.b32.xlu0 %v764, 120
        %v1433 = vpop.permute.xlu0 %1432
        %v1434 = vsel %vm349, %v729, 0
        %v1436 = vsel %vm349, %v734, 0
        %v1438 = vsel %vm349, %v739, 0
        %v1440 = vsel %vm349, %v744, 0
        %v1442 = vsel %vm349, %v749, 0
        %v1444 = vsel %vm349, %v754, 0
        %v1446 = vsel %vm349, %v759, 0
        %v1448 = vsel %vm349, %v764, 0
        %v1450 = vsel %vm349, %v1419, 0
        %v1452 = vsel %vm349, %v1421, 0
        %v1454 = vsel %vm349, %v1423, 0
        %v1456 = vsel %vm349, %v1425, 0
        %v1458 = vsel %vm349, %v1427, 0
        %v1460 = vsel %vm349, %v1429, 0
        %v1462 = vsel %vm349, %v1431, 0
        %v1464 = vsel %vm349, %v1433, 0
        %1466 = vmatprep.subr.mxu0 0.0
        %1467 = vmatpush1.xpose.msra.mxu0 %v1450
        %1468 = vmatprep.subr.mxu0 0.0
        %1469 = vmatpush1.xpose.msra.mxu0 %v1452
        %1470 = vmatprep.subr.mxu0 0.0
        %1471 = vmatpush1.xpose.msra.mxu0 %v1454
        %1472 = vmatprep.subr.mxu0 0.0
        %1473 = vmatpush1.xpose.msra.mxu0 %v1456
        %1474 = vmatprep.subr.mxu0 0.0
        %1475 = vmatpush1.xpose.msra.mxu0 %v1458
        %1476 = vmatprep.subr.mxu0 0.0
        %1477 = vmatpush1.xpose.msra.mxu0 %v1460
        %1478 = vmatprep.subr.mxu0 0.0
        %1479 = vmatpush1.xpose.msra.mxu0 %v1462
        %1480 = vmatprep.subr.mxu0 0.0
        %1481 = vmatpush1.xpose.msra.mxu0 %v1464
        %1482 = vmatprep.subr.mxu0 0.0
        %1483 = vmatpush1.xpose.msra.mxu0 0.0
        %1484 = vmatprep.subr.mxu0 0.0
        %1485 = vmatpush1.xpose.msra.mxu0 0.0
        %1486 = vmatprep.subr.mxu0 0.0
        %1487 = vmatpush1.xpose.msra.mxu0 0.0
        %1488 = vmatprep.subr.mxu0 0.0
        %1489 = vmatpush1.xpose.msra.mxu0 0.0
        %1490 = vmatprep.subr.mxu0 0.0
        %1491 = vmatpush1.xpose.msra.mxu0 0.0
        %1492 = vmatprep.subr.mxu0 0.0
        %1493 = vmatpush1.xpose.msra.mxu0 0.0
        %1494 = vmatprep.subr.mxu0 0.0
        %1495 = vmatpush1.xpose.msra.mxu0 0.0
        %1496 = vmatprep.subr.mxu0 0.0
        %1497 = vmatpush1.xpose.msra.mxu0 0.0
        %1498 = vmatprep.subr.mxu0 0.0
        %1499 = vmatpush1.xpose.msra.mxu0 0.0
        %1500 = vmatprep.subr.mxu0 0.0
        %1501 = vmatpush1.xpose.msra.mxu0 0.0
        %1502 = vmatprep.subr.mxu0 0.0
        %1503 = vmatpush1.xpose.msra.mxu0 0.0
        %1504 = vmatprep.subr.mxu0 0.0
        %1505 = vmatpush1.xpose.msra.mxu0 0.0
        %1506 = vmatprep.subr.mxu0 0.0
        %1507 = vmatpush1.xpose.msra.mxu0 0.0
        %1508 = vmatprep.subr.mxu0 0.0
        %1509 = vmatpush1.xpose.msra.mxu0 0.0
        %1510 = vmatprep.subr.mxu0 0.0
        %1511 = vmatpush1.xpose.msra.mxu0 0.0
        %1512 = vmatprep.subr.mxu0 0.0
        %1513 = vmatpush1.xpose.msra.mxu0 0.0
        %1514 = vmatprep.subr.mxu0 0.0
        %1515 = vmatpush1.xpose.msra.mxu0 0.0
        %1516 = vmatprep.subr.mxu0 0.0
        %1517 = vmatpush1.xpose.msra.mxu0 0.0
        %1518 = vmatprep.subr.mxu0 0.0
        %1519 = vmatpush1.xpose.msra.mxu0 0.0
        %1520 = vmatprep.subr.mxu0 0.0
        %1521 = vmatpush1.xpose.msra.mxu0 0.0
        %1522 = vmatprep.subr.mxu0 0.0
        %1523 = vmatpush1.xpose.msra.mxu0 0.0
        %1524 = vmatprep.subr.mxu0 0.0
        %1525 = vmatpush1.xpose.msra.mxu0 0.0
        %1526 = vmatprep.subr.mxu0 0.0
        %1527 = vmatpush1.xpose.msra.mxu0 0.0
        %1528 = vmatprep.subr.mxu0 0.0
        %1529 = vmatpush1.xpose.msra.mxu0 0.0
        %1530 = vmatprep.mubr.f32.mxu0 0.0
        %1531 = vmatmul.mubr.f32.gmra.mrb[0].mxu0 %v1434
        %v1532 = vpop.f32.mrb[0].mxu0
        %v1533 = vadd.f32 0.0, %v1532
        %v1534 = vpop.f32.mrb[0].mxu0
        %1535 = vmatprep.mubr.f32.mxu0 0.0
        %1536 = vmatmul.mubr.f32.gmra.mrb[0].mxu0 %v1436
        %v1537 = vpop.f32.mrb[0].mxu0
        %v1538 = vadd.f32 0.0, %v1537
        %v1539 = vpop.f32.mrb[0].mxu0
        %1540 = vmatprep.mubr.f32.mxu0 0.0
        %1541 = vmatmul.mubr.f32.gmra.mrb[0].mxu0 %v1438
        %v1542 = vpop.f32.mrb[0].mxu0
        %v1543 = vadd.f32 0.0, %v1542
        %v1544 = vpop.f32.mrb[0].mxu0
        %1545 = vmatprep.mubr.f32.mxu0 0.0
        %1546 = vmatmul.mubr.f32.gmra.mrb[0].mxu0 %v1440
        %v1547 = vpop.f32.mrb[0].mxu0
        %v1548 = vadd.f32 0.0, %v1547
        %v1549 = vpop.f32.mrb[0].mxu0
        %1550 = vmatprep.mubr.f32.mxu0 0.0
        %1551 = vmatmul.mubr.f32.gmra.mrb[0].mxu0 %v1442
        %v1552 = vpop.f32.mrb[0].mxu0
        %v1553 = vadd.f32 0.0, %v1552
        %v1554 = vpop.f32.mrb[0].mxu0
        %1555 = vmatprep.mubr.f32.mxu0 0.0
        %1556 = vmatmul.mubr.f32.gmra.mrb[0].mxu0 %v1444
        %v1557 = vpop.f32.mrb[0].mxu0
        %v1558 = vadd.f32 0.0, %v1557
        %v1559 = vpop.f32.mrb[0].mxu0
        %1560 = vmatprep.mubr.f32.mxu0 0.0
        %1561 = vmatmul.mubr.f32.gmra.mrb[0].mxu0 %v1446
        %v1562 = vpop.f32.mrb[0].mxu0
        %v1563 = vadd.f32 0.0, %v1562
        %v1564 = vpop.f32.mrb[0].mxu0
        %1565 = vmatprep.mubr.f32.mxu0 0.0
        %1566 = vmatmul.mubr.f32.gmra.mrb[0].mxu0 %v1448
        %v1567 = vpop.f32.mrb[0].mxu0
        %v1568 = vadd.f32 0.0, %v1567
        %v1569 = vpop.f32.mrb[0].mxu0
        %1570 = vdwg.mxu0
        %1579 = vrot.lane.b32.xlu0 %v769, 120
        %v1580 = vpop.permute.xlu0 %1579
        %1581 = vrot.lane.b32.xlu0 %v774, 120
        %v1582 = vpop.permute.xlu0 %1581
        %1583 = vrot.lane.b32.xlu0 %v779, 120
        %v1584 = vpop.permute.xlu0 %1583
        %1585 = vrot.lane.b32.xlu0 %v784, 120
        %v1586 = vpop.permute.xlu0 %1585
        %1587 = vrot.lane.b32.xlu0 %v789, 120
        %v1588 = vpop.permute.xlu0 %1587
        %1589 = vrot.lane.b32.xlu0 %v794, 120
        %v1590 = vpop.permute.xlu0 %1589
        %1591 = vrot.lane.b32.xlu0 %v799, 120
        %v1592 = vpop.permute.xlu0 %1591
        %1593 = vrot.lane.b32.xlu0 %v804, 120
        %v1594 = vpop.permute.xlu0 %1593
        %v1595 = vsel %vm349, %v769, 0
        %v1597 = vsel %vm349, %v774, 0
        %v1599 = vsel %vm349, %v779, 0
        %v1601 = vsel %vm349, %v784, 0
        %v1603 = vsel %vm349, %v789, 0
        %v1605 = vsel %vm349, %v794, 0
        %v1607 = vsel %vm349, %v799, 0
        %v1609 = vsel %vm349, %v804, 0
        %v1611 = vsel %vm349, %v1580, 0
        %v1613 = vsel %vm349, %v1582, 0
        %v1615 = vsel %vm349, %v1584, 0
        %v1617 = vsel %vm349, %v1586, 0
        %v1619 = vsel %vm349, %v1588, 0
        %v1621 = vsel %vm349, %v1590, 0
        %v1623 = vsel %vm349, %v1592, 0
        %v1625 = vsel %vm349, %v1594, 0
        %1627 = vmatprep.subr.mxu0 0.0
        %1628 = vmatpush1.xpose.msra.mxu0 %v1611
        %1629 = vmatprep.subr.mxu0 0.0
        %1630 = vmatpush1.xpose.msra.mxu0 %v1613
        %1631 = vmatprep.subr.mxu0 0.0
        %1632 = vmatpush1.xpose.msra.mxu0 %v1615
        %1633 = vmatprep.subr.mxu0 0.0
        %1634 = vmatpush1.xpose.msra.mxu0 %v1617
        %1635 = vmatprep.subr.mxu0 0.0
        %1636 = vmatpush1.xpose.msra.mxu0 %v1619
        %1637 = vmatprep.subr.mxu0 0.0
        %1638 = vmatpush1.xpose.msra.mxu0 %v1621
        %1639 = vmatprep.subr.mxu0 0.0
        %1640 = vmatpush1.xpose.msra.mxu0 %v1623
        %1641 = vmatprep.subr.mxu0 0.0
        %1642 = vmatpush1.xpose.msra.mxu0 %v1625
        %1643 = vmatprep.subr.mxu0 0.0
        %1644 = vmatpush1.xpose.msra.mxu0 0.0
        %1645 = vmatprep.subr.mxu0 0.0
        %1646 = vmatpush1.xpose.msra.mxu0 0.0
        %1647 = vmatprep.subr.mxu0 0.0
        %1648 = vmatpush1.xpose.msra.mxu0 0.0
        %1649 = vmatprep.subr.mxu0 0.0
        %1650 = vmatpush1.xpose.msra.mxu0 0.0
        %1651 = vmatprep.subr.mxu0 0.0
        %1652 = vmatpush1.xpose.msra.mxu0 0.0
        %1653 = vmatprep.subr.mxu0 0.0
        %1654 = vmatpush1.xpose.msra.mxu0 0.0
        %1655 = vmatprep.subr.mxu0 0.0
        %1656 = vmatpush1.xpose.msra.mxu0 0.0
        %1657 = vmatprep.subr.mxu0 0.0
        %1658 = vmatpush1.xpose.msra.mxu0 0.0
        %1659 = vmatprep.subr.mxu0 0.0
        %1660 = vmatpush1.xpose.msra.mxu0 0.0
        %1661 = vmatprep.subr.mxu0 0.0
        %1662 = vmatpush1.xpose.msra.mxu0 0.0
        %1663 = vmatprep.subr.mxu0 0.0
        %1664 = vmatpush1.xpose.msra.mxu0 0.0
        %1665 = vmatprep.subr.mxu0 0.0
        %1666 = vmatpush1.xpose.msra.mxu0 0.0
        %1667 = vmatprep.subr.mxu0 0.0
        %1668 = vmatpush1.xpose.msra.mxu0 0.0
        %1669 = vmatprep.subr.mxu0 0.0
        %1670 = vmatpush1.xpose.msra.mxu0 0.0
        %1671 = vmatprep.subr.mxu0 0.0
        %1672 = vmatpush1.xpose.msra.mxu0 0.0
        %1673 = vmatprep.subr.mxu0 0.0
        %1674 = vmatpush1.xpose.msra.mxu0 0.0
        %1675 = vmatprep.subr.mxu0 0.0
        %1676 = vmatpush1.xpose.msra.mxu0 0.0
        %1677 = vmatprep.subr.mxu0 0.0
        %1678 = vmatpush1.xpose.msra.mxu0 0.0
        %1679 = vmatprep.subr.mxu0 0.0
        %1680 = vmatpush1.xpose.msra.mxu0 0.0
        %1681 = vmatprep.subr.mxu0 0.0
        %1682 = vmatpush1.xpose.msra.mxu0 0.0
        %1683 = vmatprep.subr.mxu0 0.0
        %1684 = vmatpush1.xpose.msra.mxu0 0.0
        %1685 = vmatprep.subr.mxu0 0.0
        %1686 = vmatpush1.xpose.msra.mxu0 0.0
        %1687 = vmatprep.subr.mxu0 0.0
        %1688 = vmatpush1.xpose.msra.mxu0 0.0
        %1689 = vmatprep.subr.mxu0 0.0
        %1690 = vmatpush1.xpose.msra.mxu0 0.0
        %1691 = vmatprep.mubr.f32.mxu0 0.0
        %1692 = vmatmul.mubr.f32.gmra.mrb[0].mxu0 %v1595
        %v1693 = vpop.f32.mrb[0].mxu0
        %v1694 = vadd.f32 0.0, %v1693
        %v1695 = vpop.f32.mrb[0].mxu0
        %1696 = vmatprep.mubr.f32.mxu0 0.0
        %1697 = vmatmul.mubr.f32.gmra.mrb[0].mxu0 %v1597
        %v1698 = vpop.f32.mrb[0].mxu0
        %v1699 = vadd.f32 0.0, %v1698
        %v1700 = vpop.f32.mrb[0].mxu0
        %1701 = vmatprep.mubr.f32.mxu0 0.0
        %1702 = vmatmul.mubr.f32.gmra.mrb[0].mxu0 %v1599
        %v1703 = vpop.f32.mrb[0].mxu0
        %v1704 = vadd.f32 0.0, %v1703
        %v1705 = vpop.f32.mrb[0].mxu0
        %1706 = vmatprep.mubr.f32.mxu0 0.0
        %1707 = vmatmul.mubr.f32.gmra.mrb[0].mxu0 %v1601
        %v1708 = vpop.f32.mrb[0].mxu0
        %v1709 = vadd.f32 0.0, %v1708
        %v1710 = vpop.f32.mrb[0].mxu0
        %1711 = vmatprep.mubr.f32.mxu0 0.0
        %1712 = vmatmul.mubr.f32.gmra.mrb[0].mxu0 %v1603
        %v1713 = vpop.f32.mrb[0].mxu0
        %v1714 = vadd.f32 0.0, %v1713
        %v1715 = vpop.f32.mrb[0].mxu0
        %1716 = vmatprep.mubr.f32.mxu0 0.0
        %1717 = vmatmul.mubr.f32.gmra.mrb[0].mxu0 %v1605
        %v1718 = vpop.f32.mrb[0].mxu0
        %v1719 = vadd.f32 0.0, %v1718
        %v1720 = vpop.f32.mrb[0].mxu0
        %1721 = vmatprep.mubr.f32.mxu0 0.0
        %1722 = vmatmul.mubr.f32.gmra.mrb[0].mxu0 %v1607
        %v1723 = vpop.f32.mrb[0].mxu0
        %v1724 = vadd.f32 0.0, %v1723
        %v1725 = vpop.f32.mrb[0].mxu0
        %1726 = vmatprep.mubr.f32.mxu0 0.0
        %1727 = vmatmul.mubr.f32.gmra.mrb[0].mxu0 %v1609
        %v1728 = vpop.f32.mrb[0].mxu0
        %v1729 = vadd.f32 0.0, %v1728
        %v1730 = vpop.f32.mrb[0].mxu0
        %1731 = vdwg.mxu0
        %1740 = vrot.lane.b32.xlu0 %v809, 120
        %v1741 = vpop.permute.xlu0 %1740
        %1742 = vrot.lane.b32.xlu0 %v814, 120
        %v1743 = vpop.permute.xlu0 %1742
        %1744 = vrot.lane.b32.xlu0 %v819, 120
        %v1745 = vpop.permute.xlu0 %1744
        %1746 = vrot.lane.b32.xlu0 %v824, 120
        %v1747 = vpop.permute.xlu0 %1746
        %1748 = vrot.lane.b32.xlu0 %v829, 120
        %v1749 = vpop.permute.xlu0 %1748
        %1750 = vrot.lane.b32.xlu0 %v834, 120
        %v1751 = vpop.permute.xlu0 %1750
        %1752 = vrot.lane.b32.xlu0 %v839, 120
        %v1753 = vpop.permute.xlu0 %1752
        %1754 = vrot.lane.b32.xlu0 %v844, 120
        %v1755 = vpop.permute.xlu0 %1754
        %v1756 = vsel %vm349, %v809, 0
        %v1758 = vsel %vm349, %v814, 0
        %v1760 = vsel %vm349, %v819, 0
        %v1762 = vsel %vm349, %v824, 0
        %v1764 = vsel %vm349, %v829, 0
        %v1766 = vsel %vm349, %v834, 0
        %v1768 = vsel %vm349, %v839, 0
        %v1770 = vsel %vm349, %v844, 0
        %v1772 = vsel %vm349, %v1741, 0
        %v1774 = vsel %vm349, %v1743, 0
        %v1776 = vsel %vm349, %v1745, 0
        %v1778 = vsel %vm349, %v1747, 0
        %v1780 = vsel %vm349, %v1749, 0
        %v1782 = vsel %vm349, %v1751, 0
        %v1784 = vsel %vm349, %v1753, 0
        %v1786 = vsel %vm349, %v1755, 0
        %1788 = vmatprep.subr.mxu0 0.0
        %1789 = vmatpush1.xpose.msra.mxu0 %v1772
        %1790 = vmatprep.subr.mxu0 0.0
        %1791 = vmatpush1.xpose.msra.mxu0 %v1774
        %1792 = vmatprep.subr.mxu0 0.0
        %1793 = vmatpush1.xpose.msra.mxu0 %v1776
        %1794 = vmatprep.subr.mxu0 0.0
        %1795 = vmatpush1.xpose.msra.mxu0 %v1778
        %1796 = vmatprep.subr.mxu0 0.0
        %1797 = vmatpush1.xpose.msra.mxu0 %v1780
        %1798 = vmatprep.subr.mxu0 0.0
        %1799 = vmatpush1.xpose.msra.mxu0 %v1782
        %1800 = vmatprep.subr.mxu0 0.0
        %1801 = vmatpush1.xpose.msra.mxu0 %v1784
        %1802 = vmatprep.subr.mxu0 0.0
        %1803 = vmatpush1.xpose.msra.mxu0 %v1786
        %1804 = vmatprep.subr.mxu0 0.0
        %1805 = vmatpush1.xpose.msra.mxu0 0.0
        %1806 = vmatprep.subr.mxu0 0.0
        %1807 = vmatpush1.xpose.msra.mxu0 0.0
        %1808 = vmatprep.subr.mxu0 0.0
        %1809 = vmatpush1.xpose.msra.mxu0 0.0
        %1810 = vmatprep.subr.mxu0 0.0
        %1811 = vmatpush1.xpose.msra.mxu0 0.0
        %1812 = vmatprep.subr.mxu0 0.0
        %1813 = vmatpush1.xpose.msra.mxu0 0.0
        %1814 = vmatprep.subr.mxu0 0.0
        %1815 = vmatpush1.xpose.msra.mxu0 0.0
        %1816 = vmatprep.subr.mxu0 0.0
        %1817 = vmatpush1.xpose.msra.mxu0 0.0
        %1818 = vmatprep.subr.mxu0 0.0
        %1819 = vmatpush1.xpose.msra.mxu0 0.0
        %1820 = vmatprep.subr.mxu0 0.0
        %1821 = vmatpush1.xpose.msra.mxu0 0.0
        %1822 = vmatprep.subr.mxu0 0.0
        %1823 = vmatpush1.xpose.msra.mxu0 0.0
        %1824 = vmatprep.subr.mxu0 0.0
        %1825 = vmatpush1.xpose.msra.mxu0 0.0
        %1826 = vmatprep.subr.mxu0 0.0
        %1827 = vmatpush1.xpose.msra.mxu0 0.0
        %1828 = vmatprep.subr.mxu0 0.0
        %1829 = vmatpush1.xpose.msra.mxu0 0.0
        %1830 = vmatprep.subr.mxu0 0.0
        %1831 = vmatpush1.xpose.msra.mxu0 0.0
        %1832 = vmatprep.subr.mxu0 0.0
        %1833 = vmatpush1.xpose.msra.mxu0 0.0
        %1834 = vmatprep.subr.mxu0 0.0
        %1835 = vmatpush1.xpose.msra.mxu0 0.0
        %1836 = vmatprep.subr.mxu0 0.0
        %1837 = vmatpush1.xpose.msra.mxu0 0.0
        %1838 = vmatprep.subr.mxu0 0.0
        %1839 = vmatpush1.xpose.msra.mxu0 0.0
        %1840 = vmatprep.subr.mxu0 0.0
        %1841 = vmatpush1.xpose.msra.mxu0 0.0
        %1842 = vmatprep.subr.mxu0 0.0
        %1843 = vmatpush1.xpose.msra.mxu0 0.0
        %1844 = vmatprep.subr.mxu0 0.0
        %1845 = vmatpush1.xpose.msra.mxu0 0.0
        %1846 = vmatprep.subr.mxu0 0.0
        %1847 = vmatpush1.xpose.msra.mxu0 0.0
        %1848 = vmatprep.subr.mxu0 0.0
        %1849 = vmatpush1.xpose.msra.mxu0 0.0
        %1850 = vmatprep.subr.mxu0 0.0
        %1851 = vmatpush1.xpose.msra.mxu0 0.0
        %1852 = vmatprep.mubr.f32.mxu0 0.0
        %1853 = vmatmul.mubr.f32.gmra.mrb[0].mxu0 %v1756
        %v1854 = vpop.f32.mrb[0].mxu0
        %v1855 = vadd.f32 0.0, %v1854
        %v1856 = vpop.f32.mrb[0].mxu0
        %1857 = vmatprep.mubr.f32.mxu0 0.0
        %1858 = vmatmul.mubr.f32.gmra.mrb[0].mxu0 %v1758
        %v1859 = vpop.f32.mrb[0].mxu0
        %v1860 = vadd.f32 0.0, %v1859
        %v1861 = vpop.f32.mrb[0].mxu0
        %1862 = vmatprep.mubr.f32.mxu0 0.0
        %1863 = vmatmul.mubr.f32.gmra.mrb[0].mxu0 %v1760
        %v1864 = vpop.f32.mrb[0].mxu0
        %v1865 = vadd.f32 0.0, %v1864
        %v1866 = vpop.f32.mrb[0].mxu0
        %1867 = vmatprep.mubr.f32.mxu0 0.0
        %1868 = vmatmul.mubr.f32.gmra.mrb[0].mxu0 %v1762
        %v1869 = vpop.f32.mrb[0].mxu0
        %v1870 = vadd.f32 0.0, %v1869
        %v1871 = vpop.f32.mrb[0].mxu0
        %1872 = vmatprep.mubr.f32.mxu0 0.0
        %1873 = vmatmul.mubr.f32.gmra.mrb[0].mxu0 %v1764
        %v1874 = vpop.f32.mrb[0].mxu0
        %v1875 = vadd.f32 0.0, %v1874
        %v1876 = vpop.f32.mrb[0].mxu0
        %1877 = vmatprep.mubr.f32.mxu0 0.0
        %1878 = vmatmul.mubr.f32.gmra.mrb[0].mxu0 %v1766
        %v1879 = vpop.f32.mrb[0].mxu0
        %v1880 = vadd.f32 0.0, %v1879
        %v1881 = vpop.f32.mrb[0].mxu0
        %1882 = vmatprep.mubr.f32.mxu0 0.0
        %1883 = vmatmul.mubr.f32.gmra.mrb[0].mxu0 %v1768
        %v1884 = vpop.f32.mrb[0].mxu0
        %v1885 = vadd.f32 0.0, %v1884
        %v1886 = vpop.f32.mrb[0].mxu0
        %1887 = vmatprep.mubr.f32.mxu0 0.0
        %1888 = vmatmul.mubr.f32.gmra.mrb[0].mxu0 %v1770
        %v1889 = vpop.f32.mrb[0].mxu0
        %v1890 = vadd.f32 0.0, %v1889
        %v1891 = vpop.f32.mrb[0].mxu0
        %1892 = vdwg.mxu0
        %1901 = vrot.lane.b32.xlu0 %v849, 120
        %v1902 = vpop.permute.xlu0 %1901
        %1903 = vrot.lane.b32.xlu0 %v854, 120
        %v1904 = vpop.permute.xlu0 %1903
        %1905 = vrot.lane.b32.xlu0 %v859, 120
        %v1906 = vpop.permute.xlu0 %1905
        %1907 = vrot.lane.b32.xlu0 %v864, 120
        %v1908 = vpop.permute.xlu0 %1907
        %1909 = vrot.lane.b32.xlu0 %v869, 120
        %v1910 = vpop.permute.xlu0 %1909
        %1911 = vrot.lane.b32.xlu0 %v874, 120
        %v1912 = vpop.permute.xlu0 %1911
        %1913 = vrot.lane.b32.xlu0 %v879, 120
        %v1914 = vpop.permute.xlu0 %1913
        %1915 = vrot.lane.b32.xlu0 %v884, 120
        %v1916 = vpop.permute.xlu0 %1915
        %v1917 = vsel %vm349, %v849, 0
        %v1919 = vsel %vm349, %v854, 0
        %v1921 = vsel %vm349, %v859, 0
        %v1923 = vsel %vm349, %v864, 0
        %v1925 = vsel %vm349, %v869, 0
        %v1927 = vsel %vm349, %v874, 0
        %v1929 = vsel %vm349, %v879, 0
        %v1931 = vsel %vm349, %v884, 0
        %v1933 = vsel %vm349, %v1902, 0
        %v1935 = vsel %vm349, %v1904, 0
        %v1937 = vsel %vm349, %v1906, 0
        %v1939 = vsel %vm349, %v1908, 0
        %v1941 = vsel %vm349, %v1910, 0
        %v1943 = vsel %vm349, %v1912, 0
        %v1945 = vsel %vm349, %v1914, 0
        %v1947 = vsel %vm349, %v1916, 0
        %1949 = vmatprep.subr.mxu0 0.0
        %1950 = vmatpush1.xpose.msra.mxu0 %v1933
        %1951 = vmatprep.subr.mxu0 0.0
        %1952 = vmatpush1.xpose.msra.mxu0 %v1935
        %1953 = vmatprep.subr.mxu0 0.0
        %1954 = vmatpush1.xpose.msra.mxu0 %v1937
        %1955 = vmatprep.subr.mxu0 0.0
        %1956 = vmatpush1.xpose.msra.mxu0 %v1939
        %1957 = vmatprep.subr.mxu0 0.0
        %1958 = vmatpush1.xpose.msra.mxu0 %v1941
        %1959 = vmatprep.subr.mxu0 0.0
        %1960 = vmatpush1.xpose.msra.mxu0 %v1943
        %1961 = vmatprep.subr.mxu0 0.0
        %1962 = vmatpush1.xpose.msra.mxu0 %v1945
        %1963 = vmatprep.subr.mxu0 0.0
        %1964 = vmatpush1.xpose.msra.mxu0 %v1947
        %1965 = vmatprep.subr.mxu0 0.0
        %1966 = vmatpush1.xpose.msra.mxu0 0.0
        %1967 = vmatprep.subr.mxu0 0.0
        %1968 = vmatpush1.xpose.msra.mxu0 0.0
        %1969 = vmatprep.subr.mxu0 0.0
        %1970 = vmatpush1.xpose.msra.mxu0 0.0
        %1971 = vmatprep.subr.mxu0 0.0
        %1972 = vmatpush1.xpose.msra.mxu0 0.0
        %1973 = vmatprep.subr.mxu0 0.0
        %1974 = vmatpush1.xpose.msra.mxu0 0.0
        %1975 = vmatprep.subr.mxu0 0.0
        %1976 = vmatpush1.xpose.msra.mxu0 0.0
        %1977 = vmatprep.subr.mxu0 0.0
        %1978 = vmatpush1.xpose.msra.mxu0 0.0
        %1979 = vmatprep.subr.mxu0 0.0
        %1980 = vmatpush1.xpose.msra.mxu0 0.0
        %1981 = vmatprep.subr.mxu0 0.0
        %1982 = vmatpush1.xpose.msra.mxu0 0.0
        %1983 = vmatprep.subr.mxu0 0.0
        %1984 = vmatpush1.xpose.msra.mxu0 0.0
        %1985 = vmatprep.subr.mxu0 0.0
        %1986 = vmatpush1.xpose.msra.mxu0 0.0
        %1987 = vmatprep.subr.mxu0 0.0
        %1988 = vmatpush1.xpose.msra.mxu0 0.0
        %1989 = vmatprep.subr.mxu0 0.0
        %1990 = vmatpush1.xpose.msra.mxu0 0.0
        %1991 = vmatprep.subr.mxu0 0.0
        %1992 = vmatpush1.xpose.msra.mxu0 0.0
        %1993 = vmatprep.subr.mxu0 0.0
        %1994 = vmatpush1.xpose.msra.mxu0 0.0
        %1995 = vmatprep.subr.mxu0 0.0
        %1996 = vmatpush1.xpose.msra.mxu0 0.0
        %1997 = vmatprep.subr.mxu0 0.0
        %1998 = vmatpush1.xpose.msra.mxu0 0.0
        %1999 = vmatprep.subr.mxu0 0.0
        %2000 = vmatpush1.xpose.msra.mxu0 0.0
        %2001 = vmatprep.subr.mxu0 0.0
        %2002 = vmatpush1.xpose.msra.mxu0 0.0
        %2003 = vmatprep.subr.mxu0 0.0
        %2004 = vmatpush1.xpose.msra.mxu0 0.0
        %2005 = vmatprep.subr.mxu0 0.0
        %2006 = vmatpush1.xpose.msra.mxu0 0.0
        %2007 = vmatprep.subr.mxu0 0.0
        %2008 = vmatpush1.xpose.msra.mxu0 0.0
        %2009 = vmatprep.subr.mxu0 0.0
        %2010 = vmatpush1.xpose.msra.mxu0 0.0
        %2011 = vmatprep.subr.mxu0 0.0
        %2012 = vmatpush1.xpose.msra.mxu0 0.0
        %2013 = vmatprep.mubr.f32.mxu0 0.0
        %2014 = vmatmul.mubr.f32.gmra.mrb[0].mxu0 %v1917
        %v2015 = vpop.f32.mrb[0].mxu0
        %v2016 = vadd.f32 0.0, %v2015
        %v2017 = vpop.f32.mrb[0].mxu0
        %2018 = vmatprep.mubr.f32.mxu0 0.0
        %2019 = vmatmul.mubr.f32.gmra.mrb[0].mxu0 %v1919
        %v2020 = vpop.f32.mrb[0].mxu0
        %v2021 = vadd.f32 0.0, %v2020
        %v2022 = vpop.f32.mrb[0].mxu0
        %2023 = vmatprep.mubr.f32.mxu0 0.0
        %2024 = vmatmul.mubr.f32.gmra.mrb[0].mxu0 %v1921
        %v2025 = vpop.f32.mrb[0].mxu0
        %v2026 = vadd.f32 0.0, %v2025
        %v2027 = vpop.f32.mrb[0].mxu0
        %2028 = vmatprep.mubr.f32.mxu0 0.0
        %2029 = vmatmul.mubr.f32.gmra.mrb[0].mxu0 %v1923
        %v2030 = vpop.f32.mrb[0].mxu0
        %v2031 = vadd.f32 0.0, %v2030
        %v2032 = vpop.f32.mrb[0].mxu0
        %2033 = vmatprep.mubr.f32.mxu0 0.0
        %2034 = vmatmul.mubr.f32.gmra.mrb[0].mxu0 %v1925
        %v2035 = vpop.f32.mrb[0].mxu0
        %v2036 = vadd.f32 0.0, %v2035
        %v2037 = vpop.f32.mrb[0].mxu0
        %2038 = vmatprep.mubr.f32.mxu0 0.0
        %2039 = vmatmul.mubr.f32.gmra.mrb[0].mxu0 %v1927
        %v2040 = vpop.f32.mrb[0].mxu0
        %v2041 = vadd.f32 0.0, %v2040
        %v2042 = vpop.f32.mrb[0].mxu0
        %2043 = vmatprep.mubr.f32.mxu0 0.0
        %2044 = vmatmul.mubr.f32.gmra.mrb[0].mxu0 %v1929
        %v2045 = vpop.f32.mrb[0].mxu0
        %v2046 = vadd.f32 0.0, %v2045
        %v2047 = vpop.f32.mrb[0].mxu0
        %2048 = vmatprep.mubr.f32.mxu0 0.0
        %2049 = vmatmul.mubr.f32.gmra.mrb[0].mxu0 %v1931
        %v2050 = vpop.f32.mrb[0].mxu0
        %v2051 = vadd.f32 0.0, %v2050
        %v2052 = vpop.f32.mrb[0].mxu0
        %2053 = vdwg.mxu0
        %2062 = vrot.lane.b32.xlu0 %v889, 120
        %v2063 = vpop.permute.xlu0 %2062
        %2064 = vrot.lane.b32.xlu0 %v894, 120
        %v2065 = vpop.permute.xlu0 %2064
        %2066 = vrot.lane.b32.xlu0 %v899, 120
        %v2067 = vpop.permute.xlu0 %2066
        %2068 = vrot.lane.b32.xlu0 %v904, 120
        %v2069 = vpop.permute.xlu0 %2068
        %2070 = vrot.lane.b32.xlu0 %v909, 120
        %v2071 = vpop.permute.xlu0 %2070
        %2072 = vrot.lane.b32.xlu0 %v914, 120
        %v2073 = vpop.permute.xlu0 %2072
        %2074 = vrot.lane.b32.xlu0 %v919, 120
        %v2075 = vpop.permute.xlu0 %2074
        %2076 = vrot.lane.b32.xlu0 %v924, 120
        %v2077 = vpop.permute.xlu0 %2076
        %v2078 = vsel %vm349, %v889, 0
        %v2080 = vsel %vm349, %v894, 0
        %v2082 = vsel %vm349, %v899, 0
        %v2084 = vsel %vm349, %v904, 0
        %v2086 = vsel %vm349, %v909, 0
        %v2088 = vsel %vm349, %v914, 0
        %v2090 = vsel %vm349, %v919, 0
        %v2092 = vsel %vm349, %v924, 0
        %v2094 = vsel %vm349, %v2063, 0
        %v2096 = vsel %vm349, %v2065, 0
        %v2098 = vsel %vm349, %v2067, 0
        %v2100 = vsel %vm349, %v2069, 0
        %v2102 = vsel %vm349, %v2071, 0
        %v2104 = vsel %vm349, %v2073, 0
        %v2106 = vsel %vm349, %v2075, 0
        %v2108 = vsel %vm349, %v2077, 0
        %2110 = vmatprep.subr.mxu0 0.0
        %2111 = vmatpush1.xpose.msra.mxu0 %v2094
        %2112 = vmatprep.subr.mxu0 0.0
        %2113 = vmatpush1.xpose.msra.mxu0 %v2096
        %2114 = vmatprep.subr.mxu0 0.0
        %2115 = vmatpush1.xpose.msra.mxu0 %v2098
        %2116 = vmatprep.subr.mxu0 0.0
        %2117 = vmatpush1.xpose.msra.mxu0 %v2100
        %2118 = vmatprep.subr.mxu0 0.0
        %2119 = vmatpush1.xpose.msra.mxu0 %v2102
        %2120 = vmatprep.subr.mxu0 0.0
        %2121 = vmatpush1.xpose.msra.mxu0 %v2104
        %2122 = vmatprep.subr.mxu0 0.0
        %2123 = vmatpush1.xpose.msra.mxu0 %v2106
        %2124 = vmatprep.subr.mxu0 0.0
        %2125 = vmatpush1.xpose.msra.mxu0 %v2108
        %2126 = vmatprep.subr.mxu0 0.0
        %2127 = vmatpush1.xpose.msra.mxu0 0.0
        %2128 = vmatprep.subr.mxu0 0.0
        %2129 = vmatpush1.xpose.msra.mxu0 0.0
        %2130 = vmatprep.subr.mxu0 0.0
        %2131 = vmatpush1.xpose.msra.mxu0 0.0
        %2132 = vmatprep.subr.mxu0 0.0
        %2133 = vmatpush1.xpose.msra.mxu0 0.0
        %2134 = vmatprep.subr.mxu0 0.0
        %2135 = vmatpush1.xpose.msra.mxu0 0.0
        %2136 = vmatprep.subr.mxu0 0.0
        %2137 = vmatpush1.xpose.msra.mxu0 0.0
        %2138 = vmatprep.subr.mxu0 0.0
        %2139 = vmatpush1.xpose.msra.mxu0 0.0
        %2140 = vmatprep.subr.mxu0 0.0
        %2141 = vmatpush1.xpose.msra.mxu0 0.0
        %2142 = vmatprep.subr.mxu0 0.0
        %2143 = vmatpush1.xpose.msra.mxu0 0.0
        %2144 = vmatprep.subr.mxu0 0.0
        %2145 = vmatpush1.xpose.msra.mxu0 0.0
        %2146 = vmatprep.subr.mxu0 0.0
        %2147 = vmatpush1.xpose.msra.mxu0 0.0
        %2148 = vmatprep.subr.mxu0 0.0
        %2149 = vmatpush1.xpose.msra.mxu0 0.0
        %2150 = vmatprep.subr.mxu0 0.0
        %2151 = vmatpush1.xpose.msra.mxu0 0.0
        %2152 = vmatprep.subr.mxu0 0.0
        %2153 = vmatpush1.xpose.msra.mxu0 0.0
        %2154 = vmatprep.subr.mxu0 0.0
        %2155 = vmatpush1.xpose.msra.mxu0 0.0
        %2156 = vmatprep.subr.mxu0 0.0
        %2157 = vmatpush1.xpose.msra.mxu0 0.0
        %2158 = vmatprep.subr.mxu0 0.0
        %2159 = vmatpush1.xpose.msra.mxu0 0.0
        %2160 = vmatprep.subr.mxu0 0.0
        %2161 = vmatpush1.xpose.msra.mxu0 0.0
        %2162 = vmatprep.subr.mxu0 0.0
        %2163 = vmatpush1.xpose.msra.mxu0 0.0
        %2164 = vmatprep.subr.mxu0 0.0
        %2165 = vmatpush1.xpose.msra.mxu0 0.0
        %2166 = vmatprep.subr.mxu0 0.0
        %2167 = vmatpush1.xpose.msra.mxu0 0.0
        %2168 = vmatprep.subr.mxu0 0.0
        %2169 = vmatpush1.xpose.msra.mxu0 0.0
        %2170 = vmatprep.subr.mxu0 0.0
        %2171 = vmatpush1.xpose.msra.mxu0 0.0
        %2172 = vmatprep.subr.mxu0 0.0
        %2173 = vmatpush1.xpose.msra.mxu0 0.0
        %2174 = vmatprep.mubr.f32.mxu0 0.0
        %2175 = vmatmul.mubr.f32.gmra.mrb[0].mxu0 %v2078
        %v2176 = vpop.f32.mrb[0].mxu0
        %v2177 = vadd.f32 0.0, %v2176
        %v2178 = vpop.f32.mrb[0].mxu0
        %2179 = vmatprep.mubr.f32.mxu0 0.0
        %2180 = vmatmul.mubr.f32.gmra.mrb[0].mxu0 %v2080
        %v2181 = vpop.f32.mrb[0].mxu0
        %v2182 = vadd.f32 0.0, %v2181
        %v2183 = vpop.f32.mrb[0].mxu0
        %2184 = vmatprep.mubr.f32.mxu0 0.0
        %2185 = vmatmul.mubr.f32.gmra.mrb[0].mxu0 %v2082
        %v2186 = vpop.f32.mrb[0].mxu0
        %v2187 = vadd.f32 0.0, %v2186
        %v2188 = vpop.f32.mrb[0].mxu0
        %2189 = vmatprep.mubr.f32.mxu0 0.0
        %2190 = vmatmul.mubr.f32.gmra.mrb[0].mxu0 %v2084
        %v2191 = vpop.f32.mrb[0].mxu0
        %v2192 = vadd.f32 0.0, %v2191
        %v2193 = vpop.f32.mrb[0].mxu0
        %2194 = vmatprep.mubr.f32.mxu0 0.0
        %2195 = vmatmul.mubr.f32.gmra.mrb[0].mxu0 %v2086
        %v2196 = vpop.f32.mrb[0].mxu0
        %v2197 = vadd.f32 0.0, %v2196
        %v2198 = vpop.f32.mrb[0].mxu0
        %2199 = vmatprep.mubr.f32.mxu0 0.0
        %2200 = vmatmul.mubr.f32.gmra.mrb[0].mxu0 %v2088
        %v2201 = vpop.f32.mrb[0].mxu0
        %v2202 = vadd.f32 0.0, %v2201
        %v2203 = vpop.f32.mrb[0].mxu0
        %2204 = vmatprep.mubr.f32.mxu0 0.0
        %2205 = vmatmul.mubr.f32.gmra.mrb[0].mxu0 %v2090
        %v2206 = vpop.f32.mrb[0].mxu0
        %v2207 = vadd.f32 0.0, %v2206
        %v2208 = vpop.f32.mrb[0].mxu0
        %2209 = vmatprep.mubr.f32.mxu0 0.0
        %2210 = vmatmul.mubr.f32.gmra.mrb[0].mxu0 %v2092
        %v2211 = vpop.f32.mrb[0].mxu0
        %v2212 = vadd.f32 0.0, %v2211
        %v2213 = vpop.f32.mrb[0].mxu0
        %2214 = vdwg.mxu0
        %v2215 = vmul.f32 %v1050, 0.17677669
        %v2216 = vmul.f32 %v1055, 0.17677669
        %v2217 = vmul.f32 %v1060, 0.17677669
        %v2218 = vmul.f32 %v1065, 0.17677669
        %v2219 = vmul.f32 %v1070, 0.17677669
        %v2220 = vmul.f32 %v1075, 0.17677669
        %v2221 = vmul.f32 %v1080, 0.17677669
        %v2222 = vmul.f32 %v1085, 0.17677669
        %v2223 = vmul.f32 %v1211, 0.17677669
        %v2224 = vmul.f32 %v1216, 0.17677669
        %v2225 = vmul.f32 %v1221, 0.17677669
        %v2226 = vmul.f32 %v1226, 0.17677669
        %v2227 = vmul.f32 %v1231, 0.17677669
        %v2228 = vmul.f32 %v1236, 0.17677669
        %v2229 = vmul.f32 %v1241, 0.17677669
        %v2230 = vmul.f32 %v1246, 0.17677669
        %v2231 = vmul.f32 %v1372, 0.17677669
        %v2232 = vmul.f32 %v1377, 0.17677669
        %v2233 = vmul.f32 %v1382, 0.17677669
        %v2234 = vmul.f32 %v1387, 0.17677669
        %v2235 = vmul.f32 %v1392, 0.17677669
        %v2236 = vmul.f32 %v1397, 0.17677669
        %v2237 = vmul.f32 %v1402, 0.17677669
        %v2238 = vmul.f32 %v1407, 0.17677669
        %v2239 = vmul.f32 %v1533, 0.17677669
        %v2240 = vmul.f32 %v1538, 0.17677669
        %v2241 = vmul.f32 %v1543, 0.17677669
        %v2242 = vmul.f32 %v1548, 0.17677669
        %v2243 = vmul.f32 %v1553, 0.17677669
        %v2244 = vmul.f32 %v1558, 0.17677669
        %v2245 = vmul.f32 %v1563, 0.17677669
        %v2246 = vmul.f32 %v1568, 0.17677669
        %v2247 = vmul.f32 %v1694, 0.17677669
        %v2248 = vmul.f32 %v1699, 0.17677669
        %v2249 = vmul.f32 %v1704, 0.17677669
        %v2250 = vmul.f32 %v1709, 0.17677669
        %v2251 = vmul.f32 %v1714, 0.17677669
        %v2252 = vmul.f32 %v1719, 0.17677669
        %v2253 = vmul.f32 %v1724, 0.17677669
        %v2254 = vmul.f32 %v1729, 0.17677669
        %v2255 = vmul.f32 %v1855, 0.17677669
        %v2256 = vmul.f32 %v1860, 0.17677669
        %v2257 = vmul.f32 %v1865, 0.17677669
        %v2258 = vmul.f32 %v1870, 0.17677669
        %v2259 = vmul.f32 %v1875, 0.17677669
        %v2260 = vmul.f32 %v1880, 0.17677669
        %v2261 = vmul.f32 %v1885, 0.17677669
        %v2262 = vmul.f32 %v1890, 0.17677669
        %v2263 = vmul.f32 %v2016, 0.17677669
        %v2264 = vmul.f32 %v2021, 0.17677669
        %v2265 = vmul.f32 %v2026, 0.17677669
        %v2266 = vmul.f32 %v2031, 0.17677669
        %v2267 = vmul.f32 %v2036, 0.17677669
        %v2268 = vmul.f32 %v2041, 0.17677669
        %v2269 = vmul.f32 %v2046, 0.17677669
        %v2270 = vmul.f32 %v2051, 0.17677669
        %v2271 = vmul.f32 %v2177, 0.17677669
        %v2272 = vmul.f32 %v2182, 0.17677669
        %v2273 = vmul.f32 %v2187, 0.17677669
        %v2274 = vmul.f32 %v2192, 0.17677669
        %v2275 = vmul.f32 %v2197, 0.17677669
        %v2276 = vmul.f32 %v2202, 0.17677669
        %v2277 = vmul.f32 %v2207, 0.17677669
        %v2278 = vmul.f32 %v2212, 0.17677669
        %v2279 = vadd.f32 %v2215, %v273
        %v2280 = vadd.f32 %v2216, %v274
        %v2281 = vadd.f32 %v2217, %v275
        %v2282 = vadd.f32 %v2218, %v276
        %v2283 = vadd.f32 %v2219, %v277
        %v2284 = vadd.f32 %v2220, %v278
        %v2285 = vadd.f32 %v2221, %v279
        %v2286 = vadd.f32 %v2222, %v280
        %v2287 = vadd.f32 %v2223, %v273
        %v2288 = vadd.f32 %v2224, %v274
        %v2289 = vadd.f32 %v2225, %v275
        %v2290 = vadd.f32 %v2226, %v276
        %v2291 = vadd.f32 %v2227, %v277
        %v2292 = vadd.f32 %v2228, %v278
        %v2293 = vadd.f32 %v2229, %v279
        %v2294 = vadd.f32 %v2230, %v280
        %v2295 = vadd.f32 %v2231, %v273
        %v2296 = vadd.f32 %v2232, %v274
        %v2297 = vadd.f32 %v2233, %v275
        %v2298 = vadd.f32 %v2234, %v276
        %v2299 = vadd.f32 %v2235, %v277
        %v2300 = vadd.f32 %v2236, %v278
        %v2301 = vadd.f32 %v2237, %v279
        %v2302 = vadd.f32 %v2238, %v280
        %v2303 = vadd.f32 %v2239, %v273
        %v2304 = vadd.f32 %v2240, %v274
        %v2305 = vadd.f32 %v2241, %v275
        %v2306 = vadd.f32 %v2242, %v276
        %v2307 = vadd.f32 %v2243, %v277
        %v2308 = vadd.f32 %v2244, %v278
        %v2309 = vadd.f32 %v2245, %v279
        %v2310 = vadd.f32 %v2246, %v280
        %v2311 = vadd.f32 %v2247, %v273
        %v2312 = vadd.f32 %v2248, %v274
        %v2313 = vadd.f32 %v2249, %v275
        %v2314 = vadd.f32 %v2250, %v276
        %v2315 = vadd.f32 %v2251, %v277
        %v2316 = vadd.f32 %v2252, %v278
        %v2317 = vadd.f32 %v2253, %v279
        %v2318 = vadd.f32 %v2254, %v280
        %v2319 = vadd.f32 %v2255, %v273
        %v2320 = vadd.f32 %v2256, %v274
        %v2321 = vadd.f32 %v2257, %v275
        %v2322 = vadd.f32 %v2258, %v276
        %v2323 = vadd.f32 %v2259, %v277
        %v2324 = vadd.f32 %v2260, %v278
        %v2325 = vadd.f32 %v2261, %v279
        %v2326 = vadd.f32 %v2262, %v280
        %v2327 = vadd.f32 %v2263, %v273
        %v2328 = vadd.f32 %v2264, %v274
        %v2329 = vadd.f32 %v2265, %v275
        %v2330 = vadd.f32 %v2266, %v276
        %v2331 = vadd.f32 %v2267, %v277
        %v2332 = vadd.f32 %v2268, %v278
        %v2333 = vadd.f32 %v2269, %v279
        %v2334 = vadd.f32 %v2270, %v280
        %v2335 = vadd.f32 %v2271, %v273
        %v2336 = vadd.f32 %v2272, %v274
        %v2337 = vadd.f32 %v2273, %v275
        %v2338 = vadd.f32 %v2274, %v276
        %v2339 = vadd.f32 %v2275, %v277
        %v2340 = vadd.f32 %v2276, %v278
        %v2341 = vadd.f32 %v2277, %v279
        %v2342 = vadd.f32 %v2278, %v280
        %vm2343 = vcmask 523264
        %v2344 = vsel %vm2343, %v2279, -inf
        %2345 = vmax.xlane.f32.xlu0 %v2344
        %v2346 = vpop.xlane.xlu0 %2345
        %v2347 = vsel %vm2343, %v2280, -inf
        %2348 = vmax.xlane.f32.xlu0 %v2347
        %v2349 = vpop.xlane.xlu0 %2348
        %v2350 = vsel %vm2343, %v2281, -inf
        %2351 = vmax.xlane.f32.xlu0 %v2350
        %v2352 = vpop.xlane.xlu0 %2351
        %v2353 = vsel %vm2343, %v2282, -inf
        %2354 = vmax.xlane.f32.xlu0 %v2353
        %v2355 = vpop.xlane.xlu0 %2354
        %v2356 = vsel %vm2343, %v2283, -inf
        %2357 = vmax.xlane.f32.xlu0 %v2356
        %v2358 = vpop.xlane.xlu0 %2357
        %v2359 = vsel %vm2343, %v2284, -inf
        %2360 = vmax.xlane.f32.xlu0 %v2359
        %v2361 = vpop.xlane.xlu0 %2360
        %v2362 = vsel %vm2343, %v2285, -inf
        %2363 = vmax.xlane.f32.xlu0 %v2362
        %v2364 = vpop.xlane.xlu0 %2363
        %v2365 = vsel %vm2343, %v2286, -inf
        %2366 = vmax.xlane.f32.xlu0 %v2365
        %v2367 = vpop.xlane.xlu0 %2366
        %v2368 = vsel %vm2343, %v2287, -inf
        %2369 = vmax.xlane.f32.xlu0 %v2368
        %v2370 = vpop.xlane.xlu0 %2369
        %v2371 = vsel %vm2343, %v2288, -inf
        %2372 = vmax.xlane.f32.xlu0 %v2371
        %v2373 = vpop.xlane.xlu0 %2372
        %v2374 = vsel %vm2343, %v2289, -inf
        %2375 = vmax.xlane.f32.xlu0 %v2374
        %v2376 = vpop.xlane.xlu0 %2375
        %v2377 = vsel %vm2343, %v2290, -inf
        %2378 = vmax.xlane.f32.xlu0 %v2377
        %v2379 = vpop.xlane.xlu0 %2378
        %v2380 = vsel %vm2343, %v2291, -inf
        %2381 = vmax.xlane.f32.xlu0 %v2380
        %v2382 = vpop.xlane.xlu0 %2381
        %v2383 = vsel %vm2343, %v2292, -inf
        %2384 = vmax.xlane.f32.xlu0 %v2383
        %v2385 = vpop.xlane.xlu0 %2384
        %v2386 = vsel %vm2343, %v2293, -inf
        %2387 = vmax.xlane.f32.xlu0 %v2386
        %v2388 = vpop.xlane.xlu0 %2387
        %v2389 = vsel %vm2343, %v2294, -inf
        %2390 = vmax.xlane.f32.xlu0 %v2389
        %v2391 = vpop.xlane.xlu0 %2390
        %v2392 = vsel %vm2343, %v2295, -inf
        %2393 = vmax.xlane.f32.xlu0 %v2392
        %v2394 = vpop.xlane.xlu0 %2393
        %v2395 = vsel %vm2343, %v2296, -inf
        %2396 = vmax.xlane.f32.xlu0 %v2395
        %v2397 = vpop.xlane.xlu0 %2396
        %v2398 = vsel %vm2343, %v2297, -inf
        %2399 = vmax.xlane.f32.xlu0 %v2398
        %v2400 = vpop.xlane.xlu0 %2399
        %v2401 = vsel %vm2343, %v2298, -inf
        %2402 = vmax.xlane.f32.xlu0 %v2401
        %v2403 = vpop.xlane.xlu0 %2402
        %v2404 = vsel %vm2343, %v2299, -inf
        %2405 = vmax.xlane.f32.xlu0 %v2404
        %v2406 = vpop.xlane.xlu0 %2405
        %v2407 = vsel %vm2343, %v2300, -inf
        %2408 = vmax.xlane.f32.xlu0 %v2407
        %v2409 = vpop.xlane.xlu0 %2408
        %v2410 = vsel %vm2343, %v2301, -inf
        %2411 = vmax.xlane.f32.xlu0 %v2410
        %v2412 = vpop.xlane.xlu0 %2411
        %v2413 = vsel %vm2343, %v2302, -inf
        %2414 = vmax.xlane.f32.xlu0 %v2413
        %v2415 = vpop.xlane.xlu0 %2414
        %v2416 = vsel %vm2343, %v2303, -inf
        %2417 = vmax.xlane.f32.xlu0 %v2416
        %v2418 = vpop.xlane.xlu0 %2417
        %v2419 = vsel %vm2343, %v2304, -inf
        %2420 = vmax.xlane.f32.xlu0 %v2419
        %v2421 = vpop.xlane.xlu0 %2420
        %v2422 = vsel %vm2343, %v2305, -inf
        %2423 = vmax.xlane.f32.xlu0 %v2422
        %v2424 = vpop.xlane.xlu0 %2423
        %v2425 = vsel %vm2343, %v2306, -inf
        %2426 = vmax.xlane.f32.xlu0 %v2425
        %v2427 = vpop.xlane.xlu0 %2426
        %v2428 = vsel %vm2343, %v2307, -inf
        %2429 = vmax.xlane.f32.xlu0 %v2428
        %v2430 = vpop.xlane.xlu0 %2429
        %v2431 = vsel %vm2343, %v2308, -inf
        %2432 = vmax.xlane.f32.xlu0 %v2431
        %v2433 = vpop.xlane.xlu0 %2432
        %v2434 = vsel %vm2343, %v2309, -inf
        %2435 = vmax.xlane.f32.xlu0 %v2434
        %v2436 = vpop.xlane.xlu0 %2435
        %v2437 = vsel %vm2343, %v2310, -inf
        %2438 = vmax.xlane.f32.xlu0 %v2437
        %v2439 = vpop.xlane.xlu0 %2438
        %v2440 = vsel %vm2343, %v2311, -inf
        %2441 = vmax.xlane.f32.xlu0 %v2440
        %v2442 = vpop.xlane.xlu0 %2441
        %v2443 = vsel %vm2343, %v2312, -inf
        %2444 = vmax.xlane.f32.xlu0 %v2443
        %v2445 = vpop.xlane.xlu0 %2444
        %v2446 = vsel %vm2343, %v2313, -inf
        %2447 = vmax.xlane.f32.xlu0 %v2446
        %v2448 = vpop.xlane.xlu0 %2447
        %v2449 = vsel %vm2343, %v2314, -inf
        %2450 = vmax.xlane.f32.xlu0 %v2449
        %v2451 = vpop.xlane.xlu0 %2450
        %v2452 = vsel %vm2343, %v2315, -inf
        %2453 = vmax.xlane.f32.xlu0 %v2452
        %v2454 = vpop.xlane.xlu0 %2453
        %v2455 = vsel %vm2343, %v2316, -inf
        %2456 = vmax.xlane.f32.xlu0 %v2455
        %v2457 = vpop.xlane.xlu0 %2456
        %v2458 = vsel %vm2343, %v2317, -inf
        %2459 = vmax.xlane.f32.xlu0 %v2458
        %v2460 = vpop.xlane.xlu0 %2459
        %v2461 = vsel %vm2343, %v2318, -inf
        %2462 = vmax.xlane.f32.xlu0 %v2461
        %v2463 = vpop.xlane.xlu0 %2462
        %v2464 = vsel %vm2343, %v2319, -inf
        %2465 = vmax.xlane.f32.xlu0 %v2464
        %v2466 = vpop.xlane.xlu0 %2465
        %v2467 = vsel %vm2343, %v2320, -inf
        %2468 = vmax.xlane.f32.xlu0 %v2467
        %v2469 = vpop.xlane.xlu0 %2468
        %v2470 = vsel %vm2343, %v2321, -inf
        %2471 = vmax.xlane.f32.xlu0 %v2470
        %v2472 = vpop.xlane.xlu0 %2471
        %v2473 = vsel %vm2343, %v2322, -inf
        %2474 = vmax.xlane.f32.xlu0 %v2473
        %v2475 = vpop.xlane.xlu0 %2474
        %v2476 = vsel %vm2343, %v2323, -inf
        %2477 = vmax.xlane.f32.xlu0 %v2476
        %v2478 = vpop.xlane.xlu0 %2477
        %v2479 = vsel %vm2343, %v2324, -inf
        %2480 = vmax.xlane.f32.xlu0 %v2479
        %v2481 = vpop.xlane.xlu0 %2480
        %v2482 = vsel %vm2343, %v2325, -inf
        %2483 = vmax.xlane.f32.xlu0 %v2482
        %v2484 = vpop.xlane.xlu0 %2483
        %v2485 = vsel %vm2343, %v2326, -inf
        %2486 = vmax.xlane.f32.xlu0 %v2485
        %v2487 = vpop.xlane.xlu0 %2486
        %v2488 = vsel %vm2343, %v2327, -inf
        %2489 = vmax.xlane.f32.xlu0 %v2488
        %v2490 = vpop.xlane.xlu0 %2489
        %v2491 = vsel %vm2343, %v2328, -inf
        %2492 = vmax.xlane.f32.xlu0 %v2491
        %v2493 = vpop.xlane.xlu0 %2492
        %v2494 = vsel %vm2343, %v2329, -inf
        %2495 = vmax.xlane.f32.xlu0 %v2494
        %v2496 = vpop.xlane.xlu0 %2495
        %v2497 = vsel %vm2343, %v2330, -inf
        %2498 = vmax.xlane.f32.xlu0 %v2497
        %v2499 = vpop.xlane.xlu0 %2498
        %v2500 = vsel %vm2343, %v2331, -inf
        %2501 = vmax.xlane.f32.xlu0 %v2500
        %v2502 = vpop.xlane.xlu0 %2501
        %v2503 = vsel %vm2343, %v2332, -inf
        %2504 = vmax.xlane.f32.xlu0 %v2503
        %v2505 = vpop.xlane.xlu0 %2504
        %v2506 = vsel %vm2343, %v2333, -inf
        %2507 = vmax.xlane.f32.xlu0 %v2506
        %v2508 = vpop.xlane.xlu0 %2507
        %v2509 = vsel %vm2343, %v2334, -inf
        %2510 = vmax.xlane.f32.xlu0 %v2509
        %v2511 = vpop.xlane.xlu0 %2510
        %v2512 = vsel %vm2343, %v2335, -inf
        %2513 = vmax.xlane.f32.xlu0 %v2512
        %v2514 = vpop.xlane.xlu0 %2513
        %v2515 = vsel %vm2343, %v2336, -inf
        %2516 = vmax.xlane.f32.xlu0 %v2515
        %v2517 = vpop.xlane.xlu0 %2516
        %v2518 = vsel %vm2343, %v2337, -inf
        %2519 = vmax.xlane.f32.xlu0 %v2518
        %v2520 = vpop.xlane.xlu0 %2519
        %v2521 = vsel %vm2343, %v2338, -inf
        %2522 = vmax.xlane.f32.xlu0 %v2521
        %v2523 = vpop.xlane.xlu0 %2522
        %v2524 = vsel %vm2343, %v2339, -inf
        %2525 = vmax.xlane.f32.xlu0 %v2524
        %v2526 = vpop.xlane.xlu0 %2525
        %v2527 = vsel %vm2343, %v2340, -inf
        %2528 = vmax.xlane.f32.xlu0 %v2527
        %v2529 = vpop.xlane.xlu0 %2528
        %v2530 = vsel %vm2343, %v2341, -inf
        %2531 = vmax.xlane.f32.xlu0 %v2530
        %v2532 = vpop.xlane.xlu0 %2531
        %v2533 = vsel %vm2343, %v2342, -inf
        %2534 = vmax.xlane.f32.xlu0 %v2533
        %v2535 = vpop.xlane.xlu0 %2534
        %v2536 = vsub.f32 %v2279, %v2346
        %v2537 = vsub.f32 %v2280, %v2349
        %v2538 = vsub.f32 %v2281, %v2352
        %v2539 = vsub.f32 %v2282, %v2355
        %v2540 = vsub.f32 %v2283, %v2358
        %v2541 = vsub.f32 %v2284, %v2361
        %v2542 = vsub.f32 %v2285, %v2364
        %v2543 = vsub.f32 %v2286, %v2367
        %v2544 = vsub.f32 %v2287, %v2370
        %v2545 = vsub.f32 %v2288, %v2373
        %v2546 = vsub.f32 %v2289, %v2376
        %v2547 = vsub.f32 %v2290, %v2379
        %v2548 = vsub.f32 %v2291, %v2382
        %v2549 = vsub.f32 %v2292, %v2385
        %v2550 = vsub.f32 %v2293, %v2388
        %v2551 = vsub.f32 %v2294, %v2391
        %v2552 = vsub.f32 %v2295, %v2394
        %v2553 = vsub.f32 %v2296, %v2397
        %v2554 = vsub.f32 %v2297, %v2400
        %v2555 = vsub.f32 %v2298, %v2403
        %v2556 = vsub.f32 %v2299, %v2406
        %v2557 = vsub.f32 %v2300, %v2409
        %v2558 = vsub.f32 %v2301, %v2412
        %v2559 = vsub.f32 %v2302, %v2415
        %v2560 = vsub.f32 %v2303, %v2418
        %v2561 = vsub.f32 %v2304, %v2421
        %v2562 = vsub.f32 %v2305, %v2424
        %v2563 = vsub.f32 %v2306, %v2427
        %v2564 = vsub.f32 %v2307, %v2430
        %v2565 = vsub.f32 %v2308, %v2433
        %v2566 = vsub.f32 %v2309, %v2436
        %v2567 = vsub.f32 %v2310, %v2439
        %v2568 = vsub.f32 %v2311, %v2442
        %v2569 = vsub.f32 %v2312, %v2445
        %v2570 = vsub.f32 %v2313, %v2448
        %v2571 = vsub.f32 %v2314, %v2451
        %v2572 = vsub.f32 %v2315, %v2454
        %v2573 = vsub.f32 %v2316, %v2457
        %v2574 = vsub.f32 %v2317, %v2460
        %v2575 = vsub.f32 %v2318, %v2463
        %v2576 = vsub.f32 %v2319, %v2466
        %v2577 = vsub.f32 %v2320, %v2469
        %v2578 = vsub.f32 %v2321, %v2472
        %v2579 = vsub.f32 %v2322, %v2475
        %v2580 = vsub.f32 %v2323, %v2478
        %v2581 = vsub.f32 %v2324, %v2481
        %v2582 = vsub.f32 %v2325, %v2484
        %v2583 = vsub.f32 %v2326, %v2487
        %v2584 = vsub.f32 %v2327, %v2490
        %v2585 = vsub.f32 %v2328, %v2493
        %v2586 = vsub.f32 %v2329, %v2496
        %v2587 = vsub.f32 %v2330, %v2499
        %v2588 = vsub.f32 %v2331, %v2502
        %v2589 = vsub.f32 %v2332, %v2505
        %v2590 = vsub.f32 %v2333, %v2508
        %v2591 = vsub.f32 %v2334, %v2511
        %v2592 = vsub.f32 %v2335, %v2514
        %v2593 = vsub.f32 %v2336, %v2517
        %v2594 = vsub.f32 %v2337, %v2520
        %v2595 = vsub.f32 %v2338, %v2523
        %v2596 = vsub.f32 %v2339, %v2526
        %v2597 = vsub.f32 %v2340, %v2529
        %v2598 = vsub.f32 %v2341, %v2532
        %v2599 = vsub.f32 %v2342, %v2535
        %v2600 = vmul.f32 %v2536, 1.442695
        %v2601 = vpow.pop %v2600
        %v2602 = vmul.f32 %v2537, 1.442695
        %v2603 = vpow.pop %v2602
        %v2604 = vmul.f32 %v2538, 1.442695
        %v2605 = vpow.pop %v2604
        %v2606 = vmul.f32 %v2539, 1.442695
        %v2607 = vpow.pop %v2606
        %v2608 = vmul.f32 %v2540, 1.442695
        %v2609 = vpow.pop %v2608
        %v2610 = vmul.f32 %v2541, 1.442695
        %v2611 = vpow.pop %v2610
        %v2612 = vmul.f32 %v2542, 1.442695
        %v2613 = vpow.pop %v2612
        %v2614 = vmul.f32 %v2543, 1.442695
        %v2615 = vpow.pop %v2614
        %v2616 = vmul.f32 %v2544, 1.442695
        %v2617 = vpow.pop %v2616
        %v2618 = vmul.f32 %v2545, 1.442695
        %v2619 = vpow.pop %v2618
        %v2620 = vmul.f32 %v2546, 1.442695
        %v2621 = vpow.pop %v2620
        %v2622 = vmul.f32 %v2547, 1.442695
        %v2623 = vpow.pop %v2622
        %v2624 = vmul.f32 %v2548, 1.442695
        %v2625 = vpow.pop %v2624
        %v2626 = vmul.f32 %v2549, 1.442695
        %v2627 = vpow.pop %v2626
        %v2628 = vmul.f32 %v2550, 1.442695
        %v2629 = vpow.pop %v2628
        %v2630 = vmul.f32 %v2551, 1.442695
        %v2631 = vpow.pop %v2630
        %v2632 = vmul.f32 %v2552, 1.442695
        %v2633 = vpow.pop %v2632
        %v2634 = vmul.f32 %v2553, 1.442695
        %v2635 = vpow.pop %v2634
        %v2636 = vmul.f32 %v2554, 1.442695
        %v2637 = vpow.pop %v2636
        %v2638 = vmul.f32 %v2555, 1.442695
        %v2639 = vpow.pop %v2638
        %v2640 = vmul.f32 %v2556, 1.442695
        %v2641 = vpow.pop %v2640
        %v2642 = vmul.f32 %v2557, 1.442695
        %v2643 = vpow.pop %v2642
        %v2644 = vmul.f32 %v2558, 1.442695
        %v2645 = vpow.pop %v2644
        %v2646 = vmul.f32 %v2559, 1.442695
        %v2647 = vpow.pop %v2646
        %v2648 = vmul.f32 %v2560, 1.442695
        %v2649 = vpow.pop %v2648
        %v2650 = vmul.f32 %v2561, 1.442695
        %v2651 = vpow.pop %v2650
        %v2652 = vmul.f32 %v2562, 1.442695
        %v2653 = vpow.pop %v2652
        %v2654 = vmul.f32 %v2563, 1.442695
        %v2655 = vpow.pop %v2654
        %v2656 = vmul.f32 %v2564, 1.442695
        %v2657 = vpow.pop %v2656
        %v2658 = vmul.f32 %v2565, 1.442695
        %v2659 = vpow.pop %v2658
        %v2660 = vmul.f32 %v2566, 1.442695
        %v2661 = vpow.pop %v2660
        %v2662 = vmul.f32 %v2567, 1.442695
        %v2663 = vpow.pop %v2662
        %v2664 = vmul.f32 %v2568, 1.442695
        %v2665 = vpow.pop %v2664
        %v2666 = vmul.f32 %v2569, 1.442695
        %v2667 = vpow.pop %v2666
        %v2668 = vmul.f32 %v2570, 1.442695
        %v2669 = vpow.pop %v2668
        %v2670 = vmul.f32 %v2571, 1.442695
        %v2671 = vpow.pop %v2670
        %v2672 = vmul.f32 %v2572, 1.442695
        %v2673 = vpow.pop %v2672
        %v2674 = vmul.f32 %v2573, 1.442695
        %v2675 = vpow.pop %v2674
        %v2676 = vmul.f32 %v2574, 1.442695
        %v2677 = vpow.pop %v2676
        %v2678 = vmul.f32 %v2575, 1.442695
        %v2679 = vpow.pop %v2678
        %v2680 = vmul.f32 %v2576, 1.442695
        %v2681 = vpow.pop %v2680
        %v2682 = vmul.f32 %v2577, 1.442695
        %v2683 = vpow.pop %v2682
        %v2684 = vmul.f32 %v2578, 1.442695
        %v2685 = vpow.pop %v2684
        %v2686 = vmul.f32 %v2579, 1.442695
        %v2687 = vpow.pop %v2686
        %v2688 = vmul.f32 %v2580, 1.442695
        %v2689 = vpow.pop %v2688
        %v2690 = vmul.f32 %v2581, 1.442695
        %v2691 = vpow.pop %v2690
        %v2692 = vmul.f32 %v2582, 1.442695
        %v2693 = vpow.pop %v2692
        %v2694 = vmul.f32 %v2583, 1.442695
        %v2695 = vpow.pop %v2694
        %v2696 = vmul.f32 %v2584, 1.442695
        %v2697 = vpow.pop %v2696
        %v2698 = vmul.f32 %v2585, 1.442695
        %v2699 = vpow.pop %v2698
        %v2700 = vmul.f32 %v2586, 1.442695
        %v2701 = vpow.pop %v2700
        %v2702 = vmul.f32 %v2587, 1.442695
        %v2703 = vpow.pop %v2702
        %v2704 = vmul.f32 %v2588, 1.442695
        %v2705 = vpow.pop %v2704
        %v2706 = vmul.f32 %v2589, 1.442695
        %v2707 = vpow.pop %v2706
        %v2708 = vmul.f32 %v2590, 1.442695
        %v2709 = vpow.pop %v2708
        %v2710 = vmul.f32 %v2591, 1.442695
        %v2711 = vpow.pop %v2710
        %v2712 = vmul.f32 %v2592, 1.442695
        %v2713 = vpow.pop %v2712
        %v2714 = vmul.f32 %v2593, 1.442695
        %v2715 = vpow.pop %v2714
        %v2716 = vmul.f32 %v2594, 1.442695
        %v2717 = vpow.pop %v2716
        %v2718 = vmul.f32 %v2595, 1.442695
        %v2719 = vpow.pop %v2718
        %v2720 = vmul.f32 %v2596, 1.442695
        %v2721 = vpow.pop %v2720
        %v2722 = vmul.f32 %v2597, 1.442695
        %v2723 = vpow.pop %v2722
        %v2724 = vmul.f32 %v2598, 1.442695
        %v2725 = vpow.pop %v2724
        %v2726 = vmul.f32 %v2599, 1.442695
        %v2727 = vpow.pop %v2726
        %v2728 = vsel %vm2343, %v2601, 0.0
        %2729 = vadd.xlane.f32.xlu0 %v2728
        %v2730 = vpop.xlane.xlu0 %2729
        %v2731 = vsel %vm2343, %v2603, 0.0
        %2732 = vadd.xlane.f32.xlu0 %v2731
        %v2733 = vpop.xlane.xlu0 %2732
        %v2734 = vsel %vm2343, %v2605, 0.0
        %2735 = vadd.xlane.f32.xlu0 %v2734
        %v2736 = vpop.xlane.xlu0 %2735
        %v2737 = vsel %vm2343, %v2607, 0.0
        %2738 = vadd.xlane.f32.xlu0 %v2737
        %v2739 = vpop.xlane.xlu0 %2738
        %v2740 = vsel %vm2343, %v2609, 0.0
        %2741 = vadd.xlane.f32.xlu0 %v2740
        %v2742 = vpop.xlane.xlu0 %2741
        %v2743 = vsel %vm2343, %v2611, 0.0
        %2744 = vadd.xlane.f32.xlu0 %v2743
        %v2745 = vpop.xlane.xlu0 %2744
        %v2746 = vsel %vm2343, %v2613, 0.0
        %2747 = vadd.xlane.f32.xlu0 %v2746
        %v2748 = vpop.xlane.xlu0 %2747
        %v2749 = vsel %vm2343, %v2615, 0.0
        %2750 = vadd.xlane.f32.xlu0 %v2749
        %v2751 = vpop.xlane.xlu0 %2750
        %v2752 = vsel %vm2343, %v2617, 0.0
        %2753 = vadd.xlane.f32.xlu0 %v2752
        %v2754 = vpop.xlane.xlu0 %2753
        %v2755 = vsel %vm2343, %v2619, 0.0
        %2756 = vadd.xlane.f32.xlu0 %v2755
        %v2757 = vpop.xlane.xlu0 %2756
        %v2758 = vsel %vm2343, %v2621, 0.0
        %2759 = vadd.xlane.f32.xlu0 %v2758
        %v2760 = vpop.xlane.xlu0 %2759
        %v2761 = vsel %vm2343, %v2623, 0.0
        %2762 = vadd.xlane.f32.xlu0 %v2761
        %v2763 = vpop.xlane.xlu0 %2762
        %v2764 = vsel %vm2343, %v2625, 0.0
        %2765 = vadd.xlane.f32.xlu0 %v2764
        %v2766 = vpop.xlane.xlu0 %2765
        %v2767 = vsel %vm2343, %v2627, 0.0
        %2768 = vadd.xlane.f32.xlu0 %v2767
        %v2769 = vpop.xlane.xlu0 %2768
        %v2770 = vsel %vm2343, %v2629, 0.0
        %2771 = vadd.xlane.f32.xlu0 %v2770
        %v2772 = vpop.xlane.xlu0 %2771
        %v2773 = vsel %vm2343, %v2631, 0.0
        %2774 = vadd.xlane.f32.xlu0 %v2773
        %v2775 = vpop.xlane.xlu0 %2774
        %v2776 = vsel %vm2343, %v2633, 0.0
        %2777 = vadd.xlane.f32.xlu0 %v2776
        %v2778 = vpop.xlane.xlu0 %2777
        %v2779 = vsel %vm2343, %v2635, 0.0
        %2780 = vadd.xlane.f32.xlu0 %v2779
        %v2781 = vpop.xlane.xlu0 %2780
        %v2782 = vsel %vm2343, %v2637, 0.0
        %2783 = vadd.xlane.f32.xlu0 %v2782
        %v2784 = vpop.xlane.xlu0 %2783
        %v2785 = vsel %vm2343, %v2639, 0.0
        %2786 = vadd.xlane.f32.xlu0 %v2785
        %v2787 = vpop.xlane.xlu0 %2786
        %v2788 = vsel %vm2343, %v2641, 0.0
        %2789 = vadd.xlane.f32.xlu0 %v2788
        %v2790 = vpop.xlane.xlu0 %2789
        %v2791 = vsel %vm2343, %v2643, 0.0
        %2792 = vadd.xlane.f32.xlu0 %v2791
        %v2793 = vpop.xlane.xlu0 %2792
        %v2794 = vsel %vm2343, %v2645, 0.0
        %2795 = vadd.xlane.f32.xlu0 %v2794
        %v2796 = vpop.xlane.xlu0 %2795
        %v2797 = vsel %vm2343, %v2647, 0.0
        %2798 = vadd.xlane.f32.xlu0 %v2797
        %v2799 = vpop.xlane.xlu0 %2798
        %v2800 = vsel %vm2343, %v2649, 0.0
        %2801 = vadd.xlane.f32.xlu0 %v2800
        %v2802 = vpop.xlane.xlu0 %2801
        %v2803 = vsel %vm2343, %v2651, 0.0
        %2804 = vadd.xlane.f32.xlu0 %v2803
        %v2805 = vpop.xlane.xlu0 %2804
        %v2806 = vsel %vm2343, %v2653, 0.0
        %2807 = vadd.xlane.f32.xlu0 %v2806
        %v2808 = vpop.xlane.xlu0 %2807
        %v2809 = vsel %vm2343, %v2655, 0.0
        %2810 = vadd.xlane.f32.xlu0 %v2809
        %v2811 = vpop.xlane.xlu0 %2810
        %v2812 = vsel %vm2343, %v2657, 0.0
        %2813 = vadd.xlane.f32.xlu0 %v2812
        %v2814 = vpop.xlane.xlu0 %2813
        %v2815 = vsel %vm2343, %v2659, 0.0
        %2816 = vadd.xlane.f32.xlu0 %v2815
        %v2817 = vpop.xlane.xlu0 %2816
        %v2818 = vsel %vm2343, %v2661, 0.0
        %2819 = vadd.xlane.f32.xlu0 %v2818
        %v2820 = vpop.xlane.xlu0 %2819
        %v2821 = vsel %vm2343, %v2663, 0.0
        %2822 = vadd.xlane.f32.xlu0 %v2821
        %v2823 = vpop.xlane.xlu0 %2822
        %v2824 = vsel %vm2343, %v2665, 0.0
        %2825 = vadd.xlane.f32.xlu0 %v2824
        %v2826 = vpop.xlane.xlu0 %2825
        %v2827 = vsel %vm2343, %v2667, 0.0
        %2828 = vadd.xlane.f32.xlu0 %v2827
        %v2829 = vpop.xlane.xlu0 %2828
        %v2830 = vsel %vm2343, %v2669, 0.0
        %2831 = vadd.xlane.f32.xlu0 %v2830
        %v2832 = vpop.xlane.xlu0 %2831
        %v2833 = vsel %vm2343, %v2671, 0.0
        %2834 = vadd.xlane.f32.xlu0 %v2833
        %v2835 = vpop.xlane.xlu0 %2834
        %v2836 = vsel %vm2343, %v2673, 0.0
        %2837 = vadd.xlane.f32.xlu0 %v2836
        %v2838 = vpop.xlane.xlu0 %2837
        %v2839 = vsel %vm2343, %v2675, 0.0
        %2840 = vadd.xlane.f32.xlu0 %v2839
        %v2841 = vpop.xlane.xlu0 %2840
        %v2842 = vsel %vm2343, %v2677, 0.0
        %2843 = vadd.xlane.f32.xlu0 %v2842
        %v2844 = vpop.xlane.xlu0 %2843
        %v2845 = vsel %vm2343, %v2679, 0.0
        %2846 = vadd.xlane.f32.xlu0 %v2845
        %v2847 = vpop.xlane.xlu0 %2846
        %v2848 = vsel %vm2343, %v2681, 0.0
        %2849 = vadd.xlane.f32.xlu0 %v2848
        %v2850 = vpop.xlane.xlu0 %2849
        %v2851 = vsel %vm2343, %v2683, 0.0
        %2852 = vadd.xlane.f32.xlu0 %v2851
        %v2853 = vpop.xlane.xlu0 %2852
        %v2854 = vsel %vm2343, %v2685, 0.0
        %2855 = vadd.xlane.f32.xlu0 %v2854
        %v2856 = vpop.xlane.xlu0 %2855
        %v2857 = vsel %vm2343, %v2687, 0.0
        %2858 = vadd.xlane.f32.xlu0 %v2857
        %v2859 = vpop.xlane.xlu0 %2858
        %v2860 = vsel %vm2343, %v2689, 0.0
        %2861 = vadd.xlane.f32.xlu0 %v2860
        %v2862 = vpop.xlane.xlu0 %2861
        %v2863 = vsel %vm2343, %v2691, 0.0
        %2864 = vadd.xlane.f32.xlu0 %v2863
        %v2865 = vpop.xlane.xlu0 %2864
        %v2866 = vsel %vm2343, %v2693, 0.0
        %2867 = vadd.xlane.f32.xlu0 %v2866
        %v2868 = vpop.xlane.xlu0 %2867
        %v2869 = vsel %vm2343, %v2695, 0.0
        %2870 = vadd.xlane.f32.xlu0 %v2869
        %v2871 = vpop.xlane.xlu0 %2870
        %v2872 = vsel %vm2343, %v2697, 0.0
        %2873 = vadd.xlane.f32.xlu0 %v2872
        %v2874 = vpop.xlane.xlu0 %2873
        %v2875 = vsel %vm2343, %v2699, 0.0
        %2876 = vadd.xlane.f32.xlu0 %v2875
        %v2877 = vpop.xlane.xlu0 %2876
        %v2878 = vsel %vm2343, %v2701, 0.0
        %2879 = vadd.xlane.f32.xlu0 %v2878
        %v2880 = vpop.xlane.xlu0 %2879
        %v2881 = vsel %vm2343, %v2703, 0.0
        %2882 = vadd.xlane.f32.xlu0 %v2881
        %v2883 = vpop.xlane.xlu0 %2882
        %v2884 = vsel %vm2343, %v2705, 0.0
        %2885 = vadd.xlane.f32.xlu0 %v2884
        %v2886 = vpop.xlane.xlu0 %2885
        %v2887 = vsel %vm2343, %v2707, 0.0
        %2888 = vadd.xlane.f32.xlu0 %v2887
        %v2889 = vpop.xlane.xlu0 %2888
        %v2890 = vsel %vm2343, %v2709, 0.0
        %2891 = vadd.xlane.f32.xlu0 %v2890
        %v2892 = vpop.xlane.xlu0 %2891
        %v2893 = vsel %vm2343, %v2711, 0.0
        %2894 = vadd.xlane.f32.xlu0 %v2893
        %v2895 = vpop.xlane.xlu0 %2894
        %v2896 = vsel %vm2343, %v2713, 0.0
        %2897 = vadd.xlane.f32.xlu0 %v2896
        %v2898 = vpop.xlane.xlu0 %2897
        %v2899 = vsel %vm2343, %v2715, 0.0
        %2900 = vadd.xlane.f32.xlu0 %v2899
        %v2901 = vpop.xlane.xlu0 %2900
        %v2902 = vsel %vm2343, %v2717, 0.0
        %2903 = vadd.xlane.f32.xlu0 %v2902
        %v2904 = vpop.xlane.xlu0 %2903
        %v2905 = vsel %vm2343, %v2719, 0.0
        %2906 = vadd.xlane.f32.xlu0 %v2905
        %v2907 = vpop.xlane.xlu0 %2906
        %v2908 = vsel %vm2343, %v2721, 0.0
        %2909 = vadd.xlane.f32.xlu0 %v2908
        %v2910 = vpop.xlane.xlu0 %2909
        %v2911 = vsel %vm2343, %v2723, 0.0
        %2912 = vadd.xlane.f32.xlu0 %v2911
        %v2913 = vpop.xlane.xlu0 %2912
        %v2914 = vsel %vm2343, %v2725, 0.0
        %2915 = vadd.xlane.f32.xlu0 %v2914
        %v2916 = vpop.xlane.xlu0 %2915
        %v2917 = vsel %vm2343, %v2727, 0.0
        %2918 = vadd.xlane.f32.xlu0 %v2917
        %v2919 = vpop.xlane.xlu0 %2918
        %v2920 = vrcp.pop %v2730
        %v2921 = vmul.f32 %v2601, %v2920
        %v2922 = vrcp.pop %v2733
        %v2923 = vmul.f32 %v2603, %v2922
        %v2924 = vrcp.pop %v2736
        %v2925 = vmul.f32 %v2605, %v2924
        %v2926 = vrcp.pop %v2739
        %v2927 = vmul.f32 %v2607, %v2926
        %v2928 = vrcp.pop %v2742
        %v2929 = vmul.f32 %v2609, %v2928
        %v2930 = vrcp.pop %v2745
        %v2931 = vmul.f32 %v2611, %v2930
        %v2932 = vrcp.pop %v2748
        %v2933 = vmul.f32 %v2613, %v2932
        %v2934 = vrcp.pop %v2751
        %v2935 = vmul.f32 %v2615, %v2934
        %v2936 = vrcp.pop %v2754
        %v2937 = vmul.f32 %v2617, %v2936
        %v2938 = vrcp.pop %v2757
        %v2939 = vmul.f32 %v2619, %v2938
        %v2940 = vrcp.pop %v2760
        %v2941 = vmul.f32 %v2621, %v2940
        %v2942 = vrcp.pop %v2763
        %v2943 = vmul.f32 %v2623, %v2942
        %v2944 = vrcp.pop %v2766
        %v2945 = vmul.f32 %v2625, %v2944
        %v2946 = vrcp.pop %v2769
        %v2947 = vmul.f32 %v2627, %v2946
        %v2948 = vrcp.pop %v2772
        %v2949 = vmul.f32 %v2629, %v2948
        %v2950 = vrcp.pop %v2775
        %v2951 = vmul.f32 %v2631, %v2950
        %v2952 = vrcp.pop %v2778
        %v2953 = vmul.f32 %v2633, %v2952
        %v2954 = vrcp.pop %v2781
        %v2955 = vmul.f32 %v2635, %v2954
        %v2956 = vrcp.pop %v2784
        %v2957 = vmul.f32 %v2637, %v2956
        %v2958 = vrcp.pop %v2787
        %v2959 = vmul.f32 %v2639, %v2958
        %v2960 = vrcp.pop %v2790
        %v2961 = vmul.f32 %v2641, %v2960
        %v2962 = vrcp.pop %v2793
        %v2963 = vmul.f32 %v2643, %v2962
        %v2964 = vrcp.pop %v2796
        %v2965 = vmul.f32 %v2645, %v2964
        %v2966 = vrcp.pop %v2799
        %v2967 = vmul.f32 %v2647, %v2966
        %v2968 = vrcp.pop %v2802
        %v2969 = vmul.f32 %v2649, %v2968
        %v2970 = vrcp.pop %v2805
        %v2971 = vmul.f32 %v2651, %v2970
        %v2972 = vrcp.pop %v2808
        %v2973 = vmul.f32 %v2653, %v2972
        %v2974 = vrcp.pop %v2811
        %v2975 = vmul.f32 %v2655, %v2974
        %v2976 = vrcp.pop %v2814
        %v2977 = vmul.f32 %v2657, %v2976
        %v2978 = vrcp.pop %v2817
        %v2979 = vmul.f32 %v2659, %v2978
        %v2980 = vrcp.pop %v2820
        %v2981 = vmul.f32 %v2661, %v2980
        %v2982 = vrcp.pop %v2823
        %v2983 = vmul.f32 %v2663, %v2982
        %v2984 = vrcp.pop %v2826
        %v2985 = vmul.f32 %v2665, %v2984
        %v2986 = vrcp.pop %v2829
        %v2987 = vmul.f32 %v2667, %v2986
        %v2988 = vrcp.pop %v2832
        %v2989 = vmul.f32 %v2669, %v2988
        %v2990 = vrcp.pop %v2835
        %v2991 = vmul.f32 %v2671, %v2990
        %v2992 = vrcp.pop %v2838
        %v2993 = vmul.f32 %v2673, %v2992
        %v2994 = vrcp.pop %v2841
        %v2995 = vmul.f32 %v2675, %v2994
        %v2996 = vrcp.pop %v2844
        %v2997 = vmul.f32 %v2677, %v2996
        %v2998 = vrcp.pop %v2847
        %v2999 = vmul.f32 %v2679, %v2998
        %v3000 = vrcp.pop %v2850
        %v3001 = vmul.f32 %v2681, %v3000
        %v3002 = vrcp.pop %v2853
        %v3003 = vmul.f32 %v2683, %v3002
        %v3004 = vrcp.pop %v2856
        %v3005 = vmul.f32 %v2685, %v3004
        %v3006 = vrcp.pop %v2859
        %v3007 = vmul.f32 %v2687, %v3006
        %v3008 = vrcp.pop %v2862
        %v3009 = vmul.f32 %v2689, %v3008
        %v3010 = vrcp.pop %v2865
        %v3011 = vmul.f32 %v2691, %v3010
        %v3012 = vrcp.pop %v2868
        %v3013 = vmul.f32 %v2693, %v3012
        %v3014 = vrcp.pop %v2871
        %v3015 = vmul.f32 %v2695, %v3014
        %v3016 = vrcp.pop %v2874
        %v3017 = vmul.f32 %v2697, %v3016
        %v3018 = vrcp.pop %v2877
        %v3019 = vmul.f32 %v2699, %v3018
        %v3020 = vrcp.pop %v2880
        %v3021 = vmul.f32 %v2701, %v3020
        %v3022 = vrcp.pop %v2883
        %v3023 = vmul.f32 %v2703, %v3022
        %v3024 = vrcp.pop %v2886
        %v3025 = vmul.f32 %v2705, %v3024
        %v3026 = vrcp.pop %v2889
        %v3027 = vmul.f32 %v2707, %v3026
        %v3028 = vrcp.pop %v2892
        %v3029 = vmul.f32 %v2709, %v3028
        %v3030 = vrcp.pop %v2895
        %v3031 = vmul.f32 %v2711, %v3030
        %v3032 = vrcp.pop %v2898
        %v3033 = vmul.f32 %v2713, %v3032
        %v3034 = vrcp.pop %v2901
        %v3035 = vmul.f32 %v2715, %v3034
        %v3036 = vrcp.pop %v2904
        %v3037 = vmul.f32 %v2717, %v3036
        %v3038 = vrcp.pop %v2907
        %v3039 = vmul.f32 %v2719, %v3038
        %v3040 = vrcp.pop %v2910
        %v3041 = vmul.f32 %v2721, %v3040
        %v3042 = vrcp.pop %v2913
        %v3043 = vmul.f32 %v2723, %v3042
        %v3044 = vrcp.pop %v2916
        %v3045 = vmul.f32 %v2725, %v3044
        %v3046 = vrcp.pop %v2919
        %v3047 = vmul.f32 %v2727, %v3046
        %3048 = vrot.lane.b32.xlu0 %v609, 112
        %v3049 = vpop.permute.xlu0 %3048
        %3050 = vrot.lane.b32.xlu0 %v614, 112
        %v3051 = vpop.permute.xlu0 %3050
        %3052 = vrot.lane.b32.xlu0 %v619, 112
        %v3053 = vpop.permute.xlu0 %3052
        %3054 = vrot.lane.b32.xlu0 %v624, 112
        %v3055 = vpop.permute.xlu0 %3054
        %3056 = vrot.lane.b32.xlu0 %v629, 112
        %v3057 = vpop.permute.xlu0 %3056
        %3058 = vrot.lane.b32.xlu0 %v634, 112
        %v3059 = vpop.permute.xlu0 %3058
        %3060 = vrot.lane.b32.xlu0 %v639, 112
        %v3061 = vpop.permute.xlu0 %3060
        %3062 = vrot.lane.b32.xlu0 %v644, 112
        %v3063 = vpop.permute.xlu0 %3062
        %v3073 = vsel %vm2343, %v2921, 0
        %v3076 = vsel %vm2343, %v2923, 0
        %v3079 = vsel %vm2343, %v2925, 0
        %v3082 = vsel %vm2343, %v2927, 0
        %v3085 = vsel %vm2343, %v2929, 0
        %v3088 = vsel %vm2343, %v2931, 0
        %v3091 = vsel %vm2343, %v2933, 0
        %v3094 = vsel %vm2343, %v2935, 0
        %3096 = vmatprep.subr.mxu0 0.0
        %3097 = vmatpush1.msra.mxu0 %v3049
        %3098 = vmatprep.subr.mxu0 0.0
        %3099 = vmatpush1.msra.mxu0 %v3051
        %3100 = vmatprep.subr.mxu0 0.0
        %3101 = vmatpush1.msra.mxu0 %v3053
        %3102 = vmatprep.subr.mxu0 0.0
        %3103 = vmatpush1.msra.mxu0 %v3055
        %3104 = vmatprep.subr.mxu0 0.0
        %3105 = vmatpush1.msra.mxu0 %v3057
        %3106 = vmatprep.subr.mxu0 0.0
        %3107 = vmatpush1.msra.mxu0 %v3059
        %3108 = vmatprep.subr.mxu0 0.0
        %3109 = vmatpush1.msra.mxu0 %v3061
        %3110 = vmatprep.subr.mxu0 0.0
        %3111 = vmatpush1.msra.mxu0 %v3063
        %3112 = vmatprep.subr.mxu0 0.0
        %3113 = vmatpush1.msra.mxu0 0.0
        %3114 = vmatprep.subr.mxu0 0.0
        %3115 = vmatpush1.msra.mxu0 0.0
        %3116 = vmatprep.subr.mxu0 0.0
        %3117 = vmatpush1.msra.mxu0 0.0
        %3118 = vmatprep.subr.mxu0 0.0
        %3119 = vmatpush1.msra.mxu0 0.0
        %3120 = vmatprep.subr.mxu0 0.0
        %3121 = vmatpush1.msra.mxu0 0.0
        %3122 = vmatprep.subr.mxu0 0.0
        %3123 = vmatpush1.msra.mxu0 0.0
        %3124 = vmatprep.subr.mxu0 0.0
        %3125 = vmatpush1.msra.mxu0 0.0
        %3126 = vmatprep.subr.mxu0 0.0
        %3127 = vmatpush1.msra.mxu0 0.0
        %3128 = vmatprep.subr.mxu0 0.0
        %3129 = vmatpush1.msra.mxu0 0.0
        %3130 = vmatprep.subr.mxu0 0.0
        %3131 = vmatpush1.msra.mxu0 0.0
        %3132 = vmatprep.subr.mxu0 0.0
        %3133 = vmatpush1.msra.mxu0 0.0
        %3134 = vmatprep.subr.mxu0 0.0
        %3135 = vmatpush1.msra.mxu0 0.0
        %3136 = vmatprep.subr.mxu0 0.0
        %3137 = vmatpush1.msra.mxu0 0.0
        %3138 = vmatprep.subr.mxu0 0.0
        %3139 = vmatpush1.msra.mxu0 0.0
        %3140 = vmatprep.subr.mxu0 0.0
        %3141 = vmatpush1.msra.mxu0 0.0
        %3142 = vmatprep.subr.mxu0 0.0
        %3143 = vmatpush1.msra.mxu0 0.0
        %3144 = vmatprep.subr.mxu0 0.0
        %3145 = vmatpush1.msra.mxu0 0.0
        %3146 = vmatprep.subr.mxu0 0.0
        %3147 = vmatpush1.msra.mxu0 0.0
        %3148 = vmatprep.subr.mxu0 0.0
        %3149 = vmatpush1.msra.mxu0 0.0
        %3150 = vmatprep.subr.mxu0 0.0
        %3151 = vmatpush1.msra.mxu0 0.0
        %3152 = vmatprep.subr.mxu0 0.0
        %3153 = vmatpush1.msra.mxu0 0.0
        %3154 = vmatprep.subr.mxu0 0.0
        %3155 = vmatpush1.msra.mxu0 0.0
        %3156 = vmatprep.subr.mxu0 0.0
        %3157 = vmatpush1.msra.mxu0 0.0
        %3158 = vmatprep.subr.mxu0 0.0
        %3159 = vmatpush1.msra.mxu0 0.0
        %3160 = vmatprep.mubr.f32.mxu0 0.0
        %3161 = vmatmul.mubr.f32.gmra.mrb[0].mxu0 %v3073
        %v3162 = vpop.f32.mrb[0].mxu0
        %v3163 = vadd.f32 0.0, %v3162
        %v3164 = vpop.f32.mrb[0].mxu0
        %3165 = vmatprep.mubr.f32.mxu0 0.0
        %3166 = vmatmul.mubr.f32.gmra.mrb[0].mxu0 %v3076
        %v3167 = vpop.f32.mrb[0].mxu0
        %v3168 = vadd.f32 0.0, %v3167
        %v3169 = vpop.f32.mrb[0].mxu0
        %3170 = vmatprep.mubr.f32.mxu0 0.0
        %3171 = vmatmul.mubr.f32.gmra.mrb[0].mxu0 %v3079
        %v3172 = vpop.f32.mrb[0].mxu0
        %v3173 = vadd.f32 0.0, %v3172
        %v3174 = vpop.f32.mrb[0].mxu0
        %3175 = vmatprep.mubr.f32.mxu0 0.0
        %3176 = vmatmul.mubr.f32.gmra.mrb[0].mxu0 %v3082
        %v3177 = vpop.f32.mrb[0].mxu0
        %v3178 = vadd.f32 0.0, %v3177
        %v3179 = vpop.f32.mrb[0].mxu0
        %3180 = vmatprep.mubr.f32.mxu0 0.0
        %3181 = vmatmul.mubr.f32.gmra.mrb[0].mxu0 %v3085
        %v3182 = vpop.f32.mrb[0].mxu0
        %v3183 = vadd.f32 0.0, %v3182
        %v3184 = vpop.f32.mrb[0].mxu0
        %3185 = vmatprep.mubr.f32.mxu0 0.0
        %3186 = vmatmul.mubr.f32.gmra.mrb[0].mxu0 %v3088
        %v3187 = vpop.f32.mrb[0].mxu0
        %v3188 = vadd.f32 0.0, %v3187
        %v3189 = vpop.f32.mrb[0].mxu0
        %3190 = vmatprep.mubr.f32.mxu0 0.0
        %3191 = vmatmul.mubr.f32.gmra.mrb[0].mxu0 %v3091
        %v3192 = vpop.f32.mrb[0].mxu0
        %v3193 = vadd.f32 0.0, %v3192
        %v3194 = vpop.f32.mrb[0].mxu0
        %3195 = vmatprep.mubr.f32.mxu0 0.0
        %3196 = vmatmul.mubr.f32.gmra.mrb[0].mxu0 %v3094
        %v3197 = vpop.f32.mrb[0].mxu0
        %v3198 = vadd.f32 0.0, %v3197
        %v3199 = vpop.f32.mrb[0].mxu0
        %3200 = vdwg.mxu0
        %3201 = vrot.lane.b32.xlu0 %v649, 112
        %v3202 = vpop.permute.xlu0 %3201
        %3203 = vrot.lane.b32.xlu0 %v654, 112
        %v3204 = vpop.permute.xlu0 %3203
        %3205 = vrot.lane.b32.xlu0 %v659, 112
        %v3206 = vpop.permute.xlu0 %3205
        %3207 = vrot.lane.b32.xlu0 %v664, 112
        %v3208 = vpop.permute.xlu0 %3207
        %3209 = vrot.lane.b32.xlu0 %v669, 112
        %v3210 = vpop.permute.xlu0 %3209
        %3211 = vrot.lane.b32.xlu0 %v674, 112
        %v3212 = vpop.permute.xlu0 %3211
        %3213 = vrot.lane.b32.xlu0 %v679, 112
        %v3214 = vpop.permute.xlu0 %3213
        %3215 = vrot.lane.b32.xlu0 %v684, 112
        %v3216 = vpop.permute.xlu0 %3215
        %v3226 = vsel %vm2343, %v2937, 0
        %v3229 = vsel %vm2343, %v2939, 0
        %v3232 = vsel %vm2343, %v2941, 0
        %v3235 = vsel %vm2343, %v2943, 0
        %v3238 = vsel %vm2343, %v2945, 0
        %v3241 = vsel %vm2343, %v2947, 0
        %v3244 = vsel %vm2343, %v2949, 0
        %v3247 = vsel %vm2343, %v2951, 0
        %3249 = vmatprep.subr.mxu0 0.0
        %3250 = vmatpush1.msra.mxu0 %v3202
        %3251 = vmatprep.subr.mxu0 0.0
        %3252 = vmatpush1.msra.mxu0 %v3204
        %3253 = vmatprep.subr.mxu0 0.0
        %3254 = vmatpush1.msra.mxu0 %v3206
        %3255 = vmatprep.subr.mxu0 0.0
        %3256 = vmatpush1.msra.mxu0 %v3208
        %3257 = vmatprep.subr.mxu0 0.0
        %3258 = vmatpush1.msra.mxu0 %v3210
        %3259 = vmatprep.subr.mxu0 0.0
        %3260 = vmatpush1.msra.mxu0 %v3212
        %3261 = vmatprep.subr.mxu0 0.0
        %3262 = vmatpush1.msra.mxu0 %v3214
        %3263 = vmatprep.subr.mxu0 0.0
        %3264 = vmatpush1.msra.mxu0 %v3216
        %3265 = vmatprep.subr.mxu0 0.0
        %3266 = vmatpush1.msra.mxu0 0.0
        %3267 = vmatprep.subr.mxu0 0.0
        %3268 = vmatpush1.msra.mxu0 0.0
        %3269 = vmatprep.subr.mxu0 0.0
        %3270 = vmatpush1.msra.mxu0 0.0
        %3271 = vmatprep.subr.mxu0 0.0
        %3272 = vmatpush1.msra.mxu0 0.0
        %3273 = vmatprep.subr.mxu0 0.0
        %3274 = vmatpush1.msra.mxu0 0.0
        %3275 = vmatprep.subr.mxu0 0.0
        %3276 = vmatpush1.msra.mxu0 0.0
        %3277 = vmatprep.subr.mxu0 0.0
        %3278 = vmatpush1.msra.mxu0 0.0
        %3279 = vmatprep.subr.mxu0 0.0
        %3280 = vmatpush1.msra.mxu0 0.0
        %3281 = vmatprep.subr.mxu0 0.0
        %3282 = vmatpush1.msra.mxu0 0.0
        %3283 = vmatprep.subr.mxu0 0.0
        %3284 = vmatpush1.msra.mxu0 0.0
        %3285 = vmatprep.subr.mxu0 0.0
        %3286 = vmatpush1.msra.mxu0 0.0
        %3287 = vmatprep.subr.mxu0 0.0
        %3288 = vmatpush1.msra.mxu0 0.0
        %3289 = vmatprep.subr.mxu0 0.0
        %3290 = vmatpush1.msra.mxu0 0.0
        %3291 = vmatprep.subr.mxu0 0.0
        %3292 = vmatpush1.msra.mxu0 0.0
        %3293 = vmatprep.subr.mxu0 0.0
        %3294 = vmatpush1.msra.mxu0 0.0
        %3295 = vmatprep.subr.mxu0 0.0
        %3296 = vmatpush1.msra.mxu0 0.0
        %3297 = vmatprep.subr.mxu0 0.0
        %3298 = vmatpush1.msra.mxu0 0.0
        %3299 = vmatprep.subr.mxu0 0.0
        %3300 = vmatpush1.msra.mxu0 0.0
        %3301 = vmatprep.subr.mxu0 0.0
        %3302 = vmatpush1.msra.mxu0 0.0
        %3303 = vmatprep.subr.mxu0 0.0
        %3304 = vmatpush1.msra.mxu0 0.0
        %3305 = vmatprep.subr.mxu0 0.0
        %3306 = vmatpush1.msra.mxu0 0.0
        %3307 = vmatprep.subr.mxu0 0.0
        %3308 = vmatpush1.msra.mxu0 0.0
        %3309 = vmatprep.subr.mxu0 0.0
        %3310 = vmatpush1.msra.mxu0 0.0
        %3311 = vmatprep.subr.mxu0 0.0
        %3312 = vmatpush1.msra.mxu0 0.0
        %3313 = vmatprep.mubr.f32.mxu0 0.0
        %3314 = vmatmul.mubr.f32.gmra.mrb[0].mxu0 %v3226
        %v3315 = vpop.f32.mrb[0].mxu0
        %v3316 = vadd.f32 0.0, %v3315
        %v3317 = vpop.f32.mrb[0].mxu0
        %3318 = vmatprep.mubr.f32.mxu0 0.0
        %3319 = vmatmul.mubr.f32.gmra.mrb[0].mxu0 %v3229
        %v3320 = vpop.f32.mrb[0].mxu0
        %v3321 = vadd.f32 0.0, %v3320
        %v3322 = vpop.f32.mrb[0].mxu0
        %3323 = vmatprep.mubr.f32.mxu0 0.0
        %3324 = vmatmul.mubr.f32.gmra.mrb[0].mxu0 %v3232
        %v3325 = vpop.f32.mrb[0].mxu0
        %v3326 = vadd.f32 0.0, %v3325
        %v3327 = vpop.f32.mrb[0].mxu0
        %3328 = vmatprep.mubr.f32.mxu0 0.0
        %3329 = vmatmul.mubr.f32.gmra.mrb[0].mxu0 %v3235
        %v3330 = vpop.f32.mrb[0].mxu0
        %v3331 = vadd.f32 0.0, %v3330
        %v3332 = vpop.f32.mrb[0].mxu0
        %3333 = vmatprep.mubr.f32.mxu0 0.0
        %3334 = vmatmul.mubr.f32.gmra.mrb[0].mxu0 %v3238
        %v3335 = vpop.f32.mrb[0].mxu0
        %v3336 = vadd.f32 0.0, %v3335
        %v3337 = vpop.f32.mrb[0].mxu0
        %3338 = vmatprep.mubr.f32.mxu0 0.0
        %3339 = vmatmul.mubr.f32.gmra.mrb[0].mxu0 %v3241
        %v3340 = vpop.f32.mrb[0].mxu0
        %v3341 = vadd.f32 0.0, %v3340
        %v3342 = vpop.f32.mrb[0].mxu0
        %3343 = vmatprep.mubr.f32.mxu0 0.0
        %3344 = vmatmul.mubr.f32.gmra.mrb[0].mxu0 %v3244
        %v3345 = vpop.f32.mrb[0].mxu0
        %v3346 = vadd.f32 0.0, %v3345
        %v3347 = vpop.f32.mrb[0].mxu0
        %3348 = vmatprep.mubr.f32.mxu0 0.0
        %3349 = vmatmul.mubr.f32.gmra.mrb[0].mxu0 %v3247
        %v3350 = vpop.f32.mrb[0].mxu0
        %v3351 = vadd.f32 0.0, %v3350
        %v3352 = vpop.f32.mrb[0].mxu0
        %3353 = vdwg.mxu0
        %3354 = vrot.lane.b32.xlu0 %v689, 112
        %v3355 = vpop.permute.xlu0 %3354
        %3356 = vrot.lane.b32.xlu0 %v694, 112
        %v3357 = vpop.permute.xlu0 %3356
        %3358 = vrot.lane.b32.xlu0 %v699, 112
        %v3359 = vpop.permute.xlu0 %3358
        %3360 = vrot.lane.b32.xlu0 %v704, 112
        %v3361 = vpop.permute.xlu0 %3360
        %3362 = vrot.lane.b32.xlu0 %v709, 112
        %v3363 = vpop.permute.xlu0 %3362
        %3364 = vrot.lane.b32.xlu0 %v714, 112
        %v3365 = vpop.permute.xlu0 %3364
        %3366 = vrot.lane.b32.xlu0 %v719, 112
        %v3367 = vpop.permute.xlu0 %3366
        %3368 = vrot.lane.b32.xlu0 %v724, 112
        %v3369 = vpop.permute.xlu0 %3368
        %v3379 = vsel %vm2343, %v2953, 0
        %v3382 = vsel %vm2343, %v2955, 0
        %v3385 = vsel %vm2343, %v2957, 0
        %v3388 = vsel %vm2343, %v2959, 0
        %v3391 = vsel %vm2343, %v2961, 0
        %v3394 = vsel %vm2343, %v2963, 0
        %v3397 = vsel %vm2343, %v2965, 0
        %v3400 = vsel %vm2343, %v2967, 0
        %3402 = vmatprep.subr.mxu0 0.0
        %3403 = vmatpush1.msra.mxu0 %v3355
        %3404 = vmatprep.subr.mxu0 0.0
        %3405 = vmatpush1.msra.mxu0 %v3357
        %3406 = vmatprep.subr.mxu0 0.0
        %3407 = vmatpush1.msra.mxu0 %v3359
        %3408 = vmatprep.subr.mxu0 0.0
        %3409 = vmatpush1.msra.mxu0 %v3361
        %3410 = vmatprep.subr.mxu0 0.0
        %3411 = vmatpush1.msra.mxu0 %v3363
        %3412 = vmatprep.subr.mxu0 0.0
        %3413 = vmatpush1.msra.mxu0 %v3365
        %3414 = vmatprep.subr.mxu0 0.0
        %3415 = vmatpush1.msra.mxu0 %v3367
        %3416 = vmatprep.subr.mxu0 0.0
        %3417 = vmatpush1.msra.mxu0 %v3369
        %3418 = vmatprep.subr.mxu0 0.0
        %3419 = vmatpush1.msra.mxu0 0.0
        %3420 = vmatprep.subr.mxu0 0.0
        %3421 = vmatpush1.msra.mxu0 0.0
        %3422 = vmatprep.subr.mxu0 0.0
        %3423 = vmatpush1.msra.mxu0 0.0
        %3424 = vmatprep.subr.mxu0 0.0
        %3425 = vmatpush1.msra.mxu0 0.0
        %3426 = vmatprep.subr.mxu0 0.0
        %3427 = vmatpush1.msra.mxu0 0.0
        %3428 = vmatprep.subr.mxu0 0.0
        %3429 = vmatpush1.msra.mxu0 0.0
        %3430 = vmatprep.subr.mxu0 0.0
        %3431 = vmatpush1.msra.mxu0 0.0
        %3432 = vmatprep.subr.mxu0 0.0
        %3433 = vmatpush1.msra.mxu0 0.0
        %3434 = vmatprep.subr.mxu0 0.0
        %3435 = vmatpush1.msra.mxu0 0.0
        %3436 = vmatprep.subr.mxu0 0.0
        %3437 = vmatpush1.msra.mxu0 0.0
        %3438 = vmatprep.subr.mxu0 0.0
        %3439 = vmatpush1.msra.mxu0 0.0
        %3440 = vmatprep.subr.mxu0 0.0
        %3441 = vmatpush1.msra.mxu0 0.0
        %3442 = vmatprep.subr.mxu0 0.0
        %3443 = vmatpush1.msra.mxu0 0.0
        %3444 = vmatprep.subr.mxu0 0.0
        %3445 = vmatpush1.msra.mxu0 0.0
        %3446 = vmatprep.subr.mxu0 0.0
        %3447 = vmatpush1.msra.mxu0 0.0
        %3448 = vmatprep.subr.mxu0 0.0
        %3449 = vmatpush1.msra.mxu0 0.0
        %3450 = vmatprep.subr.mxu0 0.0
        %3451 = vmatpush1.msra.mxu0 0.0
        %3452 = vmatprep.subr.mxu0 0.0
        %3453 = vmatpush1.msra.mxu0 0.0
        %3454 = vmatprep.subr.mxu0 0.0
        %3455 = vmatpush1.msra.mxu0 0.0
        %3456 = vmatprep.subr.mxu0 0.0
        %3457 = vmatpush1.msra.mxu0 0.0
        %3458 = vmatprep.subr.mxu0 0.0
        %3459 = vmatpush1.msra.mxu0 0.0
        %3460 = vmatprep.subr.mxu0 0.0
        %3461 = vmatpush1.msra.mxu0 0.0
        %3462 = vmatprep.subr.mxu0 0.0
        %3463 = vmatpush1.msra.mxu0 0.0
        %3464 = vmatprep.subr.mxu0 0.0
        %3465 = vmatpush1.msra.mxu0 0.0
        %3466 = vmatprep.mubr.f32.mxu0 0.0
        %3467 = vmatmul.mubr.f32.gmra.mrb[0].mxu0 %v3379
        %v3468 = vpop.f32.mrb[0].mxu0
        %v3469 = vadd.f32 0.0, %v3468
        %v3470 = vpop.f32.mrb[0].mxu0
        %3471 = vmatprep.mubr.f32.mxu0 0.0
        %3472 = vmatmul.mubr.f32.gmra.mrb[0].mxu0 %v3382
        %v3473 = vpop.f32.mrb[0].mxu0
        %v3474 = vadd.f32 0.0, %v3473
        %v3475 = vpop.f32.mrb[0].mxu0
        %3476 = vmatprep.mubr.f32.mxu0 0.0
        %3477 = vmatmul.mubr.f32.gmra.mrb[0].mxu0 %v3385
        %v3478 = vpop.f32.mrb[0].mxu0
        %v3479 = vadd.f32 0.0, %v3478
        %v3480 = vpop.f32.mrb[0].mxu0
        %3481 = vmatprep.mubr.f32.mxu0 0.0
        %3482 = vmatmul.mubr.f32.gmra.mrb[0].mxu0 %v3388
        %v3483 = vpop.f32.mrb[0].mxu0
        %v3484 = vadd.f32 0.0, %v3483
        %v3485 = vpop.f32.mrb[0].mxu0
        %3486 = vmatprep.mubr.f32.mxu0 0.0
        %3487 = vmatmul.mubr.f32.gmra.mrb[0].mxu0 %v3391
        %v3488 = vpop.f32.mrb[0].mxu0
        %v3489 = vadd.f32 0.0, %v3488
        %v3490 = vpop.f32.mrb[0].mxu0
        %3491 = vmatprep.mubr.f32.mxu0 0.0
        %3492 = vmatmul.mubr.f32.gmra.mrb[0].mxu0 %v3394
        %v3493 = vpop.f32.mrb[0].mxu0
        %v3494 = vadd.f32 0.0, %v3493
        %v3495 = vpop.f32.mrb[0].mxu0
        %3496 = vmatprep.mubr.f32.mxu0 0.0
        %3497 = vmatmul.mubr.f32.gmra.mrb[0].mxu0 %v3397
        %v3498 = vpop.f32.mrb[0].mxu0
        %v3499 = vadd.f32 0.0, %v3498
        %v3500 = vpop.f32.mrb[0].mxu0
        %3501 = vmatprep.mubr.f32.mxu0 0.0
        %3502 = vmatmul.mubr.f32.gmra.mrb[0].mxu0 %v3400
        %v3503 = vpop.f32.mrb[0].mxu0
        %v3504 = vadd.f32 0.0, %v3503
        %v3505 = vpop.f32.mrb[0].mxu0
        %3506 = vdwg.mxu0
        %3507 = vrot.lane.b32.xlu0 %v729, 112
        %v3508 = vpop.permute.xlu0 %3507
        %3509 = vrot.lane.b32.xlu0 %v734, 112
        %v3510 = vpop.permute.xlu0 %3509
        %3511 = vrot.lane.b32.xlu0 %v739, 112
        %v3512 = vpop.permute.xlu0 %3511
        %3513 = vrot.lane.b32.xlu0 %v744, 112
        %v3514 = vpop.permute.xlu0 %3513
        %3515 = vrot.lane.b32.xlu0 %v749, 112
        %v3516 = vpop.permute.xlu0 %3515
        %3517 = vrot.lane.b32.xlu0 %v754, 112
        %v3518 = vpop.permute.xlu0 %3517
        %3519 = vrot.lane.b32.xlu0 %v759, 112
        %v3520 = vpop.permute.xlu0 %3519
        %3521 = vrot.lane.b32.xlu0 %v764, 112
        %v3522 = vpop.permute.xlu0 %3521
        %v3532 = vsel %vm2343, %v2969, 0
        %v3535 = vsel %vm2343, %v2971, 0
        %v3538 = vsel %vm2343, %v2973, 0
        %v3541 = vsel %vm2343, %v2975, 0
        %v3544 = vsel %vm2343, %v2977, 0
        %v3547 = vsel %vm2343, %v2979, 0
        %v3550 = vsel %vm2343, %v2981, 0
        %v3553 = vsel %vm2343, %v2983, 0
        %3555 = vmatprep.subr.mxu0 0.0
        %3556 = vmatpush1.msra.mxu0 %v3508
        %3557 = vmatprep.subr.mxu0 0.0
        %3558 = vmatpush1.msra.mxu0 %v3510
        %3559 = vmatprep.subr.mxu0 0.0
        %3560 = vmatpush1.msra.mxu0 %v3512
        %3561 = vmatprep.subr.mxu0 0.0
        %3562 = vmatpush1.msra.mxu0 %v3514
        %3563 = vmatprep.subr.mxu0 0.0
        %3564 = vmatpush1.msra.mxu0 %v3516
        %3565 = vmatprep.subr.mxu0 0.0
        %3566 = vmatpush1.msra.mxu0 %v3518
        %3567 = vmatprep.subr.mxu0 0.0
        %3568 = vmatpush1.msra.mxu0 %v3520
        %3569 = vmatprep.subr.mxu0 0.0
        %3570 = vmatpush1.msra.mxu0 %v3522
        %3571 = vmatprep.subr.mxu0 0.0
        %3572 = vmatpush1.msra.mxu0 0.0
        %3573 = vmatprep.subr.mxu0 0.0
        %3574 = vmatpush1.msra.mxu0 0.0
        %3575 = vmatprep.subr.mxu0 0.0
        %3576 = vmatpush1.msra.mxu0 0.0
        %3577 = vmatprep.subr.mxu0 0.0
        %3578 = vmatpush1.msra.mxu0 0.0
        %3579 = vmatprep.subr.mxu0 0.0
        %3580 = vmatpush1.msra.mxu0 0.0
        %3581 = vmatprep.subr.mxu0 0.0
        %3582 = vmatpush1.msra.mxu0 0.0
        %3583 = vmatprep.subr.mxu0 0.0
        %3584 = vmatpush1.msra.mxu0 0.0
        %3585 = vmatprep.subr.mxu0 0.0
        %3586 = vmatpush1.msra.mxu0 0.0
        %3587 = vmatprep.subr.mxu0 0.0
        %3588 = vmatpush1.msra.mxu0 0.0
        %3589 = vmatprep.subr.mxu0 0.0
        %3590 = vmatpush1.msra.mxu0 0.0
        %3591 = vmatprep.subr.mxu0 0.0
        %3592 = vmatpush1.msra.mxu0 0.0
        %3593 = vmatprep.subr.mxu0 0.0
        %3594 = vmatpush1.msra.mxu0 0.0
        %3595 = vmatprep.subr.mxu0 0.0
        %3596 = vmatpush1.msra.mxu0 0.0
        %3597 = vmatprep.subr.mxu0 0.0
        %3598 = vmatpush1.msra.mxu0 0.0
        %3599 = vmatprep.subr.mxu0 0.0
        %3600 = vmatpush1.msra.mxu0 0.0
        %3601 = vmatprep.subr.mxu0 0.0
        %3602 = vmatpush1.msra.mxu0 0.0
        %3603 = vmatprep.subr.mxu0 0.0
        %3604 = vmatpush1.msra.mxu0 0.0
        %3605 = vmatprep.subr.mxu0 0.0
        %3606 = vmatpush1.msra.mxu0 0.0
        %3607 = vmatprep.subr.mxu0 0.0
        %3608 = vmatpush1.msra.mxu0 0.0
        %3609 = vmatprep.subr.mxu0 0.0
        %3610 = vmatpush1.msra.mxu0 0.0
        %3611 = vmatprep.subr.mxu0 0.0
        %3612 = vmatpush1.msra.mxu0 0.0
        %3613 = vmatprep.subr.mxu0 0.0
        %3614 = vmatpush1.msra.mxu0 0.0
        %3615 = vmatprep.subr.mxu0 0.0
        %3616 = vmatpush1.msra.mxu0 0.0
        %3617 = vmatprep.subr.mxu0 0.0
        %3618 = vmatpush1.msra.mxu0 0.0
        %3619 = vmatprep.mubr.f32.mxu0 0.0
        %3620 = vmatmul.mubr.f32.gmra.mrb[0].mxu0 %v3532
        %v3621 = vpop.f32.mrb[0].mxu0
        %v3622 = vadd.f32 0.0, %v3621
        %v3623 = vpop.f32.mrb[0].mxu0
        %3624 = vmatprep.mubr.f32.mxu0 0.0
        %3625 = vmatmul.mubr.f32.gmra.mrb[0].mxu0 %v3535
        %v3626 = vpop.f32.mrb[0].mxu0
        %v3627 = vadd.f32 0.0, %v3626
        %v3628 = vpop.f32.mrb[0].mxu0
        %3629 = vmatprep.mubr.f32.mxu0 0.0
        %3630 = vmatmul.mubr.f32.gmra.mrb[0].mxu0 %v3538
        %v3631 = vpop.f32.mrb[0].mxu0
        %v3632 = vadd.f32 0.0, %v3631
        %v3633 = vpop.f32.mrb[0].mxu0
        %3634 = vmatprep.mubr.f32.mxu0 0.0
        %3635 = vmatmul.mubr.f32.gmra.mrb[0].mxu0 %v3541
        %v3636 = vpop.f32.mrb[0].mxu0
        %v3637 = vadd.f32 0.0, %v3636
        %v3638 = vpop.f32.mrb[0].mxu0
        %3639 = vmatprep.mubr.f32.mxu0 0.0
        %3640 = vmatmul.mubr.f32.gmra.mrb[0].mxu0 %v3544
        %v3641 = vpop.f32.mrb[0].mxu0
        %v3642 = vadd.f32 0.0, %v3641
        %v3643 = vpop.f32.mrb[0].mxu0
        %3644 = vmatprep.mubr.f32.mxu0 0.0
        %3645 = vmatmul.mubr.f32.gmra.mrb[0].mxu0 %v3547
        %v3646 = vpop.f32.mrb[0].mxu0
        %v3647 = vadd.f32 0.0, %v3646
        %v3648 = vpop.f32.mrb[0].mxu0
        %3649 = vmatprep.mubr.f32.mxu0 0.0
        %3650 = vmatmul.mubr.f32.gmra.mrb[0].mxu0 %v3550
        %v3651 = vpop.f32.mrb[0].mxu0
        %v3652 = vadd.f32 0.0, %v3651
        %v3653 = vpop.f32.mrb[0].mxu0
        %3654 = vmatprep.mubr.f32.mxu0 0.0
        %3655 = vmatmul.mubr.f32.gmra.mrb[0].mxu0 %v3553
        %v3656 = vpop.f32.mrb[0].mxu0
        %v3657 = vadd.f32 0.0, %v3656
        %v3658 = vpop.f32.mrb[0].mxu0
        %3659 = vdwg.mxu0
        %3660 = vrot.lane.b32.xlu0 %v769, 112
        %v3661 = vpop.permute.xlu0 %3660
        %3662 = vrot.lane.b32.xlu0 %v774, 112
        %v3663 = vpop.permute.xlu0 %3662
        %3664 = vrot.lane.b32.xlu0 %v779, 112
        %v3665 = vpop.permute.xlu0 %3664
        %3666 = vrot.lane.b32.xlu0 %v784, 112
        %v3667 = vpop.permute.xlu0 %3666
        %3668 = vrot.lane.b32.xlu0 %v789, 112
        %v3669 = vpop.permute.xlu0 %3668
        %3670 = vrot.lane.b32.xlu0 %v794, 112
        %v3671 = vpop.permute.xlu0 %3670
        %3672 = vrot.lane.b32.xlu0 %v799, 112
        %v3673 = vpop.permute.xlu0 %3672
        %3674 = vrot.lane.b32.xlu0 %v804, 112
        %v3675 = vpop.permute.xlu0 %3674
        %v3685 = vsel %vm2343, %v2985, 0
        %v3688 = vsel %vm2343, %v2987, 0
        %v3691 = vsel %vm2343, %v2989, 0
        %v3694 = vsel %vm2343, %v2991, 0
        %v3697 = vsel %vm2343, %v2993, 0
        %v3700 = vsel %vm2343, %v2995, 0
        %v3703 = vsel %vm2343, %v2997, 0
        %v3706 = vsel %vm2343, %v2999, 0
        %3708 = vmatprep.subr.mxu0 0.0
        %3709 = vmatpush1.msra.mxu0 %v3661
        %3710 = vmatprep.subr.mxu0 0.0
        %3711 = vmatpush1.msra.mxu0 %v3663
        %3712 = vmatprep.subr.mxu0 0.0
        %3713 = vmatpush1.msra.mxu0 %v3665
        %3714 = vmatprep.subr.mxu0 0.0
        %3715 = vmatpush1.msra.mxu0 %v3667
        %3716 = vmatprep.subr.mxu0 0.0
        %3717 = vmatpush1.msra.mxu0 %v3669
        %3718 = vmatprep.subr.mxu0 0.0
        %3719 = vmatpush1.msra.mxu0 %v3671
        %3720 = vmatprep.subr.mxu0 0.0
        %3721 = vmatpush1.msra.mxu0 %v3673
        %3722 = vmatprep.subr.mxu0 0.0
        %3723 = vmatpush1.msra.mxu0 %v3675
        %3724 = vmatprep.subr.mxu0 0.0
        %3725 = vmatpush1.msra.mxu0 0.0
        %3726 = vmatprep.subr.mxu0 0.0
        %3727 = vmatpush1.msra.mxu0 0.0
        %3728 = vmatprep.subr.mxu0 0.0
        %3729 = vmatpush1.msra.mxu0 0.0
        %3730 = vmatprep.subr.mxu0 0.0
        %3731 = vmatpush1.msra.mxu0 0.0
        %3732 = vmatprep.subr.mxu0 0.0
        %3733 = vmatpush1.msra.mxu0 0.0
        %3734 = vmatprep.subr.mxu0 0.0
        %3735 = vmatpush1.msra.mxu0 0.0
        %3736 = vmatprep.subr.mxu0 0.0
        %3737 = vmatpush1.msra.mxu0 0.0
        %3738 = vmatprep.subr.mxu0 0.0
        %3739 = vmatpush1.msra.mxu0 0.0
        %3740 = vmatprep.subr.mxu0 0.0
        %3741 = vmatpush1.msra.mxu0 0.0
        %3742 = vmatprep.subr.mxu0 0.0
        %3743 = vmatpush1.msra.mxu0 0.0
        %3744 = vmatprep.subr.mxu0 0.0
        %3745 = vmatpush1.msra.mxu0 0.0
        %3746 = vmatprep.subr.mxu0 0.0
        %3747 = vmatpush1.msra.mxu0 0.0
        %3748 = vmatprep.subr.mxu0 0.0
        %3749 = vmatpush1.msra.mxu0 0.0
        %3750 = vmatprep.subr.mxu0 0.0
        %3751 = vmatpush1.msra.mxu0 0.0
        %3752 = vmatprep.subr.mxu0 0.0
        %3753 = vmatpush1.msra.mxu0 0.0
        %3754 = vmatprep.subr.mxu0 0.0
        %3755 = vmatpush1.msra.mxu0 0.0
        %3756 = vmatprep.subr.mxu0 0.0
        %3757 = vmatpush1.msra.mxu0 0.0
        %3758 = vmatprep.subr.mxu0 0.0
        %3759 = vmatpush1.msra.mxu0 0.0
        %3760 = vmatprep.subr.mxu0 0.0
        %3761 = vmatpush1.msra.mxu0 0.0
        %3762 = vmatprep.subr.mxu0 0.0
        %3763 = vmatpush1.msra.mxu0 0.0
        %3764 = vmatprep.subr.mxu0 0.0
        %3765 = vmatpush1.msra.mxu0 0.0
        %3766 = vmatprep.subr.mxu0 0.0
        %3767 = vmatpush1.msra.mxu0 0.0
        %3768 = vmatprep.subr.mxu0 0.0
        %3769 = vmatpush1.msra.mxu0 0.0
        %3770 = vmatprep.subr.mxu0 0.0
        %3771 = vmatpush1.msra.mxu0 0.0
        %3772 = vmatprep.mubr.f32.mxu0 0.0
        %3773 = vmatmul.mubr.f32.gmra.mrb[0].mxu0 %v3685
        %v3774 = vpop.f32.mrb[0].mxu0
        %v3775 = vadd.f32 0.0, %v3774
        %v3776 = vpop.f32.mrb[0].mxu0
        %3777 = vmatprep.mubr.f32.mxu0 0.0
        %3778 = vmatmul.mubr.f32.gmra.mrb[0].mxu0 %v3688
        %v3779 = vpop.f32.mrb[0].mxu0
        %v3780 = vadd.f32 0.0, %v3779
        %v3781 = vpop.f32.mrb[0].mxu0
        %3782 = vmatprep.mubr.f32.mxu0 0.0
        %3783 = vmatmul.mubr.f32.gmra.mrb[0].mxu0 %v3691
        %v3784 = vpop.f32.mrb[0].mxu0
        %v3785 = vadd.f32 0.0, %v3784
        %v3786 = vpop.f32.mrb[0].mxu0
        %3787 = vmatprep.mubr.f32.mxu0 0.0
        %3788 = vmatmul.mubr.f32.gmra.mrb[0].mxu0 %v3694
        %v3789 = vpop.f32.mrb[0].mxu0
        %v3790 = vadd.f32 0.0, %v3789
        %v3791 = vpop.f32.mrb[0].mxu0
        %3792 = vmatprep.mubr.f32.mxu0 0.0
        %3793 = vmatmul.mubr.f32.gmra.mrb[0].mxu0 %v3697
        %v3794 = vpop.f32.mrb[0].mxu0
        %v3795 = vadd.f32 0.0, %v3794
        %v3796 = vpop.f32.mrb[0].mxu0
        %3797 = vmatprep.mubr.f32.mxu0 0.0
        %3798 = vmatmul.mubr.f32.gmra.mrb[0].mxu0 %v3700
        %v3799 = vpop.f32.mrb[0].mxu0
        %v3800 = vadd.f32 0.0, %v3799
        %v3801 = vpop.f32.mrb[0].mxu0
        %3802 = vmatprep.mubr.f32.mxu0 0.0
        %3803 = vmatmul.mubr.f32.gmra.mrb[0].mxu0 %v3703
        %v3804 = vpop.f32.mrb[0].mxu0
        %v3805 = vadd.f32 0.0, %v3804
        %v3806 = vpop.f32.mrb[0].mxu0
        %3807 = vmatprep.mubr.f32.mxu0 0.0
        %3808 = vmatmul.mubr.f32.gmra.mrb[0].mxu0 %v3706
        %v3809 = vpop.f32.mrb[0].mxu0
        %v3810 = vadd.f32 0.0, %v3809
        %v3811 = vpop.f32.mrb[0].mxu0
        %3812 = vdwg.mxu0
        %3813 = vrot.lane.b32.xlu0 %v809, 112
        %v3814 = vpop.permute.xlu0 %3813
        %3815 = vrot.lane.b32.xlu0 %v814, 112
        %v3816 = vpop.permute.xlu0 %3815
        %3817 = vrot.lane.b32.xlu0 %v819, 112
        %v3818 = vpop.permute.xlu0 %3817
        %3819 = vrot.lane.b32.xlu0 %v824, 112
        %v3820 = vpop.permute.xlu0 %3819
        %3821 = vrot.lane.b32.xlu0 %v829, 112
        %v3822 = vpop.permute.xlu0 %3821
        %3823 = vrot.lane.b32.xlu0 %v834, 112
        %v3824 = vpop.permute.xlu0 %3823
        %3825 = vrot.lane.b32.xlu0 %v839, 112
        %v3826 = vpop.permute.xlu0 %3825
        %3827 = vrot.lane.b32.xlu0 %v844, 112
        %v3828 = vpop.permute.xlu0 %3827
        %v3838 = vsel %vm2343, %v3001, 0
        %v3841 = vsel %vm2343, %v3003, 0
        %v3844 = vsel %vm2343, %v3005, 0
        %v3847 = vsel %vm2343, %v3007, 0
        %v3850 = vsel %vm2343, %v3009, 0
        %v3853 = vsel %vm2343, %v3011, 0
        %v3856 = vsel %vm2343, %v3013, 0
        %v3859 = vsel %vm2343, %v3015, 0
        %3861 = vmatprep.subr.mxu0 0.0
        %3862 = vmatpush1.msra.mxu0 %v3814
        %3863 = vmatprep.subr.mxu0 0.0
        %3864 = vmatpush1.msra.mxu0 %v3816
        %3865 = vmatprep.subr.mxu0 0.0
        %3866 = vmatpush1.msra.mxu0 %v3818
        %3867 = vmatprep.subr.mxu0 0.0
        %3868 = vmatpush1.msra.mxu0 %v3820
        %3869 = vmatprep.subr.mxu0 0.0
        %3870 = vmatpush1.msra.mxu0 %v3822
        %3871 = vmatprep.subr.mxu0 0.0
        %3872 = vmatpush1.msra.mxu0 %v3824
        %3873 = vmatprep.subr.mxu0 0.0
        %3874 = vmatpush1.msra.mxu0 %v3826
        %3875 = vmatprep.subr.mxu0 0.0
        %3876 = vmatpush1.msra.mxu0 %v3828
        %3877 = vmatprep.subr.mxu0 0.0
        %3878 = vmatpush1.msra.mxu0 0.0
        %3879 = vmatprep.subr.mxu0 0.0
        %3880 = vmatpush1.msra.mxu0 0.0
        %3881 = vmatprep.subr.mxu0 0.0
        %3882 = vmatpush1.msra.mxu0 0.0
        %3883 = vmatprep.subr.mxu0 0.0
        %3884 = vmatpush1.msra.mxu0 0.0
        %3885 = vmatprep.subr.mxu0 0.0
        %3886 = vmatpush1.msra.mxu0 0.0
        %3887 = vmatprep.subr.mxu0 0.0
        %3888 = vmatpush1.msra.mxu0 0.0
        %3889 = vmatprep.subr.mxu0 0.0
        %3890 = vmatpush1.msra.mxu0 0.0
        %3891 = vmatprep.subr.mxu0 0.0
        %3892 = vmatpush1.msra.mxu0 0.0
        %3893 = vmatprep.subr.mxu0 0.0
        %3894 = vmatpush1.msra.mxu0 0.0
        %3895 = vmatprep.subr.mxu0 0.0
        %3896 = vmatpush1.msra.mxu0 0.0
        %3897 = vmatprep.subr.mxu0 0.0
        %3898 = vmatpush1.msra.mxu0 0.0
        %3899 = vmatprep.subr.mxu0 0.0
        %3900 = vmatpush1.msra.mxu0 0.0
        %3901 = vmatprep.subr.mxu0 0.0
        %3902 = vmatpush1.msra.mxu0 0.0
        %3903 = vmatprep.subr.mxu0 0.0
        %3904 = vmatpush1.msra.mxu0 0.0
        %3905 = vmatprep.subr.mxu0 0.0
        %3906 = vmatpush1.msra.mxu0 0.0
        %3907 = vmatprep.subr.mxu0 0.0
        %3908 = vmatpush1.msra.mxu0 0.0
        %3909 = vmatprep.subr.mxu0 0.0
        %3910 = vmatpush1.msra.mxu0 0.0
        %3911 = vmatprep.subr.mxu0 0.0
        %3912 = vmatpush1.msra.mxu0 0.0
        %3913 = vmatprep.subr.mxu0 0.0
        %3914 = vmatpush1.msra.mxu0 0.0
        %3915 = vmatprep.subr.mxu0 0.0
        %3916 = vmatpush1.msra.mxu0 0.0
        %3917 = vmatprep.subr.mxu0 0.0
        %3918 = vmatpush1.msra.mxu0 0.0
        %3919 = vmatprep.subr.mxu0 0.0
        %3920 = vmatpush1.msra.mxu0 0.0
        %3921 = vmatprep.subr.mxu0 0.0
        %3922 = vmatpush1.msra.mxu0 0.0
        %3923 = vmatprep.subr.mxu0 0.0
        %3924 = vmatpush1.msra.mxu0 0.0
        %3925 = vmatprep.mubr.f32.mxu0 0.0
        %3926 = vmatmul.mubr.f32.gmra.mrb[0].mxu0 %v3838
        %v3927 = vpop.f32.mrb[0].mxu0
        %v3928 = vadd.f32 0.0, %v3927
        %v3929 = vpop.f32.mrb[0].mxu0
        %3930 = vmatprep.mubr.f32.mxu0 0.0
        %3931 = vmatmul.mubr.f32.gmra.mrb[0].mxu0 %v3841
        %v3932 = vpop.f32.mrb[0].mxu0
        %v3933 = vadd.f32 0.0, %v3932
        %v3934 = vpop.f32.mrb[0].mxu0
        %3935 = vmatprep.mubr.f32.mxu0 0.0
        %3936 = vmatmul.mubr.f32.gmra.mrb[0].mxu0 %v3844
        %v3937 = vpop.f32.mrb[0].mxu0
        %v3938 = vadd.f32 0.0, %v3937
        %v3939 = vpop.f32.mrb[0].mxu0
        %3940 = vmatprep.mubr.f32.mxu0 0.0
        %3941 = vmatmul.mubr.f32.gmra.mrb[0].mxu0 %v3847
        %v3942 = vpop.f32.mrb[0].mxu0
        %v3943 = vadd.f32 0.0, %v3942
        %v3944 = vpop.f32.mrb[0].mxu0
        %3945 = vmatprep.mubr.f32.mxu0 0.0
        %3946 = vmatmul.mubr.f32.gmra.mrb[0].mxu0 %v3850
        %v3947 = vpop.f32.mrb[0].mxu0
        %v3948 = vadd.f32 0.0, %v3947
        %v3949 = vpop.f32.mrb[0].mxu0
        %3950 = vmatprep.mubr.f32.mxu0 0.0
        %3951 = vmatmul.mubr.f32.gmra.mrb[0].mxu0 %v3853
        %v3952 = vpop.f32.mrb[0].mxu0
        %v3953 = vadd.f32 0.0, %v3952
        %v3954 = vpop.f32.mrb[0].mxu0
        %3955 = vmatprep.mubr.f32.mxu0 0.0
        %3956 = vmatmul.mubr.f32.gmra.mrb[0].mxu0 %v3856
        %v3957 = vpop.f32.mrb[0].mxu0
        %v3958 = vadd.f32 0.0, %v3957
        %v3959 = vpop.f32.mrb[0].mxu0
        %3960 = vmatprep.mubr.f32.mxu0 0.0
        %3961 = vmatmul.mubr.f32.gmra.mrb[0].mxu0 %v3859
        %v3962 = vpop.f32.mrb[0].mxu0
        %v3963 = vadd.f32 0.0, %v3962
        %v3964 = vpop.f32.mrb[0].mxu0
        %3965 = vdwg.mxu0
        %3966 = vrot.lane.b32.xlu0 %v849, 112
        %v3967 = vpop.permute.xlu0 %3966
        %3968 = vrot.lane.b32.xlu0 %v854, 112
        %v3969 = vpop.permute.xlu0 %3968
        %3970 = vrot.lane.b32.xlu0 %v859, 112
        %v3971 = vpop.permute.xlu0 %3970
        %3972 = vrot.lane.b32.xlu0 %v864, 112
        %v3973 = vpop.permute.xlu0 %3972
        %3974 = vrot.lane.b32.xlu0 %v869, 112
        %v3975 = vpop.permute.xlu0 %3974
        %3976 = vrot.lane.b32.xlu0 %v874, 112
        %v3977 = vpop.permute.xlu0 %3976
        %3978 = vrot.lane.b32.xlu0 %v879, 112
        %v3979 = vpop.permute.xlu0 %3978
        %3980 = vrot.lane.b32.xlu0 %v884, 112
        %v3981 = vpop.permute.xlu0 %3980
        %v3991 = vsel %vm2343, %v3017, 0
        %v3994 = vsel %vm2343, %v3019, 0
        %v3997 = vsel %vm2343, %v3021, 0
        %v4000 = vsel %vm2343, %v3023, 0
        %v4003 = vsel %vm2343, %v3025, 0
        %v4006 = vsel %vm2343, %v3027, 0
        %v4009 = vsel %vm2343, %v3029, 0
        %v4012 = vsel %vm2343, %v3031, 0
        %4014 = vmatprep.subr.mxu0 0.0
        %4015 = vmatpush1.msra.mxu0 %v3967
        %4016 = vmatprep.subr.mxu0 0.0
        %4017 = vmatpush1.msra.mxu0 %v3969
        %4018 = vmatprep.subr.mxu0 0.0
        %4019 = vmatpush1.msra.mxu0 %v3971
        %4020 = vmatprep.subr.mxu0 0.0
        %4021 = vmatpush1.msra.mxu0 %v3973
        %4022 = vmatprep.subr.mxu0 0.0
        %4023 = vmatpush1.msra.mxu0 %v3975
        %4024 = vmatprep.subr.mxu0 0.0
        %4025 = vmatpush1.msra.mxu0 %v3977
        %4026 = vmatprep.subr.mxu0 0.0
        %4027 = vmatpush1.msra.mxu0 %v3979
        %4028 = vmatprep.subr.mxu0 0.0
        %4029 = vmatpush1.msra.mxu0 %v3981
        %4030 = vmatprep.subr.mxu0 0.0
        %4031 = vmatpush1.msra.mxu0 0.0
        %4032 = vmatprep.subr.mxu0 0.0
        %4033 = vmatpush1.msra.mxu0 0.0
        %4034 = vmatprep.subr.mxu0 0.0
        %4035 = vmatpush1.msra.mxu0 0.0
        %4036 = vmatprep.subr.mxu0 0.0
        %4037 = vmatpush1.msra.mxu0 0.0
        %4038 = vmatprep.subr.mxu0 0.0
        %4039 = vmatpush1.msra.mxu0 0.0
        %4040 = vmatprep.subr.mxu0 0.0
        %4041 = vmatpush1.msra.mxu0 0.0
        %4042 = vmatprep.subr.mxu0 0.0
        %4043 = vmatpush1.msra.mxu0 0.0
        %4044 = vmatprep.subr.mxu0 0.0
        %4045 = vmatpush1.msra.mxu0 0.0
        %4046 = vmatprep.subr.mxu0 0.0
        %4047 = vmatpush1.msra.mxu0 0.0
        %4048 = vmatprep.subr.mxu0 0.0
        %4049 = vmatpush1.msra.mxu0 0.0
        %4050 = vmatprep.subr.mxu0 0.0
        %4051 = vmatpush1.msra.mxu0 0.0
        %4052 = vmatprep.subr.mxu0 0.0
        %4053 = vmatpush1.msra.mxu0 0.0
        %4054 = vmatprep.subr.mxu0 0.0
        %4055 = vmatpush1.msra.mxu0 0.0
        %4056 = vmatprep.subr.mxu0 0.0
        %4057 = vmatpush1.msra.mxu0 0.0
        %4058 = vmatprep.subr.mxu0 0.0
        %4059 = vmatpush1.msra.mxu0 0.0
        %4060 = vmatprep.subr.mxu0 0.0
        %4061 = vmatpush1.msra.mxu0 0.0
        %4062 = vmatprep.subr.mxu0 0.0
        %4063 = vmatpush1.msra.mxu0 0.0
        %4064 = vmatprep.subr.mxu0 0.0
        %4065 = vmatpush1.msra.mxu0 0.0
        %4066 = vmatprep.subr.mxu0 0.0
        %4067 = vmatpush1.msra.mxu0 0.0
        %4068 = vmatprep.subr.mxu0 0.0
        %4069 = vmatpush1.msra.mxu0 0.0
        %4070 = vmatprep.subr.mxu0 0.0
        %4071 = vmatpush1.msra.mxu0 0.0
        %4072 = vmatprep.subr.mxu0 0.0
        %4073 = vmatpush1.msra.mxu0 0.0
        %4074 = vmatprep.subr.mxu0 0.0
        %4075 = vmatpush1.msra.mxu0 0.0
        %4076 = vmatprep.subr.mxu0 0.0
        %4077 = vmatpush1.msra.mxu0 0.0
        %4078 = vmatprep.mubr.f32.mxu0 0.0
        %4079 = vmatmul.mubr.f32.gmra.mrb[0].mxu0 %v3991
        %v4080 = vpop.f32.mrb[0].mxu0
        %v4081 = vadd.f32 0.0, %v4080
        %v4082 = vpop.f32.mrb[0].mxu0
        %4083 = vmatprep.mubr.f32.mxu0 0.0
        %4084 = vmatmul.mubr.f32.gmra.mrb[0].mxu0 %v3994
        %v4085 = vpop.f32.mrb[0].mxu0
        %v4086 = vadd.f32 0.0, %v4085
        %v4087 = vpop.f32.mrb[0].mxu0
        %4088 = vmatprep.mubr.f32.mxu0 0.0
        %4089 = vmatmul.mubr.f32.gmra.mrb[0].mxu0 %v3997
        %v4090 = vpop.f32.mrb[0].mxu0
        %v4091 = vadd.f32 0.0, %v4090
        %v4092 = vpop.f32.mrb[0].mxu0
        %4093 = vmatprep.mubr.f32.mxu0 0.0
        %4094 = vmatmul.mubr.f32.gmra.mrb[0].mxu0 %v4000
        %v4095 = vpop.f32.mrb[0].mxu0
        %v4096 = vadd.f32 0.0, %v4095
        %v4097 = vpop.f32.mrb[0].mxu0
        %4098 = vmatprep.mubr.f32.mxu0 0.0
        %4099 = vmatmul.mubr.f32.gmra.mrb[0].mxu0 %v4003
        %v4100 = vpop.f32.mrb[0].mxu0
        %v4101 = vadd.f32 0.0, %v4100
        %v4102 = vpop.f32.mrb[0].mxu0
        %4103 = vmatprep.mubr.f32.mxu0 0.0
        %4104 = vmatmul.mubr.f32.gmra.mrb[0].mxu0 %v4006
        %v4105 = vpop.f32.mrb[0].mxu0
        %v4106 = vadd.f32 0.0, %v4105
        %v4107 = vpop.f32.mrb[0].mxu0
        %4108 = vmatprep.mubr.f32.mxu0 0.0
        %4109 = vmatmul.mubr.f32.gmra.mrb[0].mxu0 %v4009
        %v4110 = vpop.f32.mrb[0].mxu0
        %v4111 = vadd.f32 0.0, %v4110
        %v4112 = vpop.f32.mrb[0].mxu0
        %4113 = vmatprep.mubr.f32.mxu0 0.0
        %4114 = vmatmul.mubr.f32.gmra.mrb[0].mxu0 %v4012
        %v4115 = vpop.f32.mrb[0].mxu0
        %v4116 = vadd.f32 0.0, %v4115
        %v4117 = vpop.f32.mrb[0].mxu0
        %4118 = vdwg.mxu0
        %4119 = vrot.lane.b32.xlu0 %v889, 112
        %v4120 = vpop.permute.xlu0 %4119
        %4121 = vrot.lane.b32.xlu0 %v894, 112
        %v4122 = vpop.permute.xlu0 %4121
        %4123 = vrot.lane.b32.xlu0 %v899, 112
        %v4124 = vpop.permute.xlu0 %4123
        %4125 = vrot.lane.b32.xlu0 %v904, 112
        %v4126 = vpop.permute.xlu0 %4125
        %4127 = vrot.lane.b32.xlu0 %v909, 112
        %v4128 = vpop.permute.xlu0 %4127
        %4129 = vrot.lane.b32.xlu0 %v914, 112
        %v4130 = vpop.permute.xlu0 %4129
        %4131 = vrot.lane.b32.xlu0 %v919, 112
        %v4132 = vpop.permute.xlu0 %4131
        %4133 = vrot.lane.b32.xlu0 %v924, 112
        %v4134 = vpop.permute.xlu0 %4133
        %v4144 = vsel %vm2343, %v3033, 0
        %v4147 = vsel %vm2343, %v3035, 0
        %v4150 = vsel %vm2343, %v3037, 0
        %v4153 = vsel %vm2343, %v3039, 0
        %v4156 = vsel %vm2343, %v3041, 0
        %v4159 = vsel %vm2343, %v3043, 0
        %v4162 = vsel %vm2343, %v3045, 0
        %v4165 = vsel %vm2343, %v3047, 0
        %4167 = vmatprep.subr.mxu0 0.0
        %4168 = vmatpush1.msra.mxu0 %v4120
        %4169 = vmatprep.subr.mxu0 0.0
        %4170 = vmatpush1.msra.mxu0 %v4122
        %4171 = vmatprep.subr.mxu0 0.0
        %4172 = vmatpush1.msra.mxu0 %v4124
        %4173 = vmatprep.subr.mxu0 0.0
        %4174 = vmatpush1.msra.mxu0 %v4126
        %4175 = vmatprep.subr.mxu0 0.0
        %4176 = vmatpush1.msra.mxu0 %v4128
        %4177 = vmatprep.subr.mxu0 0.0
        %4178 = vmatpush1.msra.mxu0 %v4130
        %4179 = vmatprep.subr.mxu0 0.0
        %4180 = vmatpush1.msra.mxu0 %v4132
        %4181 = vmatprep.subr.mxu0 0.0
        %4182 = vmatpush1.msra.mxu0 %v4134
        %4183 = vmatprep.subr.mxu0 0.0
        %4184 = vmatpush1.msra.mxu0 0.0
        %4185 = vmatprep.subr.mxu0 0.0
        %4186 = vmatpush1.msra.mxu0 0.0
        %4187 = vmatprep.subr.mxu0 0.0
        %4188 = vmatpush1.msra.mxu0 0.0
        %4189 = vmatprep.subr.mxu0 0.0
        %4190 = vmatpush1.msra.mxu0 0.0
        %4191 = vmatprep.subr.mxu0 0.0
        %4192 = vmatpush1.msra.mxu0 0.0
        %4193 = vmatprep.subr.mxu0 0.0
        %4194 = vmatpush1.msra.mxu0 0.0
        %4195 = vmatprep.subr.mxu0 0.0
        %4196 = vmatpush1.msra.mxu0 0.0
        %4197 = vmatprep.subr.mxu0 0.0
        %4198 = vmatpush1.msra.mxu0 0.0
        %4199 = vmatprep.subr.mxu0 0.0
        %4200 = vmatpush1.msra.mxu0 0.0
        %4201 = vmatprep.subr.mxu0 0.0
        %4202 = vmatpush1.msra.mxu0 0.0
        %4203 = vmatprep.subr.mxu0 0.0
        %4204 = vmatpush1.msra.mxu0 0.0
        %4205 = vmatprep.subr.mxu0 0.0
        %4206 = vmatpush1.msra.mxu0 0.0
        %4207 = vmatprep.subr.mxu0 0.0
        %4208 = vmatpush1.msra.mxu0 0.0
        %4209 = vmatprep.subr.mxu0 0.0
        %4210 = vmatpush1.msra.mxu0 0.0
        %4211 = vmatprep.subr.mxu0 0.0
        %4212 = vmatpush1.msra.mxu0 0.0
        %4213 = vmatprep.subr.mxu0 0.0
        %4214 = vmatpush1.msra.mxu0 0.0
        %4215 = vmatprep.subr.mxu0 0.0
        %4216 = vmatpush1.msra.mxu0 0.0
        %4217 = vmatprep.subr.mxu0 0.0
        %4218 = vmatpush1.msra.mxu0 0.0
        %4219 = vmatprep.subr.mxu0 0.0
        %4220 = vmatpush1.msra.mxu0 0.0
        %4221 = vmatprep.subr.mxu0 0.0
        %4222 = vmatpush1.msra.mxu0 0.0
        %4223 = vmatprep.subr.mxu0 0.0
        %4224 = vmatpush1.msra.mxu0 0.0
        %4225 = vmatprep.subr.mxu0 0.0
        %4226 = vmatpush1.msra.mxu0 0.0
        %4227 = vmatprep.subr.mxu0 0.0
        %4228 = vmatpush1.msra.mxu0 0.0
        %4229 = vmatprep.subr.mxu0 0.0
        %4230 = vmatpush1.msra.mxu0 0.0
        %4231 = vmatprep.mubr.f32.mxu0 0.0
        %4232 = vmatmul.mubr.f32.gmra.mrb[0].mxu0 %v4144
        %v4233 = vpop.f32.mrb[0].mxu0
        %v4234 = vadd.f32 0.0, %v4233
        %v4235 = vpop.f32.mrb[0].mxu0
        %4236 = vmatprep.mubr.f32.mxu0 0.0
        %4237 = vmatmul.mubr.f32.gmra.mrb[0].mxu0 %v4147
        %v4238 = vpop.f32.mrb[0].mxu0
        %v4239 = vadd.f32 0.0, %v4238
        %v4240 = vpop.f32.mrb[0].mxu0
        %4241 = vmatprep.mubr.f32.mxu0 0.0
        %4242 = vmatmul.mubr.f32.gmra.mrb[0].mxu0 %v4150
        %v4243 = vpop.f32.mrb[0].mxu0
        %v4244 = vadd.f32 0.0, %v4243
        %v4245 = vpop.f32.mrb[0].mxu0
        %4246 = vmatprep.mubr.f32.mxu0 0.0
        %4247 = vmatmul.mubr.f32.gmra.mrb[0].mxu0 %v4153
        %v4248 = vpop.f32.mrb[0].mxu0
        %v4249 = vadd.f32 0.0, %v4248
        %v4250 = vpop.f32.mrb[0].mxu0
        %4251 = vmatprep.mubr.f32.mxu0 0.0
        %4252 = vmatmul.mubr.f32.gmra.mrb[0].mxu0 %v4156
        %v4253 = vpop.f32.mrb[0].mxu0
        %v4254 = vadd.f32 0.0, %v4253
        %v4255 = vpop.f32.mrb[0].mxu0
        %4256 = vmatprep.mubr.f32.mxu0 0.0
        %4257 = vmatmul.mubr.f32.gmra.mrb[0].mxu0 %v4159
        %v4258 = vpop.f32.mrb[0].mxu0
        %v4259 = vadd.f32 0.0, %v4258
        %v4260 = vpop.f32.mrb[0].mxu0
        %4261 = vmatprep.mubr.f32.mxu0 0.0
        %4262 = vmatmul.mubr.f32.gmra.mrb[0].mxu0 %v4162
        %v4263 = vpop.f32.mrb[0].mxu0
        %v4264 = vadd.f32 0.0, %v4263
        %v4265 = vpop.f32.mrb[0].mxu0
        %4266 = vmatprep.mubr.f32.mxu0 0.0
        %4267 = vmatmul.mubr.f32.gmra.mrb[0].mxu0 %v4165
        %v4268 = vpop.f32.mrb[0].mxu0
        %v4269 = vadd.f32 0.0, %v4268
        %v4270 = vpop.f32.mrb[0].mxu0
        %4271 = vdwg.mxu0
        %v4273 = vsel %vm349, %v3173, 0
        %v4276 = vsel %vm349, %v3178, 0
        %v4279 = vsel %vm349, %v3326, 0
        %v4282 = vsel %vm349, %v3331, 0
        %v4285 = vsel %vm349, %v3479, 0
        %v4288 = vsel %vm349, %v3484, 0
        %v4291 = vsel %vm349, %v3632, 0
        %v4294 = vsel %vm349, %v3637, 0
        %v4297 = vsel %vm349, %v3785, 0
        %v4300 = vsel %vm349, %v3790, 0
        %v4303 = vsel %vm349, %v3938, 0
        %v4306 = vsel %vm349, %v3943, 0
        %v4309 = vsel %vm349, %v4091, 0
        %v4312 = vsel %vm349, %v4096, 0
        %v4315 = vsel %vm349, %v4244, 0
        %v4318 = vsel %vm349, %v4249, 0
        %4320 = vmatprep.subr.mxu0 0.0
        %4321 = vmatpush1.msra.mxu0 %v256
        %4322 = vmatprep.subr.mxu0 0.0
        %4323 = vmatpush1.msra.mxu0 0.0
        %4324 = vmatprep.subr.mxu0 0.0
        %4325 = vmatpush1.msra.mxu0 0.0
        %4326 = vmatprep.subr.mxu0 0.0
        %4327 = vmatpush1.msra.mxu0 0.0
        %4328 = vmatprep.subr.mxu0 0.0
        %4329 = vmatpush1.msra.mxu0 0.0
        %4330 = vmatprep.subr.mxu0 0.0
        %4331 = vmatpush1.msra.mxu0 0.0
        %4332 = vmatprep.subr.mxu0 0.0
        %4333 = vmatpush1.msra.mxu0 0.0
        %4334 = vmatprep.subr.mxu0 0.0
        %4335 = vmatpush1.msra.mxu0 0.0
        %4336 = vmatprep.subr.mxu0 0.0
        %4337 = vmatpush1.msra.mxu0 0.0
        %4338 = vmatprep.subr.mxu0 0.0
        %4339 = vmatpush1.msra.mxu0 0.0
        %4340 = vmatprep.subr.mxu0 0.0
        %4341 = vmatpush1.msra.mxu0 0.0
        %4342 = vmatprep.subr.mxu0 0.0
        %4343 = vmatpush1.msra.mxu0 0.0
        %4344 = vmatprep.subr.mxu0 0.0
        %4345 = vmatpush1.msra.mxu0 0.0
        %4346 = vmatprep.subr.mxu0 0.0
        %4347 = vmatpush1.msra.mxu0 0.0
        %4348 = vmatprep.subr.mxu0 0.0
        %4349 = vmatpush1.msra.mxu0 0.0
        %4350 = vmatprep.subr.mxu0 0.0
        %4351 = vmatpush1.msra.mxu0 0.0
        %4352 = vmatprep.subr.mxu0 0.0
        %4353 = vmatpush1.msra.mxu0 0.0
        %4354 = vmatprep.subr.mxu0 0.0
        %4355 = vmatpush1.msra.mxu0 0.0
        %4356 = vmatprep.subr.mxu0 0.0
        %4357 = vmatpush1.msra.mxu0 0.0
        %4358 = vmatprep.subr.mxu0 0.0
        %4359 = vmatpush1.msra.mxu0 0.0
        %4360 = vmatprep.subr.mxu0 0.0
        %4361 = vmatpush1.msra.mxu0 0.0
        %4362 = vmatprep.subr.mxu0 0.0
        %4363 = vmatpush1.msra.mxu0 0.0
        %4364 = vmatprep.subr.mxu0 0.0
        %4365 = vmatpush1.msra.mxu0 0.0
        %4366 = vmatprep.subr.mxu0 0.0
        %4367 = vmatpush1.msra.mxu0 0.0
        %4368 = vmatprep.subr.mxu0 0.0
        %4369 = vmatpush1.msra.mxu0 0.0
        %4370 = vmatprep.subr.mxu0 0.0
        %4371 = vmatpush1.msra.mxu0 0.0
        %4372 = vmatprep.subr.mxu0 0.0
        %4373 = vmatpush1.msra.mxu0 0.0
        %4374 = vmatprep.subr.mxu0 0.0
        %4375 = vmatpush1.msra.mxu0 0.0
        %4376 = vmatprep.subr.mxu0 0.0
        %4377 = vmatpush1.msra.mxu0 0.0
        %4378 = vmatprep.subr.mxu0 0.0
        %4379 = vmatpush1.msra.mxu0 0.0
        %4380 = vmatprep.subr.mxu0 0.0
        %4381 = vmatpush1.msra.mxu0 0.0
        %4382 = vmatprep.subr.mxu0 0.0
        %4383 = vmatpush1.msra.mxu0 0.0
        %4384 = vmatprep.mubr.f32.mxu0 0.0
        %4385 = vmatmul.mubr.f32.gmra.mrb[0].mxu0 %v4273
        %v4386 = vpop.f32.mrb[0].mxu0
        %v4387 = vadd.f32 0.0, %v4386
        %v4388 = vpop.f32.mrb[0].mxu0
        %4389 = vmatprep.mubr.f32.mxu0 0.0
        %4390 = vmatmul.mubr.f32.gmra.mrb[0].mxu0 %v4276
        %v4391 = vpop.f32.mrb[0].mxu0
        %v4392 = vadd.f32 0.0, %v4391
        %v4393 = vpop.f32.mrb[0].mxu0
        %4394 = vmatprep.mubr.f32.mxu0 0.0
        %4395 = vmatmul.mubr.f32.gmra.mrb[0].mxu0 %v4279
        %v4396 = vpop.f32.mrb[0].mxu0
        %v4397 = vadd.f32 0.0, %v4396
        %v4398 = vpop.f32.mrb[0].mxu0
        %4399 = vmatprep.mubr.f32.mxu0 0.0
        %4400 = vmatmul.mubr.f32.gmra.mrb[0].mxu0 %v4282
        %v4401 = vpop.f32.mrb[0].mxu0
        %v4402 = vadd.f32 0.0, %v4401
        %v4403 = vpop.f32.mrb[0].mxu0
        %4404 = vmatprep.mubr.f32.mxu0 0.0
        %4405 = vmatmul.mubr.f32.gmra.mrb[0].mxu0 %v4285
        %v4406 = vpop.f32.mrb[0].mxu0
        %v4407 = vadd.f32 0.0, %v4406
        %v4408 = vpop.f32.mrb[0].mxu0
        %4409 = vmatprep.mubr.f32.mxu0 0.0
        %4410 = vmatmul.mubr.f32.gmra.mrb[0].mxu0 %v4288
        %v4411 = vpop.f32.mrb[0].mxu0
        %v4412 = vadd.f32 0.0, %v4411
        %v4413 = vpop.f32.mrb[0].mxu0
        %4414 = vmatprep.mubr.f32.mxu0 0.0
        %4415 = vmatmul.mubr.f32.gmra.mrb[0].mxu0 %v4291
        %v4416 = vpop.f32.mrb[0].mxu0
        %v4417 = vadd.f32 0.0, %v4416
        %v4418 = vpop.f32.mrb[0].mxu0
        %4419 = vmatprep.mubr.f32.mxu0 0.0
        %4420 = vmatmul.mubr.f32.gmra.mrb[0].mxu0 %v4294
        %v4421 = vpop.f32.mrb[0].mxu0
        %v4422 = vadd.f32 0.0, %v4421
        %v4423 = vpop.f32.mrb[0].mxu0
        %4424 = vmatprep.mubr.f32.mxu0 0.0
        %4425 = vmatmul.mubr.f32.gmra.mrb[0].mxu0 %v4297
        %v4426 = vpop.f32.mrb[0].mxu0
        %v4427 = vadd.f32 0.0, %v4426
        %v4428 = vpop.f32.mrb[0].mxu0
        %4429 = vmatprep.mubr.f32.mxu0 0.0
        %4430 = vmatmul.mubr.f32.gmra.mrb[0].mxu0 %v4300
        %v4431 = vpop.f32.mrb[0].mxu0
        %v4432 = vadd.f32 0.0, %v4431
        %v4433 = vpop.f32.mrb[0].mxu0
        %4434 = vmatprep.mubr.f32.mxu0 0.0
        %4435 = vmatmul.mubr.f32.gmra.mrb[0].mxu0 %v4303
        %v4436 = vpop.f32.mrb[0].mxu0
        %v4437 = vadd.f32 0.0, %v4436
        %v4438 = vpop.f32.mrb[0].mxu0
        %4439 = vmatprep.mubr.f32.mxu0 0.0
        %4440 = vmatmul.mubr.f32.gmra.mrb[0].mxu0 %v4306
        %v4441 = vpop.f32.mrb[0].mxu0
        %v4442 = vadd.f32 0.0, %v4441
        %v4443 = vpop.f32.mrb[0].mxu0
        %4444 = vmatprep.mubr.f32.mxu0 0.0
        %4445 = vmatmul.mubr.f32.gmra.mrb[0].mxu0 %v4309
        %v4446 = vpop.f32.mrb[0].mxu0
        %v4447 = vadd.f32 0.0, %v4446
        %v4448 = vpop.f32.mrb[0].mxu0
        %4449 = vmatprep.mubr.f32.mxu0 0.0
        %4450 = vmatmul.mubr.f32.gmra.mrb[0].mxu0 %v4312
        %v4451 = vpop.f32.mrb[0].mxu0
        %v4452 = vadd.f32 0.0, %v4451
        %v4453 = vpop.f32.mrb[0].mxu0
        %4454 = vmatprep.mubr.f32.mxu0 0.0
        %4455 = vmatmul.mubr.f32.gmra.mrb[0].mxu0 %v4315
        %v4456 = vpop.f32.mrb[0].mxu0
        %v4457 = vadd.f32 0.0, %v4456
        %v4458 = vpop.f32.mrb[0].mxu0
        %4459 = vmatprep.mubr.f32.mxu0 0.0
        %4460 = vmatmul.mubr.f32.gmra.mrb[0].mxu0 %v4318
        %v4461 = vpop.f32.mrb[0].mxu0
        %v4462 = vadd.f32 0.0, %v4461
        %v4463 = vpop.f32.mrb[0].mxu0
        %4464 = vdwg.mxu0
        %v4466 = vsel %vm349, %v3163, 0
        %v4469 = vsel %vm349, %v3168, 0
        %v4472 = vsel %vm349, %v3316, 0
        %v4475 = vsel %vm349, %v3321, 0
        %v4478 = vsel %vm349, %v3469, 0
        %v4481 = vsel %vm349, %v3474, 0
        %v4484 = vsel %vm349, %v3622, 0
        %v4487 = vsel %vm349, %v3627, 0
        %v4490 = vsel %vm349, %v3775, 0
        %v4493 = vsel %vm349, %v3780, 0
        %v4496 = vsel %vm349, %v3928, 0
        %v4499 = vsel %vm349, %v3933, 0
        %v4502 = vsel %vm349, %v4081, 0
        %v4505 = vsel %vm349, %v4086, 0
        %v4508 = vsel %vm349, %v4234, 0
        %v4511 = vsel %vm349, %v4239, 0
        %4513 = vmatprep.subr.mxu0 0.0
        %4514 = vmatpush1.msra.mxu0 %v255
        %4515 = vmatprep.subr.mxu0 0.0
        %4516 = vmatpush1.msra.mxu0 0.0
        %4517 = vmatprep.subr.mxu0 0.0
        %4518 = vmatpush1.msra.mxu0 0.0
        %4519 = vmatprep.subr.mxu0 0.0
        %4520 = vmatpush1.msra.mxu0 0.0
        %4521 = vmatprep.subr.mxu0 0.0
        %4522 = vmatpush1.msra.mxu0 0.0
        %4523 = vmatprep.subr.mxu0 0.0
        %4524 = vmatpush1.msra.mxu0 0.0
        %4525 = vmatprep.subr.mxu0 0.0
        %4526 = vmatpush1.msra.mxu0 0.0
        %4527 = vmatprep.subr.mxu0 0.0
        %4528 = vmatpush1.msra.mxu0 0.0
        %4529 = vmatprep.subr.mxu0 0.0
        %4530 = vmatpush1.msra.mxu0 0.0
        %4531 = vmatprep.subr.mxu0 0.0
        %4532 = vmatpush1.msra.mxu0 0.0
        %4533 = vmatprep.subr.mxu0 0.0
        %4534 = vmatpush1.msra.mxu0 0.0
        %4535 = vmatprep.subr.mxu0 0.0
        %4536 = vmatpush1.msra.mxu0 0.0
        %4537 = vmatprep.subr.mxu0 0.0
        %4538 = vmatpush1.msra.mxu0 0.0
        %4539 = vmatprep.subr.mxu0 0.0
        %4540 = vmatpush1.msra.mxu0 0.0
        %4541 = vmatprep.subr.mxu0 0.0
        %4542 = vmatpush1.msra.mxu0 0.0
        %4543 = vmatprep.subr.mxu0 0.0
        %4544 = vmatpush1.msra.mxu0 0.0
        %4545 = vmatprep.subr.mxu0 0.0
        %4546 = vmatpush1.msra.mxu0 0.0
        %4547 = vmatprep.subr.mxu0 0.0
        %4548 = vmatpush1.msra.mxu0 0.0
        %4549 = vmatprep.subr.mxu0 0.0
        %4550 = vmatpush1.msra.mxu0 0.0
        %4551 = vmatprep.subr.mxu0 0.0
        %4552 = vmatpush1.msra.mxu0 0.0
        %4553 = vmatprep.subr.mxu0 0.0
        %4554 = vmatpush1.msra.mxu0 0.0
        %4555 = vmatprep.subr.mxu0 0.0
        %4556 = vmatpush1.msra.mxu0 0.0
        %4557 = vmatprep.subr.mxu0 0.0
        %4558 = vmatpush1.msra.mxu0 0.0
        %4559 = vmatprep.subr.mxu0 0.0
        %4560 = vmatpush1.msra.mxu0 0.0
        %4561 = vmatprep.subr.mxu0 0.0
        %4562 = vmatpush1.msra.mxu0 0.0
        %4563 = vmatprep.subr.mxu0 0.0
        %4564 = vmatpush1.msra.mxu0 0.0
        %4565 = vmatprep.subr.mxu0 0.0
        %4566 = vmatpush1.msra.mxu0 0.0
        %4567 = vmatprep.subr.mxu0 0.0
        %4568 = vmatpush1.msra.mxu0 0.0
        %4569 = vmatprep.subr.mxu0 0.0
        %4570 = vmatpush1.msra.mxu0 0.0
        %4571 = vmatprep.subr.mxu0 0.0
        %4572 = vmatpush1.msra.mxu0 0.0
        %4573 = vmatprep.subr.mxu0 0.0
        %4574 = vmatpush1.msra.mxu0 0.0
        %4575 = vmatprep.subr.mxu0 0.0
        %4576 = vmatpush1.msra.mxu0 0.0
        %4577 = vmatprep.mubr.f32.mxu0 0.0
        %4578 = vmatmul.mubr.f32.gmra.mrb[0].mxu0 %v4466
        %v4579 = vpop.f32.mrb[0].mxu0
        %v4580 = vadd.f32 %v4387, %v4579
        %v4581 = vpop.f32.mrb[0].mxu0
        %4582 = vmatprep.mubr.f32.mxu0 0.0
        %4583 = vmatmul.mubr.f32.gmra.mrb[0].mxu0 %v4469
        %v4584 = vpop.f32.mrb[0].mxu0
        %v4585 = vadd.f32 %v4392, %v4584
        %v4586 = vpop.f32.mrb[0].mxu0
        %4587 = vmatprep.mubr.f32.mxu0 0.0
        %4588 = vmatmul.mubr.f32.gmra.mrb[0].mxu0 %v4472
        %v4589 = vpop.f32.mrb[0].mxu0
        %v4590 = vadd.f32 %v4397, %v4589
        %v4591 = vpop.f32.mrb[0].mxu0
        %4592 = vmatprep.mubr.f32.mxu0 0.0
        %4593 = vmatmul.mubr.f32.gmra.mrb[0].mxu0 %v4475
        %v4594 = vpop.f32.mrb[0].mxu0
        %v4595 = vadd.f32 %v4402, %v4594
        %v4596 = vpop.f32.mrb[0].mxu0
        %4597 = vmatprep.mubr.f32.mxu0 0.0
        %4598 = vmatmul.mubr.f32.gmra.mrb[0].mxu0 %v4478
        %v4599 = vpop.f32.mrb[0].mxu0
        %v4600 = vadd.f32 %v4407, %v4599
        %v4601 = vpop.f32.mrb[0].mxu0
        %4602 = vmatprep.mubr.f32.mxu0 0.0
        %4603 = vmatmul.mubr.f32.gmra.mrb[0].mxu0 %v4481
        %v4604 = vpop.f32.mrb[0].mxu0
        %v4605 = vadd.f32 %v4412, %v4604
        %v4606 = vpop.f32.mrb[0].mxu0
        %4607 = vmatprep.mubr.f32.mxu0 0.0
        %4608 = vmatmul.mubr.f32.gmra.mrb[0].mxu0 %v4484
        %v4609 = vpop.f32.mrb[0].mxu0
        %v4610 = vadd.f32 %v4417, %v4609
        %v4611 = vpop.f32.mrb[0].mxu0
        %4612 = vmatprep.mubr.f32.mxu0 0.0
        %4613 = vmatmul.mubr.f32.gmra.mrb[0].mxu0 %v4487
        %v4614 = vpop.f32.mrb[0].mxu0
        %v4615 = vadd.f32 %v4422, %v4614
        %v4616 = vpop.f32.mrb[0].mxu0
        %4617 = vmatprep.mubr.f32.mxu0 0.0
        %4618 = vmatmul.mubr.f32.gmra.mrb[0].mxu0 %v4490
        %v4619 = vpop.f32.mrb[0].mxu0
        %v4620 = vadd.f32 %v4427, %v4619
        %v4621 = vpop.f32.mrb[0].mxu0
        %4622 = vmatprep.mubr.f32.mxu0 0.0
        %4623 = vmatmul.mubr.f32.gmra.mrb[0].mxu0 %v4493
        %v4624 = vpop.f32.mrb[0].mxu0
        %v4625 = vadd.f32 %v4432, %v4624
        %v4626 = vpop.f32.mrb[0].mxu0
        %4627 = vmatprep.mubr.f32.mxu0 0.0
        %4628 = vmatmul.mubr.f32.gmra.mrb[0].mxu0 %v4496
        %v4629 = vpop.f32.mrb[0].mxu0
        %v4630 = vadd.f32 %v4437, %v4629
        %v4631 = vpop.f32.mrb[0].mxu0
        %4632 = vmatprep.mubr.f32.mxu0 0.0
        %4633 = vmatmul.mubr.f32.gmra.mrb[0].mxu0 %v4499
        %v4634 = vpop.f32.mrb[0].mxu0
        %v4635 = vadd.f32 %v4442, %v4634
        %v4636 = vpop.f32.mrb[0].mxu0
        %4637 = vmatprep.mubr.f32.mxu0 0.0
        %4638 = vmatmul.mubr.f32.gmra.mrb[0].mxu0 %v4502
        %v4639 = vpop.f32.mrb[0].mxu0
        %v4640 = vadd.f32 %v4447, %v4639
        %v4641 = vpop.f32.mrb[0].mxu0
        %4642 = vmatprep.mubr.f32.mxu0 0.0
        %4643 = vmatmul.mubr.f32.gmra.mrb[0].mxu0 %v4505
        %v4644 = vpop.f32.mrb[0].mxu0
        %v4645 = vadd.f32 %v4452, %v4644
        %v4646 = vpop.f32.mrb[0].mxu0
        %4647 = vmatprep.mubr.f32.mxu0 0.0
        %4648 = vmatmul.mubr.f32.gmra.mrb[0].mxu0 %v4508
        %v4649 = vpop.f32.mrb[0].mxu0
        %v4650 = vadd.f32 %v4457, %v4649
        %v4651 = vpop.f32.mrb[0].mxu0
        %4652 = vmatprep.mubr.f32.mxu0 0.0
        %4653 = vmatmul.mubr.f32.gmra.mrb[0].mxu0 %v4511
        %v4654 = vpop.f32.mrb[0].mxu0
        %v4655 = vadd.f32 %v4462, %v4654
        %v4656 = vpop.f32.mrb[0].mxu0
        %4657 = vdwg.mxu0
        %v4659 = vsel %vm349, %v3183, 0
        %v4662 = vsel %vm349, %v3188, 0
        %v4665 = vsel %vm349, %v3336, 0
        %v4668 = vsel %vm349, %v3341, 0
        %v4671 = vsel %vm349, %v3489, 0
        %v4674 = vsel %vm349, %v3494, 0
        %v4677 = vsel %vm349, %v3642, 0
        %v4680 = vsel %vm349, %v3647, 0
        %v4683 = vsel %vm349, %v3795, 0
        %v4686 = vsel %vm349, %v3800, 0
        %v4689 = vsel %vm349, %v3948, 0
        %v4692 = vsel %vm349, %v3953, 0
        %v4695 = vsel %vm349, %v4101, 0
        %v4698 = vsel %vm349, %v4106, 0
        %v4701 = vsel %vm349, %v4254, 0
        %v4704 = vsel %vm349, %v4259, 0
        %4706 = vmatprep.subr.mxu0 0.0
        %4707 = vmatpush1.msra.mxu0 %v257
        %4708 = vmatprep.subr.mxu0 0.0
        %4709 = vmatpush1.msra.mxu0 0.0
        %4710 = vmatprep.subr.mxu0 0.0
        %4711 = vmatpush1.msra.mxu0 0.0
        %4712 = vmatprep.subr.mxu0 0.0
        %4713 = vmatpush1.msra.mxu0 0.0
        %4714 = vmatprep.subr.mxu0 0.0
        %4715 = vmatpush1.msra.mxu0 0.0
        %4716 = vmatprep.subr.mxu0 0.0
        %4717 = vmatpush1.msra.mxu0 0.0
        %4718 = vmatprep.subr.mxu0 0.0
        %4719 = vmatpush1.msra.mxu0 0.0
        %4720 = vmatprep.subr.mxu0 0.0
        %4721 = vmatpush1.msra.mxu0 0.0
        %4722 = vmatprep.subr.mxu0 0.0
        %4723 = vmatpush1.msra.mxu0 0.0
        %4724 = vmatprep.subr.mxu0 0.0
        %4725 = vmatpush1.msra.mxu0 0.0
        %4726 = vmatprep.subr.mxu0 0.0
        %4727 = vmatpush1.msra.mxu0 0.0
        %4728 = vmatprep.subr.mxu0 0.0
        %4729 = vmatpush1.msra.mxu0 0.0
        %4730 = vmatprep.subr.mxu0 0.0
        %4731 = vmatpush1.msra.mxu0 0.0
        %4732 = vmatprep.subr.mxu0 0.0
        %4733 = vmatpush1.msra.mxu0 0.0
        %4734 = vmatprep.subr.mxu0 0.0
        %4735 = vmatpush1.msra.mxu0 0.0
        %4736 = vmatprep.subr.mxu0 0.0
        %4737 = vmatpush1.msra.mxu0 0.0
        %4738 = vmatprep.subr.mxu0 0.0
        %4739 = vmatpush1.msra.mxu0 0.0
        %4740 = vmatprep.subr.mxu0 0.0
        %4741 = vmatpush1.msra.mxu0 0.0
        %4742 = vmatprep.subr.mxu0 0.0
        %4743 = vmatpush1.msra.mxu0 0.0
        %4744 = vmatprep.subr.mxu0 0.0
        %4745 = vmatpush1.msra.mxu0 0.0
        %4746 = vmatprep.subr.mxu0 0.0
        %4747 = vmatpush1.msra.mxu0 0.0
        %4748 = vmatprep.subr.mxu0 0.0
        %4749 = vmatpush1.msra.mxu0 0.0
        %4750 = vmatprep.subr.mxu0 0.0
        %4751 = vmatpush1.msra.mxu0 0.0
        %4752 = vmatprep.subr.mxu0 0.0
        %4753 = vmatpush1.msra.mxu0 0.0
        %4754 = vmatprep.subr.mxu0 0.0
        %4755 = vmatpush1.msra.mxu0 0.0
        %4756 = vmatprep.subr.mxu0 0.0
        %4757 = vmatpush1.msra.mxu0 0.0
        %4758 = vmatprep.subr.mxu0 0.0
        %4759 = vmatpush1.msra.mxu0 0.0
        %4760 = vmatprep.subr.mxu0 0.0
        %4761 = vmatpush1.msra.mxu0 0.0
        %4762 = vmatprep.subr.mxu0 0.0
        %4763 = vmatpush1.msra.mxu0 0.0
        %4764 = vmatprep.subr.mxu0 0.0
        %4765 = vmatpush1.msra.mxu0 0.0
        %4766 = vmatprep.subr.mxu0 0.0
        %4767 = vmatpush1.msra.mxu0 0.0
        %4768 = vmatprep.subr.mxu0 0.0
        %4769 = vmatpush1.msra.mxu0 0.0
        %4770 = vmatprep.mubr.f32.mxu0 0.0
        %4771 = vmatmul.mubr.f32.gmra.mrb[0].mxu0 %v4659
        %v4772 = vpop.f32.mrb[0].mxu0
        %v4773 = vadd.f32 0.0, %v4772
        %v4774 = vpop.f32.mrb[0].mxu0
        %4775 = vmatprep.mubr.f32.mxu0 0.0
        %4776 = vmatmul.mubr.f32.gmra.mrb[0].mxu0 %v4662
        %v4777 = vpop.f32.mrb[0].mxu0
        %v4778 = vadd.f32 0.0, %v4777
        %v4779 = vpop.f32.mrb[0].mxu0
        %4780 = vmatprep.mubr.f32.mxu0 0.0
        %4781 = vmatmul.mubr.f32.gmra.mrb[0].mxu0 %v4665
        %v4782 = vpop.f32.mrb[0].mxu0
        %v4783 = vadd.f32 0.0, %v4782
        %v4784 = vpop.f32.mrb[0].mxu0
        %4785 = vmatprep.mubr.f32.mxu0 0.0
        %4786 = vmatmul.mubr.f32.gmra.mrb[0].mxu0 %v4668
        %v4787 = vpop.f32.mrb[0].mxu0
        %v4788 = vadd.f32 0.0, %v4787
        %v4789 = vpop.f32.mrb[0].mxu0
        %4790 = vmatprep.mubr.f32.mxu0 0.0
        %4791 = vmatmul.mubr.f32.gmra.mrb[0].mxu0 %v4671
        %v4792 = vpop.f32.mrb[0].mxu0
        %v4793 = vadd.f32 0.0, %v4792
        %v4794 = vpop.f32.mrb[0].mxu0
        %4795 = vmatprep.mubr.f32.mxu0 0.0
        %4796 = vmatmul.mubr.f32.gmra.mrb[0].mxu0 %v4674
        %v4797 = vpop.f32.mrb[0].mxu0
        %v4798 = vadd.f32 0.0, %v4797
        %v4799 = vpop.f32.mrb[0].mxu0
        %4800 = vmatprep.mubr.f32.mxu0 0.0
        %4801 = vmatmul.mubr.f32.gmra.mrb[0].mxu0 %v4677
        %v4802 = vpop.f32.mrb[0].mxu0
        %v4803 = vadd.f32 0.0, %v4802
        %v4804 = vpop.f32.mrb[0].mxu0
        %4805 = vmatprep.mubr.f32.mxu0 0.0
        %4806 = vmatmul.mubr.f32.gmra.mrb[0].mxu0 %v4680
        %v4807 = vpop.f32.mrb[0].mxu0
        %v4808 = vadd.f32 0.0, %v4807
        %v4809 = vpop.f32.mrb[0].mxu0
        %4810 = vmatprep.mubr.f32.mxu0 0.0
        %4811 = vmatmul.mubr.f32.gmra.mrb[0].mxu0 %v4683
        %v4812 = vpop.f32.mrb[0].mxu0
        %v4813 = vadd.f32 0.0, %v4812
        %v4814 = vpop.f32.mrb[0].mxu0
        %4815 = vmatprep.mubr.f32.mxu0 0.0
        %4816 = vmatmul.mubr.f32.gmra.mrb[0].mxu0 %v4686
        %v4817 = vpop.f32.mrb[0].mxu0
        %v4818 = vadd.f32 0.0, %v4817
        %v4819 = vpop.f32.mrb[0].mxu0
        %4820 = vmatprep.mubr.f32.mxu0 0.0
        %4821 = vmatmul.mubr.f32.gmra.mrb[0].mxu0 %v4689
        %v4822 = vpop.f32.mrb[0].mxu0
        %v4823 = vadd.f32 0.0, %v4822
        %v4824 = vpop.f32.mrb[0].mxu0
        %4825 = vmatprep.mubr.f32.mxu0 0.0
        %4826 = vmatmul.mubr.f32.gmra.mrb[0].mxu0 %v4692
        %v4827 = vpop.f32.mrb[0].mxu0
        %v4828 = vadd.f32 0.0, %v4827
        %v4829 = vpop.f32.mrb[0].mxu0
        %4830 = vmatprep.mubr.f32.mxu0 0.0
        %4831 = vmatmul.mubr.f32.gmra.mrb[0].mxu0 %v4695
        %v4832 = vpop.f32.mrb[0].mxu0
        %v4833 = vadd.f32 0.0, %v4832
        %v4834 = vpop.f32.mrb[0].mxu0
        %4835 = vmatprep.mubr.f32.mxu0 0.0
        %4836 = vmatmul.mubr.f32.gmra.mrb[0].mxu0 %v4698
        %v4837 = vpop.f32.mrb[0].mxu0
        %v4838 = vadd.f32 0.0, %v4837
        %v4839 = vpop.f32.mrb[0].mxu0
        %4840 = vmatprep.mubr.f32.mxu0 0.0
        %4841 = vmatmul.mubr.f32.gmra.mrb[0].mxu0 %v4701
        %v4842 = vpop.f32.mrb[0].mxu0
        %v4843 = vadd.f32 0.0, %v4842
        %v4844 = vpop.f32.mrb[0].mxu0
        %4845 = vmatprep.mubr.f32.mxu0 0.0
        %4846 = vmatmul.mubr.f32.gmra.mrb[0].mxu0 %v4704
        %v4847 = vpop.f32.mrb[0].mxu0
        %v4848 = vadd.f32 0.0, %v4847
        %v4849 = vpop.f32.mrb[0].mxu0
        %4850 = vdwg.mxu0
        %v4851 = vadd.f32 %v4580, %v4773
        %v4852 = vadd.f32 %v4585, %v4778
        %v4853 = vadd.f32 %v4590, %v4783
        %v4854 = vadd.f32 %v4595, %v4788
        %v4855 = vadd.f32 %v4600, %v4793
        %v4856 = vadd.f32 %v4605, %v4798
        %v4857 = vadd.f32 %v4610, %v4803
        %v4858 = vadd.f32 %v4615, %v4808
        %v4859 = vadd.f32 %v4620, %v4813
        %v4860 = vadd.f32 %v4625, %v4818
        %v4861 = vadd.f32 %v4630, %v4823
        %v4862 = vadd.f32 %v4635, %v4828
        %v4863 = vadd.f32 %v4640, %v4833
        %v4864 = vadd.f32 %v4645, %v4838
        %v4865 = vadd.f32 %v4650, %v4843
        %v4866 = vadd.f32 %v4655, %v4848
        %v4868 = vsel %vm349, %v3193, 0
        %v4871 = vsel %vm349, %v3198, 0
        %v4874 = vsel %vm349, %v3346, 0
        %v4877 = vsel %vm349, %v3351, 0
        %v4880 = vsel %vm349, %v3499, 0
        %v4883 = vsel %vm349, %v3504, 0
        %v4886 = vsel %vm349, %v3652, 0
        %v4889 = vsel %vm349, %v3657, 0
        %v4892 = vsel %vm349, %v3805, 0
        %v4895 = vsel %vm349, %v3810, 0
        %v4898 = vsel %vm349, %v3958, 0
        %v4901 = vsel %vm349, %v3963, 0
        %v4904 = vsel %vm349, %v4111, 0
        %v4907 = vsel %vm349, %v4116, 0
        %v4910 = vsel %vm349, %v4264, 0
        %v4913 = vsel %vm349, %v4269, 0
        %4915 = vmatprep.subr.mxu0 0.0
        %4916 = vmatpush1.msra.mxu0 %v258
        %4917 = vmatprep.subr.mxu0 0.0
        %4918 = vmatpush1.msra.mxu0 0.0
        %4919 = vmatprep.subr.mxu0 0.0
        %4920 = vmatpush1.msra.mxu0 0.0
        %4921 = vmatprep.subr.mxu0 0.0
        %4922 = vmatpush1.msra.mxu0 0.0
        %4923 = vmatprep.subr.mxu0 0.0
        %4924 = vmatpush1.msra.mxu0 0.0
        %4925 = vmatprep.subr.mxu0 0.0
        %4926 = vmatpush1.msra.mxu0 0.0
        %4927 = vmatprep.subr.mxu0 0.0
        %4928 = vmatpush1.msra.mxu0 0.0
        %4929 = vmatprep.subr.mxu0 0.0
        %4930 = vmatpush1.msra.mxu0 0.0
        %4931 = vmatprep.subr.mxu0 0.0
        %4932 = vmatpush1.msra.mxu0 0.0
        %4933 = vmatprep.subr.mxu0 0.0
        %4934 = vmatpush1.msra.mxu0 0.0
        %4935 = vmatprep.subr.mxu0 0.0
        %4936 = vmatpush1.msra.mxu0 0.0
        %4937 = vmatprep.subr.mxu0 0.0
        %4938 = vmatpush1.msra.mxu0 0.0
        %4939 = vmatprep.subr.mxu0 0.0
        %4940 = vmatpush1.msra.mxu0 0.0
        %4941 = vmatprep.subr.mxu0 0.0
        %4942 = vmatpush1.msra.mxu0 0.0
        %4943 = vmatprep.subr.mxu0 0.0
        %4944 = vmatpush1.msra.mxu0 0.0
        %4945 = vmatprep.subr.mxu0 0.0
        %4946 = vmatpush1.msra.mxu0 0.0
        %4947 = vmatprep.subr.mxu0 0.0
        %4948 = vmatpush1.msra.mxu0 0.0
        %4949 = vmatprep.subr.mxu0 0.0
        %4950 = vmatpush1.msra.mxu0 0.0
        %4951 = vmatprep.subr.mxu0 0.0
        %4952 = vmatpush1.msra.mxu0 0.0
        %4953 = vmatprep.subr.mxu0 0.0
        %4954 = vmatpush1.msra.mxu0 0.0
        %4955 = vmatprep.subr.mxu0 0.0
        %4956 = vmatpush1.msra.mxu0 0.0
        %4957 = vmatprep.subr.mxu0 0.0
        %4958 = vmatpush1.msra.mxu0 0.0
        %4959 = vmatprep.subr.mxu0 0.0
        %4960 = vmatpush1.msra.mxu0 0.0
        %4961 = vmatprep.subr.mxu0 0.0
        %4962 = vmatpush1.msra.mxu0 0.0
        %4963 = vmatprep.subr.mxu0 0.0
        %4964 = vmatpush1.msra.mxu0 0.0
        %4965 = vmatprep.subr.mxu0 0.0
        %4966 = vmatpush1.msra.mxu0 0.0
        %4967 = vmatprep.subr.mxu0 0.0
        %4968 = vmatpush1.msra.mxu0 0.0
        %4969 = vmatprep.subr.mxu0 0.0
        %4970 = vmatpush1.msra.mxu0 0.0
        %4971 = vmatprep.subr.mxu0 0.0
        %4972 = vmatpush1.msra.mxu0 0.0
        %4973 = vmatprep.subr.mxu0 0.0
        %4974 = vmatpush1.msra.mxu0 0.0
        %4975 = vmatprep.subr.mxu0 0.0
        %4976 = vmatpush1.msra.mxu0 0.0
        %4977 = vmatprep.subr.mxu0 0.0
        %4978 = vmatpush1.msra.mxu0 0.0
        %4979 = vmatprep.mubr.f32.mxu0 0.0
        %4980 = vmatmul.mubr.f32.gmra.mrb[0].mxu0 %v4868
        %v4981 = vpop.f32.mrb[0].mxu0
        %v4982 = vadd.f32 0.0, %v4981
        %v4983 = vpop.f32.mrb[0].mxu0
        %4984 = vmatprep.mubr.f32.mxu0 0.0
        %4985 = vmatmul.mubr.f32.gmra.mrb[0].mxu0 %v4871
        %v4986 = vpop.f32.mrb[0].mxu0
        %v4987 = vadd.f32 0.0, %v4986
        %v4988 = vpop.f32.mrb[0].mxu0
        %4989 = vmatprep.mubr.f32.mxu0 0.0
        %4990 = vmatmul.mubr.f32.gmra.mrb[0].mxu0 %v4874
        %v4991 = vpop.f32.mrb[0].mxu0
        %v4992 = vadd.f32 0.0, %v4991
        %v4993 = vpop.f32.mrb[0].mxu0
        %4994 = vmatprep.mubr.f32.mxu0 0.0
        %4995 = vmatmul.mubr.f32.gmra.mrb[0].mxu0 %v4877
        %v4996 = vpop.f32.mrb[0].mxu0
        %v4997 = vadd.f32 0.0, %v4996
        %v4998 = vpop.f32.mrb[0].mxu0
        %4999 = vmatprep.mubr.f32.mxu0 0.0
        %5000 = vmatmul.mubr.f32.gmra.mrb[0].mxu0 %v4880
        %v5001 = vpop.f32.mrb[0].mxu0
        %v5002 = vadd.f32 0.0, %v5001
        %v5003 = vpop.f32.mrb[0].mxu0
        %5004 = vmatprep.mubr.f32.mxu0 0.0
        %5005 = vmatmul.mubr.f32.gmra.mrb[0].mxu0 %v4883
        %v5006 = vpop.f32.mrb[0].mxu0
        %v5007 = vadd.f32 0.0, %v5006
        %v5008 = vpop.f32.mrb[0].mxu0
        %5009 = vmatprep.mubr.f32.mxu0 0.0
        %5010 = vmatmul.mubr.f32.gmra.mrb[0].mxu0 %v4886
        %v5011 = vpop.f32.mrb[0].mxu0
        %v5012 = vadd.f32 0.0, %v5011
        %v5013 = vpop.f32.mrb[0].mxu0
        %5014 = vmatprep.mubr.f32.mxu0 0.0
        %5015 = vmatmul.mubr.f32.gmra.mrb[0].mxu0 %v4889
        %v5016 = vpop.f32.mrb[0].mxu0
        %v5017 = vadd.f32 0.0, %v5016
        %v5018 = vpop.f32.mrb[0].mxu0
        %5019 = vmatprep.mubr.f32.mxu0 0.0
        %5020 = vmatmul.mubr.f32.gmra.mrb[0].mxu0 %v4892
        %v5021 = vpop.f32.mrb[0].mxu0
        %v5022 = vadd.f32 0.0, %v5021
        %v5023 = vpop.f32.mrb[0].mxu0
        %5024 = vmatprep.mubr.f32.mxu0 0.0
        %5025 = vmatmul.mubr.f32.gmra.mrb[0].mxu0 %v4895
        %v5026 = vpop.f32.mrb[0].mxu0
        %v5027 = vadd.f32 0.0, %v5026
        %v5028 = vpop.f32.mrb[0].mxu0
        %5029 = vmatprep.mubr.f32.mxu0 0.0
        %5030 = vmatmul.mubr.f32.gmra.mrb[0].mxu0 %v4898
        %v5031 = vpop.f32.mrb[0].mxu0
        %v5032 = vadd.f32 0.0, %v5031
        %v5033 = vpop.f32.mrb[0].mxu0
        %5034 = vmatprep.mubr.f32.mxu0 0.0
        %5035 = vmatmul.mubr.f32.gmra.mrb[0].mxu0 %v4901
        %v5036 = vpop.f32.mrb[0].mxu0
        %v5037 = vadd.f32 0.0, %v5036
        %v5038 = vpop.f32.mrb[0].mxu0
        %5039 = vmatprep.mubr.f32.mxu0 0.0
        %5040 = vmatmul.mubr.f32.gmra.mrb[0].mxu0 %v4904
        %v5041 = vpop.f32.mrb[0].mxu0
        %v5042 = vadd.f32 0.0, %v5041
        %v5043 = vpop.f32.mrb[0].mxu0
        %5044 = vmatprep.mubr.f32.mxu0 0.0
        %5045 = vmatmul.mubr.f32.gmra.mrb[0].mxu0 %v4907
        %v5046 = vpop.f32.mrb[0].mxu0
        %v5047 = vadd.f32 0.0, %v5046
        %v5048 = vpop.f32.mrb[0].mxu0
        %5049 = vmatprep.mubr.f32.mxu0 0.0
        %5050 = vmatmul.mubr.f32.gmra.mrb[0].mxu0 %v4910
        %v5051 = vpop.f32.mrb[0].mxu0
        %v5052 = vadd.f32 0.0, %v5051
        %v5053 = vpop.f32.mrb[0].mxu0
        %5054 = vmatprep.mubr.f32.mxu0 0.0
        %5055 = vmatmul.mubr.f32.gmra.mrb[0].mxu0 %v4913
        %v5056 = vpop.f32.mrb[0].mxu0
        %v5057 = vadd.f32 0.0, %v5056
        %v5058 = vpop.f32.mrb[0].mxu0
        %5059 = vdwg.mxu0
        %v5060 = vadd.f32 %v4851, %v4982
        %v5061 = vadd.f32 %v4852, %v4987
        %v5062 = vadd.f32 %v4853, %v4992
        %v5063 = vadd.f32 %v4854, %v4997
        %v5064 = vadd.f32 %v4855, %v5002
        %v5065 = vadd.f32 %v4856, %v5007
        %v5066 = vadd.f32 %v4857, %v5012
        %v5067 = vadd.f32 %v4858, %v5017
        %v5068 = vadd.f32 %v4859, %v5022
        %v5069 = vadd.f32 %v4860, %v5027
        %v5070 = vadd.f32 %v4861, %v5032
        %v5071 = vadd.f32 %v4862, %v5037
        %v5072 = vadd.f32 %v4863, %v5042
        %v5073 = vadd.f32 %v4864, %v5047
        %v5074 = vadd.f32 %v4865, %v5052
        %v5075 = vadd.f32 %v4866, %v5057
        %v5076 = vlaneseq
        %v5077 = vshrl.u32 %v5076, 7
        %v5078 = vsub.s32 0, %v5077
        %v5079 = vrot.slane %v268, %v5078
        %v5080 = vadd.f32 %v5060, %v5079
        %v5081 = vadd.f32 %v5061, %v5079
        %v5082 = vadd.f32 %v5062, %v5079
        %v5083 = vadd.f32 %v5063, %v5079
        %v5084 = vadd.f32 %v5064, %v5079
        %v5085 = vadd.f32 %v5065, %v5079
        %v5086 = vadd.f32 %v5066, %v5079
        %v5087 = vadd.f32 %v5067, %v5079
        %v5088 = vadd.f32 %v5068, %v5079
        %v5089 = vadd.f32 %v5069, %v5079
        %v5090 = vadd.f32 %v5070, %v5079
        %v5091 = vadd.f32 %v5071, %v5079
        %v5092 = vadd.f32 %v5072, %v5079
        %v5093 = vadd.f32 %v5073, %v5079
        %v5094 = vadd.f32 %v5074, %v5079
        %v5095 = vadd.f32 %v5075, %v5079
        %v5096 = vld [vmem:[%s251] sm:$0xff]
        %v5097 = vld [vmem:[%s251 + $0x8] sm:$0xff]
        %v5098 = vld [vmem:[%s251 + $0x10] sm:$0xff]
        %v5099 = vld [vmem:[%s251 + $0x18] sm:$0xff]
        %v5100 = vld [vmem:[%s251 + $0x20] sm:$0xff]
        %v5101 = vld [vmem:[%s251 + $0x28] sm:$0xff]
        %v5102 = vld [vmem:[%s251 + $0x30] sm:$0xff]
        %v5103 = vld [vmem:[%s251 + $0x38] sm:$0xff]
        %v5104 = vld [vmem:[%s251 + $0x40] sm:$0xff]
        %v5105 = vld [vmem:[%s251 + $0x48] sm:$0xff]
        %v5106 = vld [vmem:[%s251 + $0x50] sm:$0xff]
        %v5107 = vld [vmem:[%s251 + $0x58] sm:$0xff]
        %v5108 = vld [vmem:[%s251 + $0x60] sm:$0xff]
        %v5109 = vld [vmem:[%s251 + $0x68] sm:$0xff]
        %v5110 = vld [vmem:[%s251 + $0x70] sm:$0xff]
        %v5111 = vld [vmem:[%s251 + $0x78] sm:$0xff]
        %v5112 = vadd.f32 %v5080, %v5096
        %v5113 = vadd.f32 %v5081, %v5097
        %v5114 = vadd.f32 %v5082, %v5098
        %v5115 = vadd.f32 %v5083, %v5099
        %v5116 = vadd.f32 %v5084, %v5100
        %v5117 = vadd.f32 %v5085, %v5101
        %v5118 = vadd.f32 %v5086, %v5102
        %v5119 = vadd.f32 %v5087, %v5103
        %v5120 = vadd.f32 %v5088, %v5104
        %v5121 = vadd.f32 %v5089, %v5105
        %v5122 = vadd.f32 %v5090, %v5106
        %v5123 = vadd.f32 %v5091, %v5107
        %v5124 = vadd.f32 %v5092, %v5108
        %v5125 = vadd.f32 %v5093, %v5109
        %v5126 = vadd.f32 %v5094, %v5110
        %v5127 = vadd.f32 %v5095, %v5111
        %vm5128 = vcmask 261120
        %v5129 = vsel %vm5128, %v5112, 0.0
        %5130 = vadd.xlane.f32.xlu0 %v5129
        %v5131 = vpop.xlane.xlu0 %5130
        %v5132 = vsel %vm5128, %v5113, 0.0
        %5133 = vadd.xlane.f32.xlu0 %v5132
        %v5134 = vpop.xlane.xlu0 %5133
        %v5135 = vsel %vm5128, %v5114, 0.0
        %5136 = vadd.xlane.f32.xlu0 %v5135
        %v5137 = vpop.xlane.xlu0 %5136
        %v5138 = vsel %vm5128, %v5115, 0.0
        %5139 = vadd.xlane.f32.xlu0 %v5138
        %v5140 = vpop.xlane.xlu0 %5139
        %v5141 = vsel %vm5128, %v5116, 0.0
        %5142 = vadd.xlane.f32.xlu0 %v5141
        %v5143 = vpop.xlane.xlu0 %5142
        %v5144 = vsel %vm5128, %v5117, 0.0
        %5145 = vadd.xlane.f32.xlu0 %v5144
        %v5146 = vpop.xlane.xlu0 %5145
        %v5147 = vsel %vm5128, %v5118, 0.0
        %5148 = vadd.xlane.f32.xlu0 %v5147
        %v5149 = vpop.xlane.xlu0 %5148
        %v5150 = vsel %vm5128, %v5119, 0.0
        %5151 = vadd.xlane.f32.xlu0 %v5150
        %v5152 = vpop.xlane.xlu0 %5151
        %v5153 = vsel %vm5128, %v5120, 0.0
        %5154 = vadd.xlane.f32.xlu0 %v5153
        %v5155 = vpop.xlane.xlu0 %5154
        %v5156 = vsel %vm5128, %v5121, 0.0
        %5157 = vadd.xlane.f32.xlu0 %v5156
        %v5158 = vpop.xlane.xlu0 %5157
        %v5159 = vsel %vm5128, %v5122, 0.0
        %5160 = vadd.xlane.f32.xlu0 %v5159
        %v5161 = vpop.xlane.xlu0 %5160
        %v5162 = vsel %vm5128, %v5123, 0.0
        %5163 = vadd.xlane.f32.xlu0 %v5162
        %v5164 = vpop.xlane.xlu0 %5163
        %v5165 = vsel %vm5128, %v5124, 0.0
        %5166 = vadd.xlane.f32.xlu0 %v5165
        %v5167 = vpop.xlane.xlu0 %5166
        %v5168 = vsel %vm5128, %v5125, 0.0
        %5169 = vadd.xlane.f32.xlu0 %v5168
        %v5170 = vpop.xlane.xlu0 %5169
        %v5171 = vsel %vm5128, %v5126, 0.0
        %5172 = vadd.xlane.f32.xlu0 %v5171
        %v5173 = vpop.xlane.xlu0 %5172
        %v5174 = vsel %vm5128, %v5127, 0.0
        %5175 = vadd.xlane.f32.xlu0 %v5174
        %v5176 = vpop.xlane.xlu0 %5175
        %v5177 = vrcp.pop 32.0
        %v5178 = vmul.f32 %v5131, %v5177
        %v5179 = vmul.f32 %v5134, %v5177
        %v5180 = vmul.f32 %v5137, %v5177
        %v5181 = vmul.f32 %v5140, %v5177
        %v5182 = vmul.f32 %v5143, %v5177
        %v5183 = vmul.f32 %v5146, %v5177
        %v5184 = vmul.f32 %v5149, %v5177
        %v5185 = vmul.f32 %v5152, %v5177
        %v5186 = vmul.f32 %v5155, %v5177
        %v5187 = vmul.f32 %v5158, %v5177
        %v5188 = vmul.f32 %v5161, %v5177
        %v5189 = vmul.f32 %v5164, %v5177
        %v5190 = vmul.f32 %v5167, %v5177
        %v5191 = vmul.f32 %v5170, %v5177
        %v5192 = vmul.f32 %v5173, %v5177
        %v5193 = vmul.f32 %v5176, %v5177
        %v5194 = vsub.f32 %v5112, %v5178
        %v5195 = vsub.f32 %v5113, %v5179
        %v5196 = vsub.f32 %v5114, %v5180
        %v5197 = vsub.f32 %v5115, %v5181
        %v5198 = vsub.f32 %v5116, %v5182
        %v5199 = vsub.f32 %v5117, %v5183
        %v5200 = vsub.f32 %v5118, %v5184
        %v5201 = vsub.f32 %v5119, %v5185
        %v5202 = vsub.f32 %v5120, %v5186
        %v5203 = vsub.f32 %v5121, %v5187
        %v5204 = vsub.f32 %v5122, %v5188
        %v5205 = vsub.f32 %v5123, %v5189
        %v5206 = vsub.f32 %v5124, %v5190
        %v5207 = vsub.f32 %v5125, %v5191
        %v5208 = vsub.f32 %v5126, %v5192
        %v5209 = vsub.f32 %v5127, %v5193
        %v5210 = vmul.f32 %v5194, %v5194
        %v5211 = vmul.f32 %v5195, %v5195
        %v5212 = vmul.f32 %v5196, %v5196
        %v5213 = vmul.f32 %v5197, %v5197
        %v5214 = vmul.f32 %v5198, %v5198
        %v5215 = vmul.f32 %v5199, %v5199
        %v5216 = vmul.f32 %v5200, %v5200
        %v5217 = vmul.f32 %v5201, %v5201
        %v5218 = vmul.f32 %v5202, %v5202
        %v5219 = vmul.f32 %v5203, %v5203
        %v5220 = vmul.f32 %v5204, %v5204
        %v5221 = vmul.f32 %v5205, %v5205
        %v5222 = vmul.f32 %v5206, %v5206
        %v5223 = vmul.f32 %v5207, %v5207
        %v5224 = vmul.f32 %v5208, %v5208
        %v5225 = vmul.f32 %v5209, %v5209
        %v5226 = vsel %vm5128, %v5210, 0.0
        %5227 = vadd.xlane.f32.xlu0 %v5226
        %v5228 = vpop.xlane.xlu0 %5227
        %v5229 = vsel %vm5128, %v5211, 0.0
        %5230 = vadd.xlane.f32.xlu0 %v5229
        %v5231 = vpop.xlane.xlu0 %5230
        %v5232 = vsel %vm5128, %v5212, 0.0
        %5233 = vadd.xlane.f32.xlu0 %v5232
        %v5234 = vpop.xlane.xlu0 %5233
        %v5235 = vsel %vm5128, %v5213, 0.0
        %5236 = vadd.xlane.f32.xlu0 %v5235
        %v5237 = vpop.xlane.xlu0 %5236
        %v5238 = vsel %vm5128, %v5214, 0.0
        %5239 = vadd.xlane.f32.xlu0 %v5238
        %v5240 = vpop.xlane.xlu0 %5239
        %v5241 = vsel %vm5128, %v5215, 0.0
        %5242 = vadd.xlane.f32.xlu0 %v5241
        %v5243 = vpop.xlane.xlu0 %5242
        %v5244 = vsel %vm5128, %v5216, 0.0
        %5245 = vadd.xlane.f32.xlu0 %v5244
        %v5246 = vpop.xlane.xlu0 %5245
        %v5247 = vsel %vm5128, %v5217, 0.0
        %5248 = vadd.xlane.f32.xlu0 %v5247
        %v5249 = vpop.xlane.xlu0 %5248
        %v5250 = vsel %vm5128, %v5218, 0.0
        %5251 = vadd.xlane.f32.xlu0 %v5250
        %v5252 = vpop.xlane.xlu0 %5251
        %v5253 = vsel %vm5128, %v5219, 0.0
        %5254 = vadd.xlane.f32.xlu0 %v5253
        %v5255 = vpop.xlane.xlu0 %5254
        %v5256 = vsel %vm5128, %v5220, 0.0
        %5257 = vadd.xlane.f32.xlu0 %v5256
        %v5258 = vpop.xlane.xlu0 %5257
        %v5259 = vsel %vm5128, %v5221, 0.0
        %5260 = vadd.xlane.f32.xlu0 %v5259
        %v5261 = vpop.xlane.xlu0 %5260
        %v5262 = vsel %vm5128, %v5222, 0.0
        %5263 = vadd.xlane.f32.xlu0 %v5262
        %v5264 = vpop.xlane.xlu0 %5263
        %v5265 = vsel %vm5128, %v5223, 0.0
        %5266 = vadd.xlane.f32.xlu0 %v5265
        %v5267 = vpop.xlane.xlu0 %5266
        %v5268 = vsel %vm5128, %v5224, 0.0
        %5269 = vadd.xlane.f32.xlu0 %v5268
        %v5270 = vpop.xlane.xlu0 %5269
        %v5271 = vsel %vm5128, %v5225, 0.0
        %5272 = vadd.xlane.f32.xlu0 %v5271
        %v5273 = vpop.xlane.xlu0 %5272
        %v5274 = vmul.f32 %v5228, %v5177
        %v5275 = vmul.f32 %v5231, %v5177
        %v5276 = vmul.f32 %v5234, %v5177
        %v5277 = vmul.f32 %v5237, %v5177
        %v5278 = vmul.f32 %v5240, %v5177
        %v5279 = vmul.f32 %v5243, %v5177
        %v5280 = vmul.f32 %v5246, %v5177
        %v5281 = vmul.f32 %v5249, %v5177
        %v5282 = vmul.f32 %v5252, %v5177
        %v5283 = vmul.f32 %v5255, %v5177
        %v5284 = vmul.f32 %v5258, %v5177
        %v5285 = vmul.f32 %v5261, %v5177
        %v5286 = vmul.f32 %v5264, %v5177
        %v5287 = vmul.f32 %v5267, %v5177
        %v5288 = vmul.f32 %v5270, %v5177
        %v5289 = vmul.f32 %v5273, %v5177
        %v5290 = vadd.f32 %v5274, 1e-05
        %v5291 = vadd.f32 %v5275, 1e-05
        %v5292 = vadd.f32 %v5276, 1e-05
        %v5293 = vadd.f32 %v5277, 1e-05
        %v5294 = vadd.f32 %v5278, 1e-05
        %v5295 = vadd.f32 %v5279, 1e-05
        %v5296 = vadd.f32 %v5280, 1e-05
        %v5297 = vadd.f32 %v5281, 1e-05
        %v5298 = vadd.f32 %v5282, 1e-05
        %v5299 = vadd.f32 %v5283, 1e-05
        %v5300 = vadd.f32 %v5284, 1e-05
        %v5301 = vadd.f32 %v5285, 1e-05
        %v5302 = vadd.f32 %v5286, 1e-05
        %v5303 = vadd.f32 %v5287, 1e-05
        %v5304 = vadd.f32 %v5288, 1e-05
        %v5305 = vadd.f32 %v5289, 1e-05
        %v5306 = vrsqrt.pop %v5290
        %v5307 = vrsqrt.pop %v5291
        %v5308 = vrsqrt.pop %v5292
        %v5309 = vrsqrt.pop %v5293
        %v5310 = vrsqrt.pop %v5294
        %v5311 = vrsqrt.pop %v5295
        %v5312 = vrsqrt.pop %v5296
        %v5313 = vrsqrt.pop %v5297
        %v5314 = vrsqrt.pop %v5298
        %v5315 = vrsqrt.pop %v5299
        %v5316 = vrsqrt.pop %v5300
        %v5317 = vrsqrt.pop %v5301
        %v5318 = vrsqrt.pop %v5302
        %v5319 = vrsqrt.pop %v5303
        %v5320 = vrsqrt.pop %v5304
        %v5321 = vrsqrt.pop %v5305
        %v5322 = vmul.f32 %v5194, %v5306
        %v5323 = vmul.f32 %v5195, %v5307
        %v5324 = vmul.f32 %v5196, %v5308
        %v5325 = vmul.f32 %v5197, %v5309
        %v5326 = vmul.f32 %v5198, %v5310
        %v5327 = vmul.f32 %v5199, %v5311
        %v5328 = vmul.f32 %v5200, %v5312
        %v5329 = vmul.f32 %v5201, %v5313
        %v5330 = vmul.f32 %v5202, %v5314
        %v5331 = vmul.f32 %v5203, %v5315
        %v5332 = vmul.f32 %v5204, %v5316
        %v5333 = vmul.f32 %v5205, %v5317
        %v5334 = vmul.f32 %v5206, %v5318
        %v5335 = vmul.f32 %v5207, %v5319
        %v5336 = vmul.f32 %v5208, %v5320
        %v5337 = vmul.f32 %v5209, %v5321
        %v5338 = vlaneseq
        %v5339 = vshrl.u32 %v5338, 7
        %v5340 = vsub.s32 0, %v5339
        %v5341 = vrot.slane %v269, %v5340
        %v5342 = vmul.f32 %v5322, %v5341
        %v5343 = vmul.f32 %v5323, %v5341
        %v5344 = vmul.f32 %v5324, %v5341
        %v5345 = vmul.f32 %v5325, %v5341
        %v5346 = vmul.f32 %v5326, %v5341
        %v5347 = vmul.f32 %v5327, %v5341
        %v5348 = vmul.f32 %v5328, %v5341
        %v5349 = vmul.f32 %v5329, %v5341
        %v5350 = vmul.f32 %v5330, %v5341
        %v5351 = vmul.f32 %v5331, %v5341
        %v5352 = vmul.f32 %v5332, %v5341
        %v5353 = vmul.f32 %v5333, %v5341
        %v5354 = vmul.f32 %v5334, %v5341
        %v5355 = vmul.f32 %v5335, %v5341
        %v5356 = vmul.f32 %v5336, %v5341
        %v5357 = vmul.f32 %v5337, %v5341
        %v5358 = vlaneseq
        %v5359 = vshrl.u32 %v5358, 7
        %v5360 = vsub.s32 0, %v5359
        %v5361 = vrot.slane %v270, %v5360
        %v5362 = vadd.f32 %v5342, %v5361
        %v5363 = vadd.f32 %v5343, %v5361
        %v5364 = vadd.f32 %v5344, %v5361
        %v5365 = vadd.f32 %v5345, %v5361
        %v5366 = vadd.f32 %v5346, %v5361
        %v5367 = vadd.f32 %v5347, %v5361
        %v5368 = vadd.f32 %v5348, %v5361
        %v5369 = vadd.f32 %v5349, %v5361
        %v5370 = vadd.f32 %v5350, %v5361
        %v5371 = vadd.f32 %v5351, %v5361
        %v5372 = vadd.f32 %v5352, %v5361
        %v5373 = vadd.f32 %v5353, %v5361
        %v5374 = vadd.f32 %v5354, %v5361
        %v5375 = vadd.f32 %v5355, %v5361
        %v5376 = vadd.f32 %v5356, %v5361
        %v5377 = vadd.f32 %v5357, %v5361
        %v5378 = vlaneseq
        %v5379 = vshrl.u32 %v5378, 7
        %v5380 = vsub.s32 0, %v5379
        %v5381 = vrot.slane %v271, %v5380
        %v5383 = vsel %vm5128, %v5362, 0
        %v5386 = vsel %vm5128, %v5363, 0
        %v5389 = vsel %vm5128, %v5364, 0
        %v5392 = vsel %vm5128, %v5365, 0
        %v5395 = vsel %vm5128, %v5366, 0
        %v5398 = vsel %vm5128, %v5367, 0
        %v5401 = vsel %vm5128, %v5368, 0
        %v5404 = vsel %vm5128, %v5369, 0
        %v5407 = vsel %vm5128, %v5370, 0
        %v5410 = vsel %vm5128, %v5371, 0
        %v5413 = vsel %vm5128, %v5372, 0
        %v5416 = vsel %vm5128, %v5373, 0
        %v5419 = vsel %vm5128, %v5374, 0
        %v5422 = vsel %vm5128, %v5375, 0
        %v5425 = vsel %vm5128, %v5376, 0
        %v5428 = vsel %vm5128, %v5377, 0
        %5430 = vmatprep.subr.mxu0 0.0
        %5431 = vmatpush1.msra.mxu0 %v259
        %5432 = vmatprep.subr.mxu0 0.0
        %5433 = vmatpush1.msra.mxu0 %v260
        %5434 = vmatprep.subr.mxu0 0.0
        %5435 = vmatpush1.msra.mxu0 %v261
        %5436 = vmatprep.subr.mxu0 0.0
        %5437 = vmatpush1.msra.mxu0 %v262
        %5438 = vmatprep.subr.mxu0 0.0
        %5439 = vmatpush1.msra.mxu0 0.0
        %5440 = vmatprep.subr.mxu0 0.0
        %5441 = vmatpush1.msra.mxu0 0.0
        %5442 = vmatprep.subr.mxu0 0.0
        %5443 = vmatpush1.msra.mxu0 0.0
        %5444 = vmatprep.subr.mxu0 0.0
        %5445 = vmatpush1.msra.mxu0 0.0
        %5446 = vmatprep.subr.mxu0 0.0
        %5447 = vmatpush1.msra.mxu0 0.0
        %5448 = vmatprep.subr.mxu0 0.0
        %5449 = vmatpush1.msra.mxu0 0.0
        %5450 = vmatprep.subr.mxu0 0.0
        %5451 = vmatpush1.msra.mxu0 0.0
        %5452 = vmatprep.subr.mxu0 0.0
        %5453 = vmatpush1.msra.mxu0 0.0
        %5454 = vmatprep.subr.mxu0 0.0
        %5455 = vmatpush1.msra.mxu0 0.0
        %5456 = vmatprep.subr.mxu0 0.0
        %5457 = vmatpush1.msra.mxu0 0.0
        %5458 = vmatprep.subr.mxu0 0.0
        %5459 = vmatpush1.msra.mxu0 0.0
        %5460 = vmatprep.subr.mxu0 0.0
        %5461 = vmatpush1.msra.mxu0 0.0
        %5462 = vmatprep.subr.mxu0 0.0
        %5463 = vmatpush1.msra.mxu0 0.0
        %5464 = vmatprep.subr.mxu0 0.0
        %5465 = vmatpush1.msra.mxu0 0.0
        %5466 = vmatprep.subr.mxu0 0.0
        %5467 = vmatpush1.msra.mxu0 0.0
        %5468 = vmatprep.subr.mxu0 0.0
        %5469 = vmatpush1.msra.mxu0 0.0
        %5470 = vmatprep.subr.mxu0 0.0
        %5471 = vmatpush1.msra.mxu0 0.0
        %5472 = vmatprep.subr.mxu0 0.0
        %5473 = vmatpush1.msra.mxu0 0.0
        %5474 = vmatprep.subr.mxu0 0.0
        %5475 = vmatpush1.msra.mxu0 0.0
        %5476 = vmatprep.subr.mxu0 0.0
        %5477 = vmatpush1.msra.mxu0 0.0
        %5478 = vmatprep.subr.mxu0 0.0
        %5479 = vmatpush1.msra.mxu0 0.0
        %5480 = vmatprep.subr.mxu0 0.0
        %5481 = vmatpush1.msra.mxu0 0.0
        %5482 = vmatprep.subr.mxu0 0.0
        %5483 = vmatpush1.msra.mxu0 0.0
        %5484 = vmatprep.subr.mxu0 0.0
        %5485 = vmatpush1.msra.mxu0 0.0
        %5486 = vmatprep.subr.mxu0 0.0
        %5487 = vmatpush1.msra.mxu0 0.0
        %5488 = vmatprep.subr.mxu0 0.0
        %5489 = vmatpush1.msra.mxu0 0.0
        %5490 = vmatprep.subr.mxu0 0.0
        %5491 = vmatpush1.msra.mxu0 0.0
        %5492 = vmatprep.subr.mxu0 0.0
        %5493 = vmatpush1.msra.mxu0 0.0
        %5494 = vmatprep.mubr.f32.mxu0 0.0
        %5495 = vmatmul.mubr.f32.gmra.mrb[0].mxu0 %v5383
        %v5496 = vpop.f32.mrb[0].mxu0
        %v5497 = vadd.f32 %v5381, %v5496
        %v5498 = vpop.f32.mrb[0].mxu0
        %5499 = vmatprep.mubr.f32.mxu0 0.0
        %5500 = vmatmul.mubr.f32.gmra.mrb[0].mxu0 %v5386
        %v5501 = vpop.f32.mrb[0].mxu0
        %v5502 = vadd.f32 %v5381, %v5501
        %v5503 = vpop.f32.mrb[0].mxu0
        %5504 = vmatprep.mubr.f32.mxu0 0.0
        %5505 = vmatmul.mubr.f32.gmra.mrb[0].mxu0 %v5389
        %v5506 = vpop.f32.mrb[0].mxu0
        %v5507 = vadd.f32 %v5381, %v5506
        %v5508 = vpop.f32.mrb[0].mxu0
        %5509 = vmatprep.mubr.f32.mxu0 0.0
        %5510 = vmatmul.mubr.f32.gmra.mrb[0].mxu0 %v5392
        %v5511 = vpop.f32.mrb[0].mxu0
        %v5512 = vadd.f32 %v5381, %v5511
        %v5513 = vpop.f32.mrb[0].mxu0
        %5514 = vmatprep.mubr.f32.mxu0 0.0
        %5515 = vmatmul.mubr.f32.gmra.mrb[0].mxu0 %v5395
        %v5516 = vpop.f32.mrb[0].mxu0
        %v5517 = vadd.f32 %v5381, %v5516
        %v5518 = vpop.f32.mrb[0].mxu0
        %5519 = vmatprep.mubr.f32.mxu0 0.0
        %5520 = vmatmul.mubr.f32.gmra.mrb[0].mxu0 %v5398
        %v5521 = vpop.f32.mrb[0].mxu0
        %v5522 = vadd.f32 %v5381, %v5521
        %v5523 = vpop.f32.mrb[0].mxu0
        %5524 = vmatprep.mubr.f32.mxu0 0.0
        %5525 = vmatmul.mubr.f32.gmra.mrb[0].mxu0 %v5401
        %v5526 = vpop.f32.mrb[0].mxu0
        %v5527 = vadd.f32 %v5381, %v5526
        %v5528 = vpop.f32.mrb[0].mxu0
        %5529 = vmatprep.mubr.f32.mxu0 0.0
        %5530 = vmatmul.mubr.f32.gmra.mrb[0].mxu0 %v5404
        %v5531 = vpop.f32.mrb[0].mxu0
        %v5532 = vadd.f32 %v5381, %v5531
        %v5533 = vpop.f32.mrb[0].mxu0
        %5534 = vmatprep.mubr.f32.mxu0 0.0
        %5535 = vmatmul.mubr.f32.gmra.mrb[0].mxu0 %v5407
        %v5536 = vpop.f32.mrb[0].mxu0
        %v5537 = vadd.f32 %v5381, %v5536
        %v5538 = vpop.f32.mrb[0].mxu0
        %5539 = vmatprep.mubr.f32.mxu0 0.0
        %5540 = vmatmul.mubr.f32.gmra.mrb[0].mxu0 %v5410
        %v5541 = vpop.f32.mrb[0].mxu0
        %v5542 = vadd.f32 %v5381, %v5541
        %v5543 = vpop.f32.mrb[0].mxu0
        %5544 = vmatprep.mubr.f32.mxu0 0.0
        %5545 = vmatmul.mubr.f32.gmra.mrb[0].mxu0 %v5413
        %v5546 = vpop.f32.mrb[0].mxu0
        %v5547 = vadd.f32 %v5381, %v5546
        %v5548 = vpop.f32.mrb[0].mxu0
        %5549 = vmatprep.mubr.f32.mxu0 0.0
        %5550 = vmatmul.mubr.f32.gmra.mrb[0].mxu0 %v5416
        %v5551 = vpop.f32.mrb[0].mxu0
        %v5552 = vadd.f32 %v5381, %v5551
        %v5553 = vpop.f32.mrb[0].mxu0
        %5554 = vmatprep.mubr.f32.mxu0 0.0
        %5555 = vmatmul.mubr.f32.gmra.mrb[0].mxu0 %v5419
        %v5556 = vpop.f32.mrb[0].mxu0
        %v5557 = vadd.f32 %v5381, %v5556
        %v5558 = vpop.f32.mrb[0].mxu0
        %5559 = vmatprep.mubr.f32.mxu0 0.0
        %5560 = vmatmul.mubr.f32.gmra.mrb[0].mxu0 %v5422
        %v5561 = vpop.f32.mrb[0].mxu0
        %v5562 = vadd.f32 %v5381, %v5561
        %v5563 = vpop.f32.mrb[0].mxu0
        %5564 = vmatprep.mubr.f32.mxu0 0.0
        %5565 = vmatmul.mubr.f32.gmra.mrb[0].mxu0 %v5425
        %v5566 = vpop.f32.mrb[0].mxu0
        %v5567 = vadd.f32 %v5381, %v5566
        %v5568 = vpop.f32.mrb[0].mxu0
        %5569 = vmatprep.mubr.f32.mxu0 0.0
        %5570 = vmatmul.mubr.f32.gmra.mrb[0].mxu0 %v5428
        %v5571 = vpop.f32.mrb[0].mxu0
        %v5572 = vadd.f32 %v5381, %v5571
        %v5573 = vpop.f32.mrb[0].mxu0
        %5574 = vdwg.mxu0
        %v5575 = vmax.f32 %v5497, 0.0
        %v5576 = vmax.f32 %v5502, 0.0
        %v5577 = vmax.f32 %v5507, 0.0
        %v5578 = vmax.f32 %v5512, 0.0
        %v5579 = vmax.f32 %v5517, 0.0
        %v5580 = vmax.f32 %v5522, 0.0
        %v5581 = vmax.f32 %v5527, 0.0
        %v5582 = vmax.f32 %v5532, 0.0
        %v5583 = vmax.f32 %v5537, 0.0
        %v5584 = vmax.f32 %v5542, 0.0
        %v5585 = vmax.f32 %v5547, 0.0
        %v5586 = vmax.f32 %v5552, 0.0
        %v5587 = vmax.f32 %v5557, 0.0
        %v5588 = vmax.f32 %v5562, 0.0
        %v5589 = vmax.f32 %v5567, 0.0
        %v5590 = vmax.f32 %v5572, 0.0
        %v5591 = vlaneseq
        %v5592 = vshrl.u32 %v5591, 7
        %v5593 = vsub.s32 0, %v5592
        %v5594 = vrot.slane %v272, %v5593
        %v5596 = vsel %vm5128, %v5575, 0
        %v5599 = vsel %vm5128, %v5576, 0
        %v5602 = vsel %vm5128, %v5577, 0
        %v5605 = vsel %vm5128, %v5578, 0
        %v5608 = vsel %vm5128, %v5579, 0
        %v5611 = vsel %vm5128, %v5580, 0
        %v5614 = vsel %vm5128, %v5581, 0
        %v5617 = vsel %vm5128, %v5582, 0
        %v5620 = vsel %vm5128, %v5583, 0
        %v5623 = vsel %vm5128, %v5584, 0
        %v5626 = vsel %vm5128, %v5585, 0
        %v5629 = vsel %vm5128, %v5586, 0
        %v5632 = vsel %vm5128, %v5587, 0
        %v5635 = vsel %vm5128, %v5588, 0
        %v5638 = vsel %vm5128, %v5589, 0
        %v5641 = vsel %vm5128, %v5590, 0
        %5643 = vmatprep.subr.mxu0 0.0
        %5644 = vmatpush1.msra.mxu0 %v263
        %5645 = vmatprep.subr.mxu0 0.0
        %5646 = vmatpush1.msra.mxu0 %v264
        %5647 = vmatprep.subr.mxu0 0.0
        %5648 = vmatpush1.msra.mxu0 %v265
        %5649 = vmatprep.subr.mxu0 0.0
        %5650 = vmatpush1.msra.mxu0 %v266
        %5651 = vmatprep.subr.mxu0 0.0
        %5652 = vmatpush1.msra.mxu0 0.0
        %5653 = vmatprep.subr.mxu0 0.0
        %5654 = vmatpush1.msra.mxu0 0.0
        %5655 = vmatprep.subr.mxu0 0.0
        %5656 = vmatpush1.msra.mxu0 0.0
        %5657 = vmatprep.subr.mxu0 0.0
        %5658 = vmatpush1.msra.mxu0 0.0
        %5659 = vmatprep.subr.mxu0 0.0
        %5660 = vmatpush1.msra.mxu0 0.0
        %5661 = vmatprep.subr.mxu0 0.0
        %5662 = vmatpush1.msra.mxu0 0.0
        %5663 = vmatprep.subr.mxu0 0.0
        %5664 = vmatpush1.msra.mxu0 0.0
        %5665 = vmatprep.subr.mxu0 0.0
        %5666 = vmatpush1.msra.mxu0 0.0
        %5667 = vmatprep.subr.mxu0 0.0
        %5668 = vmatpush1.msra.mxu0 0.0
        %5669 = vmatprep.subr.mxu0 0.0
        %5670 = vmatpush1.msra.mxu0 0.0
        %5671 = vmatprep.subr.mxu0 0.0
        %5672 = vmatpush1.msra.mxu0 0.0
        %5673 = vmatprep.subr.mxu0 0.0
        %5674 = vmatpush1.msra.mxu0 0.0
        %5675 = vmatprep.subr.mxu0 0.0
        %5676 = vmatpush1.msra.mxu0 0.0
        %5677 = vmatprep.subr.mxu0 0.0
        %5678 = vmatpush1.msra.mxu0 0.0
        %5679 = vmatprep.subr.mxu0 0.0
        %5680 = vmatpush1.msra.mxu0 0.0
        %5681 = vmatprep.subr.mxu0 0.0
        %5682 = vmatpush1.msra.mxu0 0.0
        %5683 = vmatprep.subr.mxu0 0.0
        %5684 = vmatpush1.msra.mxu0 0.0
        %5685 = vmatprep.subr.mxu0 0.0
        %5686 = vmatpush1.msra.mxu0 0.0
        %5687 = vmatprep.subr.mxu0 0.0
        %5688 = vmatpush1.msra.mxu0 0.0
        %5689 = vmatprep.subr.mxu0 0.0
        %5690 = vmatpush1.msra.mxu0 0.0
        %5691 = vmatprep.subr.mxu0 0.0
        %5692 = vmatpush1.msra.mxu0 0.0
        %5693 = vmatprep.subr.mxu0 0.0
        %5694 = vmatpush1.msra.mxu0 0.0
        %5695 = vmatprep.subr.mxu0 0.0
        %5696 = vmatpush1.msra.mxu0 0.0
        %5697 = vmatprep.subr.mxu0 0.0
        %5698 = vmatpush1.msra.mxu0 0.0
        %5699 = vmatprep.subr.mxu0 0.0
        %5700 = vmatpush1.msra.mxu0 0.0
        %5701 = vmatprep.subr.mxu0 0.0
        %5702 = vmatpush1.msra.mxu0 0.0
        %5703 = vmatprep.subr.mxu0 0.0
        %5704 = vmatpush1.msra.mxu0 0.0
        %5705 = vmatprep.subr.mxu0 0.0
        %5706 = vmatpush1.msra.mxu0 0.0
        %5707 = vmatprep.mubr.f32.mxu0 0.0
        %5708 = vmatmul.mubr.f32.gmra.mrb[0].mxu0 %v5596
        %v5709 = vpop.f32.mrb[0].mxu0
        %v5710 = vadd.f32 %v5594, %v5709
        %v5711 = vpop.f32.mrb[0].mxu0
        %5712 = vmatprep.mubr.f32.mxu0 0.0
        %5713 = vmatmul.mubr.f32.gmra.mrb[0].mxu0 %v5599
        %v5714 = vpop.f32.mrb[0].mxu0
        %v5715 = vadd.f32 %v5594, %v5714
        %v5716 = vpop.f32.mrb[0].mxu0
        %5717 = vmatprep.mubr.f32.mxu0 0.0
        %5718 = vmatmul.mubr.f32.gmra.mrb[0].mxu0 %v5602
        %v5719 = vpop.f32.mrb[0].mxu0
        %v5720 = vadd.f32 %v5594, %v5719
        %v5721 = vpop.f32.mrb[0].mxu0
        %5722 = vmatprep.mubr.f32.mxu0 0.0
        %5723 = vmatmul.mubr.f32.gmra.mrb[0].mxu0 %v5605
        %v5724 = vpop.f32.mrb[0].mxu0
        %v5725 = vadd.f32 %v5594, %v5724
        %v5726 = vpop.f32.mrb[0].mxu0
        %5727 = vmatprep.mubr.f32.mxu0 0.0
        %5728 = vmatmul.mubr.f32.gmra.mrb[0].mxu0 %v5608
        %v5729 = vpop.f32.mrb[0].mxu0
        %v5730 = vadd.f32 %v5594, %v5729
        %v5731 = vpop.f32.mrb[0].mxu0
        %5732 = vmatprep.mubr.f32.mxu0 0.0
        %5733 = vmatmul.mubr.f32.gmra.mrb[0].mxu0 %v5611
        %v5734 = vpop.f32.mrb[0].mxu0
        %v5735 = vadd.f32 %v5594, %v5734
        %v5736 = vpop.f32.mrb[0].mxu0
        %5737 = vmatprep.mubr.f32.mxu0 0.0
        %5738 = vmatmul.mubr.f32.gmra.mrb[0].mxu0 %v5614
        %v5739 = vpop.f32.mrb[0].mxu0
        %v5740 = vadd.f32 %v5594, %v5739
        %v5741 = vpop.f32.mrb[0].mxu0
        %5742 = vmatprep.mubr.f32.mxu0 0.0
        %5743 = vmatmul.mubr.f32.gmra.mrb[0].mxu0 %v5617
        %v5744 = vpop.f32.mrb[0].mxu0
        %v5745 = vadd.f32 %v5594, %v5744
        %v5746 = vpop.f32.mrb[0].mxu0
        %5747 = vmatprep.mubr.f32.mxu0 0.0
        %5748 = vmatmul.mubr.f32.gmra.mrb[0].mxu0 %v5620
        %v5749 = vpop.f32.mrb[0].mxu0
        %v5750 = vadd.f32 %v5594, %v5749
        %v5751 = vpop.f32.mrb[0].mxu0
        %5752 = vmatprep.mubr.f32.mxu0 0.0
        %5753 = vmatmul.mubr.f32.gmra.mrb[0].mxu0 %v5623
        %v5754 = vpop.f32.mrb[0].mxu0
        %v5755 = vadd.f32 %v5594, %v5754
        %v5756 = vpop.f32.mrb[0].mxu0
        %5757 = vmatprep.mubr.f32.mxu0 0.0
        %5758 = vmatmul.mubr.f32.gmra.mrb[0].mxu0 %v5626
        %v5759 = vpop.f32.mrb[0].mxu0
        %v5760 = vadd.f32 %v5594, %v5759
        %v5761 = vpop.f32.mrb[0].mxu0
        %5762 = vmatprep.mubr.f32.mxu0 0.0
        %5763 = vmatmul.mubr.f32.gmra.mrb[0].mxu0 %v5629
        %v5764 = vpop.f32.mrb[0].mxu0
        %v5765 = vadd.f32 %v5594, %v5764
        %v5766 = vpop.f32.mrb[0].mxu0
        %5767 = vmatprep.mubr.f32.mxu0 0.0
        %5768 = vmatmul.mubr.f32.gmra.mrb[0].mxu0 %v5632
        %v5769 = vpop.f32.mrb[0].mxu0
        %v5770 = vadd.f32 %v5594, %v5769
        %v5771 = vpop.f32.mrb[0].mxu0
        %5772 = vmatprep.mubr.f32.mxu0 0.0
        %5773 = vmatmul.mubr.f32.gmra.mrb[0].mxu0 %v5635
        %v5774 = vpop.f32.mrb[0].mxu0
        %v5775 = vadd.f32 %v5594, %v5774
        %v5776 = vpop.f32.mrb[0].mxu0
        %5777 = vmatprep.mubr.f32.mxu0 0.0
        %5778 = vmatmul.mubr.f32.gmra.mrb[0].mxu0 %v5638
        %v5779 = vpop.f32.mrb[0].mxu0
        %v5780 = vadd.f32 %v5594, %v5779
        %v5781 = vpop.f32.mrb[0].mxu0
        %5782 = vmatprep.mubr.f32.mxu0 0.0
        %5783 = vmatmul.mubr.f32.gmra.mrb[0].mxu0 %v5641
        %v5784 = vpop.f32.mrb[0].mxu0
        %v5785 = vadd.f32 %v5594, %v5784
        %v5786 = vpop.f32.mrb[0].mxu0
        %5787 = vdwg.mxu0
        %v5788 = vmax.f32 %v5710, 0.0
        %v5789 = vmax.f32 %v5715, 0.0
        %v5790 = vmax.f32 %v5720, 0.0
        %v5791 = vmax.f32 %v5725, 0.0
        %v5792 = vmax.f32 %v5730, 0.0
        %v5793 = vmax.f32 %v5735, 0.0
        %v5794 = vmax.f32 %v5740, 0.0
        %v5795 = vmax.f32 %v5745, 0.0
        %v5796 = vmax.f32 %v5750, 0.0
        %v5797 = vmax.f32 %v5755, 0.0
        %v5798 = vmax.f32 %v5760, 0.0
        %v5799 = vmax.f32 %v5765, 0.0
        %v5800 = vmax.f32 %v5770, 0.0
        %v5801 = vmax.f32 %v5775, 0.0
        %v5802 = vmax.f32 %v5780, 0.0
        %v5803 = vmax.f32 %v5785, 0.0
        %v5804 = vadd.f32 %v5788, %v5362
        %v5805 = vadd.f32 %v5789, %v5363
        %v5806 = vadd.f32 %v5790, %v5364
        %v5807 = vadd.f32 %v5791, %v5365
        %v5808 = vadd.f32 %v5792, %v5366
        %v5809 = vadd.f32 %v5793, %v5367
        %v5810 = vadd.f32 %v5794, %v5368
        %v5811 = vadd.f32 %v5795, %v5369
        %v5812 = vadd.f32 %v5796, %v5370
        %v5813 = vadd.f32 %v5797, %v5371
        %v5814 = vadd.f32 %v5798, %v5372
        %v5815 = vadd.f32 %v5799, %v5373
        %v5816 = vadd.f32 %v5800, %v5374
        %v5817 = vadd.f32 %v5801, %v5375
        %v5818 = vadd.f32 %v5802, %v5376
        %v5819 = vadd.f32 %v5803, %v5377
        %v5820 = vsel %vm5128, %v5804, 0.0
        %5821 = vadd.xlane.f32.xlu0 %v5820
        %v5822 = vpop.xlane.xlu0 %5821
        %v5823 = vsel %vm5128, %v5805, 0.0
        %5824 = vadd.xlane.f32.xlu0 %v5823
        %v5825 = vpop.xlane.xlu0 %5824
        %v5826 = vsel %vm5128, %v5806, 0.0
        %5827 = vadd.xlane.f32.xlu0 %v5826
        %v5828 = vpop.xlane.xlu0 %5827
        %v5829 = vsel %vm5128, %v5807, 0.0
        %5830 = vadd.xlane.f32.xlu0 %v5829
        %v5831 = vpop.xlane.xlu0 %5830
        %v5832 = vsel %vm5128, %v5808, 0.0
        %5833 = vadd.xlane.f32.xlu0 %v5832
        %v5834 = vpop.xlane.xlu0 %5833
        %v5835 = vsel %vm5128, %v5809, 0.0
        %5836 = vadd.xlane.f32.xlu0 %v5835
        %v5837 = vpop.xlane.xlu0 %5836
        %v5838 = vsel %vm5128, %v5810, 0.0
        %5839 = vadd.xlane.f32.xlu0 %v5838
        %v5840 = vpop.xlane.xlu0 %5839
        %v5841 = vsel %vm5128, %v5811, 0.0
        %5842 = vadd.xlane.f32.xlu0 %v5841
        %v5843 = vpop.xlane.xlu0 %5842
        %v5844 = vsel %vm5128, %v5812, 0.0
        %5845 = vadd.xlane.f32.xlu0 %v5844
        %v5846 = vpop.xlane.xlu0 %5845
        %v5847 = vsel %vm5128, %v5813, 0.0
        %5848 = vadd.xlane.f32.xlu0 %v5847
        %v5849 = vpop.xlane.xlu0 %5848
        %v5850 = vsel %vm5128, %v5814, 0.0
        %5851 = vadd.xlane.f32.xlu0 %v5850
        %v5852 = vpop.xlane.xlu0 %5851
        %v5853 = vsel %vm5128, %v5815, 0.0
        %5854 = vadd.xlane.f32.xlu0 %v5853
        %v5855 = vpop.xlane.xlu0 %5854
        %v5856 = vsel %vm5128, %v5816, 0.0
        %5857 = vadd.xlane.f32.xlu0 %v5856
        %v5858 = vpop.xlane.xlu0 %5857
        %v5859 = vsel %vm5128, %v5817, 0.0
        %5860 = vadd.xlane.f32.xlu0 %v5859
        %v5861 = vpop.xlane.xlu0 %5860
        %v5862 = vsel %vm5128, %v5818, 0.0
        %5863 = vadd.xlane.f32.xlu0 %v5862
        %v5864 = vpop.xlane.xlu0 %5863
        %v5865 = vsel %vm5128, %v5819, 0.0
        %5866 = vadd.xlane.f32.xlu0 %v5865
        %v5867 = vpop.xlane.xlu0 %5866
        %v5868 = vmul.f32 %v5822, %v5177
        %v5869 = vmul.f32 %v5825, %v5177
        %v5870 = vmul.f32 %v5828, %v5177
        %v5871 = vmul.f32 %v5831, %v5177
        %v5872 = vmul.f32 %v5834, %v5177
        %v5873 = vmul.f32 %v5837, %v5177
        %v5874 = vmul.f32 %v5840, %v5177
        %v5875 = vmul.f32 %v5843, %v5177
        %v5876 = vmul.f32 %v5846, %v5177
        %v5877 = vmul.f32 %v5849, %v5177
        %v5878 = vmul.f32 %v5852, %v5177
        %v5879 = vmul.f32 %v5855, %v5177
        %v5880 = vmul.f32 %v5858, %v5177
        %v5881 = vmul.f32 %v5861, %v5177
        %v5882 = vmul.f32 %v5864, %v5177
        %v5883 = vmul.f32 %v5867, %v5177
        %v5884 = vsub.f32 %v5804, %v5868
        %v5885 = vsub.f32 %v5805, %v5869
        %v5886 = vsub.f32 %v5806, %v5870
        %v5887 = vsub.f32 %v5807, %v5871
        %v5888 = vsub.f32 %v5808, %v5872
        %v5889 = vsub.f32 %v5809, %v5873
        %v5890 = vsub.f32 %v5810, %v5874
        %v5891 = vsub.f32 %v5811, %v5875
        %v5892 = vsub.f32 %v5812, %v5876
        %v5893 = vsub.f32 %v5813, %v5877
        %v5894 = vsub.f32 %v5814, %v5878
        %v5895 = vsub.f32 %v5815, %v5879
        %v5896 = vsub.f32 %v5816, %v5880
        %v5897 = vsub.f32 %v5817, %v5881
        %v5898 = vsub.f32 %v5818, %v5882
        %v5899 = vsub.f32 %v5819, %v5883
        %v5900 = vmul.f32 %v5884, %v5884
        %v5901 = vmul.f32 %v5885, %v5885
        %v5902 = vmul.f32 %v5886, %v5886
        %v5903 = vmul.f32 %v5887, %v5887
        %v5904 = vmul.f32 %v5888, %v5888
        %v5905 = vmul.f32 %v5889, %v5889
        %v5906 = vmul.f32 %v5890, %v5890
        %v5907 = vmul.f32 %v5891, %v5891
        %v5908 = vmul.f32 %v5892, %v5892
        %v5909 = vmul.f32 %v5893, %v5893
        %v5910 = vmul.f32 %v5894, %v5894
        %v5911 = vmul.f32 %v5895, %v5895
        %v5912 = vmul.f32 %v5896, %v5896
        %v5913 = vmul.f32 %v5897, %v5897
        %v5914 = vmul.f32 %v5898, %v5898
        %v5915 = vmul.f32 %v5899, %v5899
        %v5916 = vsel %vm5128, %v5900, 0.0
        %5917 = vadd.xlane.f32.xlu0 %v5916
        %v5918 = vpop.xlane.xlu0 %5917
        %v5919 = vsel %vm5128, %v5901, 0.0
        %5920 = vadd.xlane.f32.xlu0 %v5919
        %v5921 = vpop.xlane.xlu0 %5920
        %v5922 = vsel %vm5128, %v5902, 0.0
        %5923 = vadd.xlane.f32.xlu0 %v5922
        %v5924 = vpop.xlane.xlu0 %5923
        %v5925 = vsel %vm5128, %v5903, 0.0
        %5926 = vadd.xlane.f32.xlu0 %v5925
        %v5927 = vpop.xlane.xlu0 %5926
        %v5928 = vsel %vm5128, %v5904, 0.0
        %5929 = vadd.xlane.f32.xlu0 %v5928
        %v5930 = vpop.xlane.xlu0 %5929
        %v5931 = vsel %vm5128, %v5905, 0.0
        %5932 = vadd.xlane.f32.xlu0 %v5931
        %v5933 = vpop.xlane.xlu0 %5932
        %v5934 = vsel %vm5128, %v5906, 0.0
        %5935 = vadd.xlane.f32.xlu0 %v5934
        %v5936 = vpop.xlane.xlu0 %5935
        %v5937 = vsel %vm5128, %v5907, 0.0
        %5938 = vadd.xlane.f32.xlu0 %v5937
        %v5939 = vpop.xlane.xlu0 %5938
        %v5940 = vsel %vm5128, %v5908, 0.0
        %5941 = vadd.xlane.f32.xlu0 %v5940
        %v5942 = vpop.xlane.xlu0 %5941
        %v5943 = vsel %vm5128, %v5909, 0.0
        %5944 = vadd.xlane.f32.xlu0 %v5943
        %v5945 = vpop.xlane.xlu0 %5944
        %v5946 = vsel %vm5128, %v5910, 0.0
        %5947 = vadd.xlane.f32.xlu0 %v5946
        %v5948 = vpop.xlane.xlu0 %5947
        %v5949 = vsel %vm5128, %v5911, 0.0
        %5950 = vadd.xlane.f32.xlu0 %v5949
        %v5951 = vpop.xlane.xlu0 %5950
        %v5952 = vsel %vm5128, %v5912, 0.0
        %5953 = vadd.xlane.f32.xlu0 %v5952
        %v5954 = vpop.xlane.xlu0 %5953
        %v5955 = vsel %vm5128, %v5913, 0.0
        %5956 = vadd.xlane.f32.xlu0 %v5955
        %v5957 = vpop.xlane.xlu0 %5956
        %v5958 = vsel %vm5128, %v5914, 0.0
        %5959 = vadd.xlane.f32.xlu0 %v5958
        %v5960 = vpop.xlane.xlu0 %5959
        %v5961 = vsel %vm5128, %v5915, 0.0
        %5962 = vadd.xlane.f32.xlu0 %v5961
        %v5963 = vpop.xlane.xlu0 %5962
        %v5964 = vmul.f32 %v5918, %v5177
        %v5965 = vmul.f32 %v5921, %v5177
        %v5966 = vmul.f32 %v5924, %v5177
        %v5967 = vmul.f32 %v5927, %v5177
        %v5968 = vmul.f32 %v5930, %v5177
        %v5969 = vmul.f32 %v5933, %v5177
        %v5970 = vmul.f32 %v5936, %v5177
        %v5971 = vmul.f32 %v5939, %v5177
        %v5972 = vmul.f32 %v5942, %v5177
        %v5973 = vmul.f32 %v5945, %v5177
        %v5974 = vmul.f32 %v5948, %v5177
        %v5975 = vmul.f32 %v5951, %v5177
        %v5976 = vmul.f32 %v5954, %v5177
        %v5977 = vmul.f32 %v5957, %v5177
        %v5978 = vmul.f32 %v5960, %v5177
        %v5979 = vmul.f32 %v5963, %v5177
        %v5980 = vadd.f32 %v5964, 1e-05
        %v5981 = vadd.f32 %v5965, 1e-05
        %v5982 = vadd.f32 %v5966, 1e-05
        %v5983 = vadd.f32 %v5967, 1e-05
        %v5984 = vadd.f32 %v5968, 1e-05
        %v5985 = vadd.f32 %v5969, 1e-05
        %v5986 = vadd.f32 %v5970, 1e-05
        %v5987 = vadd.f32 %v5971, 1e-05
        %v5988 = vadd.f32 %v5972, 1e-05
        %v5989 = vadd.f32 %v5973, 1e-05
        %v5990 = vadd.f32 %v5974, 1e-05
        %v5991 = vadd.f32 %v5975, 1e-05
        %v5992 = vadd.f32 %v5976, 1e-05
        %v5993 = vadd.f32 %v5977, 1e-05
        %v5994 = vadd.f32 %v5978, 1e-05
        %v5995 = vadd.f32 %v5979, 1e-05
        %v5996 = vrsqrt.pop %v5980
        %v5997 = vrsqrt.pop %v5981
        %v5998 = vrsqrt.pop %v5982
        %v5999 = vrsqrt.pop %v5983
        %v6000 = vrsqrt.pop %v5984
        %v6001 = vrsqrt.pop %v5985
        %v6002 = vrsqrt.pop %v5986
        %v6003 = vrsqrt.pop %v5987
        %v6004 = vrsqrt.pop %v5988
        %v6005 = vrsqrt.pop %v5989
        %v6006 = vrsqrt.pop %v5990
        %v6007 = vrsqrt.pop %v5991
        %v6008 = vrsqrt.pop %v5992
        %v6009 = vrsqrt.pop %v5993
        %v6010 = vrsqrt.pop %v5994
        %v6011 = vrsqrt.pop %v5995
        %v6012 = vmul.f32 %v5884, %v5996
        %v6013 = vmul.f32 %v5885, %v5997
        %v6014 = vmul.f32 %v5886, %v5998
        %v6015 = vmul.f32 %v5887, %v5999
        %v6016 = vmul.f32 %v5888, %v6000
        %v6017 = vmul.f32 %v5889, %v6001
        %v6018 = vmul.f32 %v5890, %v6002
        %v6019 = vmul.f32 %v5891, %v6003
        %v6020 = vmul.f32 %v5892, %v6004
        %v6021 = vmul.f32 %v5893, %v6005
        %v6022 = vmul.f32 %v5894, %v6006
        %v6023 = vmul.f32 %v5895, %v6007
        %v6024 = vmul.f32 %v5896, %v6008
        %v6025 = vmul.f32 %v5897, %v6009
        %v6026 = vmul.f32 %v5898, %v6010
        %v6027 = vmul.f32 %v5899, %v6011
        %v6028 = vmul.f32 %v6012, %v5341
        %v6029 = vmul.f32 %v6013, %v5341
        %v6030 = vmul.f32 %v6014, %v5341
        %v6031 = vmul.f32 %v6015, %v5341
        %v6032 = vmul.f32 %v6016, %v5341
        %v6033 = vmul.f32 %v6017, %v5341
        %v6034 = vmul.f32 %v6018, %v5341
        %v6035 = vmul.f32 %v6019, %v5341
        %v6036 = vmul.f32 %v6020, %v5341
        %v6037 = vmul.f32 %v6021, %v5341
        %v6038 = vmul.f32 %v6022, %v5341
        %v6039 = vmul.f32 %v6023, %v5341
        %v6040 = vmul.f32 %v6024, %v5341
        %v6041 = vmul.f32 %v6025, %v5341
        %v6042 = vmul.f32 %v6026, %v5341
        %v6043 = vmul.f32 %v6027, %v5341
        %v6044 = vadd.f32 %v6028, %v5361
        %v6045 = vadd.f32 %v6029, %v5361
        %v6046 = vadd.f32 %v6030, %v5361
        %v6047 = vadd.f32 %v6031, %v5361
        %v6048 = vadd.f32 %v6032, %v5361
        %v6049 = vadd.f32 %v6033, %v5361
        %v6050 = vadd.f32 %v6034, %v5361
        %v6051 = vadd.f32 %v6035, %v5361
        %v6052 = vadd.f32 %v6036, %v5361
        %v6053 = vadd.f32 %v6037, %v5361
        %v6054 = vadd.f32 %v6038, %v5361
        %v6055 = vadd.f32 %v6039, %v5361
        %v6056 = vadd.f32 %v6040, %v5361
        %v6057 = vadd.f32 %v6041, %v5361
        %v6058 = vadd.f32 %v6042, %v5361
        %v6059 = vadd.f32 %v6043, %v5361
        %6060 = vst.msk [vmem:[%s238] sm:$0xff] %vm5128, %v6044
        %6061 = vst.msk [vmem:[%s238 + $0x8] sm:$0xff] %vm5128, %v6045
        %6062 = vst.msk [vmem:[%s238 + $0x10] sm:$0xff] %vm5128, %v6046
        %6063 = vst.msk [vmem:[%s238 + $0x18] sm:$0xff] %vm5128, %v6047
        %6064 = vst.msk [vmem:[%s238 + $0x20] sm:$0xff] %vm5128, %v6048
        %6065 = vst.msk [vmem:[%s238 + $0x28] sm:$0xff] %vm5128, %v6049
        %6066 = vst.msk [vmem:[%s238 + $0x30] sm:$0xff] %vm5128, %v6050
        %6067 = vst.msk [vmem:[%s238 + $0x38] sm:$0xff] %vm5128, %v6051
        %6068 = vst.msk [vmem:[%s238 + $0x40] sm:$0xff] %vm5128, %v6052
        %6069 = vst.msk [vmem:[%s238 + $0x48] sm:$0xff] %vm5128, %v6053
        %6070 = vst.msk [vmem:[%s238 + $0x50] sm:$0xff] %vm5128, %v6054
        %6071 = vst.msk [vmem:[%s238 + $0x58] sm:$0xff] %vm5128, %v6055
        %6072 = vst.msk [vmem:[%s238 + $0x60] sm:$0xff] %vm5128, %v6056
        %6073 = vst.msk [vmem:[%s238 + $0x68] sm:$0xff] %vm5128, %v6057
        %6074 = vst.msk [vmem:[%s238 + $0x70] sm:$0xff] %vm5128, %v6058
        %6075 = vst.msk [vmem:[%s238 + $0x78] sm:$0xff] %vm5128, %v6059
        %s6076 = sand.u32 %s142, 1
        %s6077 = scalar_lea.sflag [#allocation3], %s6076
        %s6078 = sand.u32 %s142, 1
        %s6079 = smul.addr %s6078, 128
        %s6080 = scalar_lea.vmem [#allocation2], %s6079
        // Predicated region
        $region41: #{tpu_custom_call.1} parent=39 // pred_check
          %p6081 = pneg %p152
        $region42: #{tpu_custom_call.1} parent=39 // pred_check_branch
          %6083 = sbr.rel (%p6081) target = $region44
        $region43: #{tpu_custom_call.1} parent=39 // pred_region
          %s6084 = smul.u32 8, %s19
          %s6086 = ssub.s32 2048, 2048
          %6087 = vsyncadd %s6077, %s6086
          %s6088 = smul.addr %s6084, 2
          %s6089 = smul.addr %s6088, 128
          %s6090 = scalar_lea.hbm %s5, %s6089
          %s6091 = sshll.u32 %s6080, 4
          %s6092 = int_to_ptr.vmem [resolvable:$true] %s6091
          %6097 = dma.vmem_to_hbm [thread:$0]  %s6092, 2048, %s6090, %s6077, 128, 128, 8
        $region44: #{tpu_custom_call.1} parent=39 // pred_fallthru
          _
      $region40: #{tpu_custom_call.1} parent=5 // pred_fallthru
        _
      %p6098 = scmp.le.s32.totalorder 2, %s14
      // Predicated region
      $region45: #{tpu_custom_call.1} parent=5 // pred_check
        %p6099 = pneg %p6098
      $region46: #{tpu_custom_call.1} parent=5 // pred_check_branch
        %6101 = sbr.rel (%p6099) target = $region48
      $region47: #{tpu_custom_call.1} parent=5 // pred_region
        %s6102 = ssub.s32 %s14, 2
        // Predicated region
        $region49: #{tpu_custom_call.1} parent=47 // pred_check
          %p6103 = pneg %p158
        $region50: #{tpu_custom_call.1} parent=47 // pred_check_branch
          %6105 = sbr.rel (%p6103) target = $region52
        $region51: #{tpu_custom_call.1} parent=47 // pred_region
          %s6106 = sand.u32 %s143, 1
          %s6107 = scalar_lea.sflag [#allocation3], %s6106
          %s6108 = sand.u32 %s143, 1
          %s6109 = smul.addr %s6108, 128
          %s6110 = scalar_lea.vmem [#allocation2], %s6109
          %6111 = dma.done %s6107, 2048
        $region52: #{tpu_custom_call.1} parent=47 // pred_fallthru
          _
      $region48: #{tpu_custom_call.1} parent=5 // pred_fallthru
        _
    $region6: #{tpu_custom_call.1} parent=1 // loop_footer
      %s18 = sadd.s32 1, %s14
    $region7: #{tpu_custom_call.1} parent=1 // loop_footer_branch
      %13 = sbr.rel target = $region3
    $region8: #{tpu_custom_call.1} parent=1 // loop_exit
      _
    %6112 = vsyncpa [#allocation3], 1
    %s6113 = scalar_lea.sflag [#allocation3], 1
    %6114 = vsyncpa %s6113, 1

</llo_original>
